<compile_context>
chip_gen: v7x
topology: tpu7x:2x2x1
jax: 0.10.0
libtpu: 0.0.40
codegen_flags: <defaults>
</compile_context>

<pallas_src>
import jax
import jax.numpy as jnp
from jax.experimental import pallas as pl
from jax.experimental.pallas import tpu as pltpu

# ----------------- small config consistent with the module -----------------
B = 2              # real batch
BP = 8             # batch padded to one full sublane group
C_IN = 3           # image channels
IMG = 16           # spatial size
FEAT = 64          # stand-in for resnet.fc.in_features
N_EMBD = 32        # config.n_embd
HIDDEN = 64        # config.hidden_size
NUM_LAYERS = 2     # config.num_layers (kernel written for 2 layers)
VOCAB = 128        # config.vocab_size
T_CAP = 8          # caption length
PAD_TOKEN = 0      # config.pad_token
LABEL_SMOOTH = 0.1
KP = 32            # C_IN*3*3 = 27, zero-padded to 32

_VMEM = pl.BlockSpec(memory_space=pltpu.MemorySpace.VMEM)
_SMEM = pl.BlockSpec(memory_space=pltpu.MemorySpace.SMEM)


# ------------------------------ fused Pallas kernel -------------------------
def itt_kernel(patches_ref, pool_ref, conv_w_ref, conv_b_ref, proj_w_ref,
               proj_b_ref, emb_ref, cap_in_ref, tgt_ref,
               wih0_ref, whh0_ref, b0_ref, wih1_ref, whh1_ref, b1_ref,
               fcw_ref, fcb_ref,
               logits_ref, loss_ref,
               out_sc):
    """Encoder (im2col conv -> ReLU -> avg-pool matmul -> proj), embedding
    gather (one-hot MXU), 2-layer LSTM, fc, label-smoothed CE. One call.

    Gate weights/biases arrive with the i/f/o columns pre-scaled by 0.5 so a
    single tanh covers all four gates per cell."""
    H = HIDDEN

    # ------------------------------ encoder ---------------------------------
    conv = jnp.dot(patches_ref[...], conv_w_ref[...],
                   preferred_element_type=jnp.float32) + conv_b_ref[...]
    conv = jnp.maximum(conv, 0.0)                                   # (B*HW, FEAT)
    pooled = jnp.dot(pool_ref[...], conv,
                     preferred_element_type=jnp.float32)            # (BP, FEAT)
    features = jnp.dot(pooled, proj_w_ref[...],
                       preferred_element_type=jnp.float32) + proj_b_ref[...]  # (BP, E)

    # ---------------- embedding gather via one-hot matmul (MXU) -------------
    ids = cap_in_ref[...]                                           # ((T-1)*BP, 1) i32
    iota_v = jax.lax.broadcasted_iota(jnp.int32, (ids.shape[0], VOCAB), 1)
    onehot = (iota_v == ids).astype(jnp.float32)                    # ((T-1)*BP, V)
    emb_tm = jnp.dot(onehot, emb_ref[...],
                     preferred_element_type=jnp.float32)            # ((T-1)*BP, E)

    # time-major input sequence: row t*BP + b (both slabs are 8-row aligned)
    x_flat = jnp.concatenate([features, emb_tm], axis=0)            # (T*BP, E)

    # -------- hoisted layer-0 input projection (one batched matmul) ---------
    gates0_pre = jnp.dot(x_flat, wih0_ref[...],
                         preferred_element_type=jnp.float32) + b0_ref[...]  # (T*BP, 4H)

    def lstm_gates(g_scaled, c):
        # i/f/o pre-activations are pre-scaled by 0.5 (folded into the weights
        # on the host), so sigmoid(x) == 0.5*tanh(x/2)+0.5 -> ONE tanh over the
        # lane-dense (BP, 4H) slab instead of 3 sigmoids + 1 tanh.
        t = jnp.tanh(g_scaled)
        i = 0.5 * t[:, 0:H] + 0.5
        f = 0.5 * t[:, H:2 * H] + 0.5
        gg = t[:, 2 * H:3 * H]
        o = 0.5 * t[:, 3 * H:4 * H] + 0.5
        c_new = f * c + i * gg
        return o * jnp.tanh(c_new), c_new

    z = jnp.zeros((BP, H), jnp.float32)
    h0, c0, h1, c1 = z, z, z, z
    b1b = jnp.broadcast_to(b1_ref[...], (BP, 4 * H))                # tiny, hoisted
    hh1 = b1b                                                       # h1 == 0 initially
    # Fully unrolled time loop (T=8 static): static, 8-row-aligned slices and
    # stores; weight refs indexed at the dot site (re-loaded from VMEM, low
    # vreg pressure across the unroll).
    for t in range(T_CAP):
        g0 = gates0_pre[t * BP:(t + 1) * BP, :] + jnp.dot(
            h0, whh0_ref[...], preferred_element_type=jnp.float32)
        h0, c0 = lstm_gates(g0, c0)
        g1 = jnp.dot(h0, wih1_ref[...],
                     preferred_element_type=jnp.float32) + hh1
        h1, c1 = lstm_gates(g1, c1)
        if t >= 1:                                                  # matches output[:, 1:, :]
            out_sc[(t - 1) * BP:t * BP, :] = h1
        if t < T_CAP - 1:
            # next step's hidden projection: off the serial chain, overlaps
            # with the next step's layer-0 gate math.
            hh1 = jnp.dot(h1, whh1_ref[...],
                          preferred_element_type=jnp.float32) + b1b

    # ------------- fc + label-smoothed CE, vectorized over all rows ---------
    lg = jnp.dot(out_sc[...], fcw_ref[...],
                 preferred_element_type=jnp.float32) + fcb_ref[...]  # ((T-1)*BP, V)
    logits_ref[...] = lg                                            # (56,128) lane-dense

    m = jnp.max(lg, axis=-1, keepdims=True)
    lse = m + jnp.log(jnp.sum(jnp.exp(lg - m), axis=-1, keepdims=True))
    logp = lg - lse
    tgt = tgt_ref[...]                                              # ((T-1)*BP, 1) i32
    iota_l = jax.lax.broadcasted_iota(jnp.int32, logp.shape, 1)
    nll = -jnp.sum(jnp.where(iota_l == tgt, logp, 0.0), axis=-1, keepdims=True)
    smooth = -jnp.mean(logp, axis=-1, keepdims=True)
    per = (1.0 - LABEL_SMOOTH) * nll + LABEL_SMOOTH * smooth
    # padded batch rows carry tgt == PAD_TOKEN, so they are masked here too
    valid = (tgt != PAD_TOKEN).astype(jnp.float32)
    # NOTE: like PyTorch CrossEntropyLoss, undefined (NaN) if every target is pad.
    loss_ref[0, 0] = jnp.sum(per * valid) / jnp.sum(valid)


# ------------------------------ host-side glue ------------------------------
def im2col(x_nchw):
    """3x3, stride 1, pad 1 patches: (B, C, H, W) -> (B*H*W, KP)."""
    b, c, h, w = x_nchw.shape
    xp = jnp.pad(x_nchw, ((0, 0), (0, 0), (1, 1), (1, 1)))
    cols = []
    for ci in range(c):              # matches torch conv weight (F, C, kh, kw)
        for dh in range(3):
            for dw in range(3):
                cols.append(xp[:, ci, dh:dh + h, dw:dw + w])
    patches = jnp.stack(cols, axis=-1).reshape(b * h * w, c * 9)
    return jnp.pad(patches, ((0, 0), (0, KP - c * 9)))


def init_params(key):
    ks = jax.random.split(key, 16)

    def unif(k, shape, scale):
        return jax.random.uniform(k, shape, jnp.float32, -scale, scale)

    h = HIDDEN
    s_conv = 1.0 / (C_IN * 9) ** 0.5
    conv_w = unif(ks[0], (FEAT, C_IN * 9), s_conv)         # torch-style (F, C*9)
    conv_w_k = jnp.zeros((KP, FEAT), jnp.float32).at[:C_IN * 9, :].set(conv_w.T)
    conv_b = unif(ks[1], (1, FEAT), s_conv)
    s_proj = 1.0 / FEAT ** 0.5
    proj_w = unif(ks[2], (FEAT, N_EMBD), s_proj)           # (in, out) = W.T
    proj_b = unif(ks[3], (1, N_EMBD), s_proj)
    emb = jax.random.normal(ks[4], (VOCAB, N_EMBD), jnp.float32)
    s = 1.0 / h ** 0.5
    wih0 = unif(ks[5], (N_EMBD, 4 * h), s)                 # W_ih.T, layer 0
    whh0 = unif(ks[6], (h, 4 * h), s)                      # W_hh.T, layer 0
    b0 = unif(ks[7], (1, 4 * h), s) + unif(ks[8], (1, 4 * h), s)   # b_ih + b_hh
    wih1 = unif(ks[9], (h, 4 * h), s)                      # layer 1
    whh1 = unif(ks[10], (h, 4 * h), s)
    b1 = unif(ks[11], (1, 4 * h), s) + unif(ks[12], (1, 4 * h), s)
    s_fc = 1.0 / h ** 0.5
    fc_w = unif(ks[13], (h, VOCAB), s_fc)                  # fc W.T
    fc_b = unif(ks[14], (1, VOCAB), s_fc)
    return dict(conv_w=conv_w_k, conv_b=conv_b, proj_w=proj_w, proj_b=proj_b,
                emb=emb, wih0=wih0, whh0=whh0, b0=b0,
                wih1=wih1, whh1=whh1, b1=b1, fc_w=fc_w, fc_b=fc_b)


def _scale_ifo_cols(w):
    """Halve the i/f/o gate columns (PyTorch gate order i,f,g,o) so the kernel
    can compute all gates with a single tanh (sigmoid(x)=0.5*tanh(x/2)+0.5)."""
    h = HIDDEN
    scale = jnp.concatenate([
        jnp.full((2 * h,), 0.5, jnp.float32),   # i, f
        jnp.ones((h,), jnp.float32),            # g (cell candidate, plain tanh)
        jnp.full((h,), 0.5, jnp.float32)])      # o
    return w * scale


def itt_forward(image, captions, params):
    hw = IMG * IMG
    patches = im2col(image)                                          # (B*HW, KP)
    # constant average-pooling matrix, zero rows for the padded batch entries
    pool_core = jnp.repeat(jnp.eye(B, dtype=jnp.float32), hw, axis=1) / hw   # (B, B*HW)
    pool_mat = jnp.concatenate(
        [pool_core, jnp.zeros((BP - B, B * hw), jnp.float32)], axis=0)       # (BP, B*HW)

    # batch-padded, time-major caption id slabs (pad rows carry PAD_TOKEN and
    # therefore mask themselves out of the loss)
    cap_p = jnp.full((BP, T_CAP), PAD_TOKEN, jnp.int32).at[:B, :].set(
        captions.astype(jnp.int32))
    cap_tm = cap_p.T                                                 # (T, BP)
    cap_in_ids = cap_tm[:T_CAP - 1].reshape(-1, 1)                   # ((T-1)*BP, 1)
    tgt_ids = cap_tm[1:].reshape(-1, 1)                              # ((T-1)*BP, 1)

    # kernel-side gate weights with the sigmoid columns pre-scaled by 0.5
    wih0 = _scale_ifo_cols(params['wih0'])
    whh0 = _scale_ifo_cols(params['whh0'])
    b0 = _scale_ifo_cols(params['b0'])
    wih1 = _scale_ifo_cols(params['wih1'])
    whh1 = _scale_ifo_cols(params['whh1'])
    b1 = _scale_ifo_cols(params['b1'])

    logits_tm, loss = pl.pallas_call(
        itt_kernel,
        out_shape=(jax.ShapeDtypeStruct(((T_CAP - 1) * BP, VOCAB), jnp.float32),
                   jax.ShapeDtypeStruct((1, 1), jnp.float32)),
        in_specs=[_VMEM] * 17,
        out_specs=(_VMEM, _SMEM),
        scratch_shapes=[pltpu.VMEM(((T_CAP - 1) * BP, HIDDEN), jnp.float32)],
    )(patches, pool_mat,
      params['conv_w'], params['conv_b'], params['proj_w'], params['proj_b'],
      params['emb'], cap_in_ids, tgt_ids,
      wih0, whh0, b0, wih1, whh1, b1,
      params['fc_w'], params['fc_b'])

    # time-major padded ((T-1)*BP, V) -> (B, T-1, V)
    logits = logits_tm.reshape(T_CAP - 1, BP, VOCAB)[:, :B, :].transpose(1, 0, 2)
    return loss[0, 0], logits


# ------------------------- pure-JAX reference check -------------------------
def itt_reference(image, captions, params):
    patches = im2col(image)
    conv = jnp.maximum(patches @ params['conv_w'] + params['conv_b'], 0.0)
    pooled = conv.reshape(B, IMG * IMG, FEAT).mean(axis=1)
    features = pooled @ params['proj_w'] + params['proj_b']
    emb = params['emb'][captions[:, :-1]]
    x = jnp.concatenate([features[:, None, :], emb], axis=1)
    h = HIDDEN
    h0 = c0 = h1 = c1 = jnp.zeros((B, h), jnp.float32)

    def cell(xt, hh, cc, wih, whh, bb):
        g = xt @ wih + hh @ whh + bb
        i, f = jax.nn.sigmoid(g[:, :h]), jax.nn.sigmoid(g[:, h:2 * h])
        gg, o = jnp.tanh(g[:, 2 * h:3 * h]), jax.nn.sigmoid(g[:, 3 * h:])
        cc = f * cc + i * gg
        return o * jnp.tanh(cc), cc

    outs = []
    for t in range(T_CAP):
        h0, c0 = cell(x[:, t, :], h0, c0, params['wih0'], params['whh0'], params['b0'])
        h1, c1 = cell(h0, h1, c1, params['wih1'], params['whh1'], params['b1'])
        outs.append(h1)
    outs = jnp.stack(outs, axis=1)                                  # (B, T, H)
    logits = (outs @ params['fc_w'] + params['fc_b'])[:, 1:, :]     # (B, T-1, V)
    tgt = captions[:, 1:]
    logp = jax.nn.log_softmax(logits, axis=-1)
    nll = -jnp.take_along_axis(logp, tgt[..., None], axis=-1)[..., 0]
    smooth = -logp.mean(axis=-1)
    per = (1.0 - LABEL_SMOOTH) * nll + LABEL_SMOOTH * smooth
    valid = (tgt != PAD_TOKEN).astype(jnp.float32)
    loss = jnp.sum(per * valid) / jnp.sum(valid)
    return loss, logits


if __name__ == "__main__":
    key = jax.random.PRNGKey(0)
    kp, ki, kc = jax.random.split(key, 3)
    params = init_params(kp)
    image = jax.random.normal(ki, (B, C_IN, IMG, IMG), jnp.float32)
    captions = jax.random.randint(kc, (B, T_CAP), 2, VOCAB).astype(jnp.int32)
    captions = captions.at[0, -1].set(PAD_TOKEN)   # exercise ignore_index

    loss, logits = itt_forward(image, captions, params)
    jax.block_until_ready((loss, logits))

    ref_loss, ref_logits = itt_reference(image, captions, params)
    assert jnp.allclose(logits, ref_logits, atol=1e-3, rtol=1e-3)
    assert jnp.allclose(loss, ref_loss, atol=1e-3, rtol=1e-3)
    print("KERNEL_OK")
</pallas_src>

<mosaic_0001>
module attributes {stable_mosaic.version = 11 : i64} {
  func.func @itt_kernel(%arg0: memref<512x32xf32, #tpu.memory_space<vmem>>, %arg1: memref<8x512xf32, #tpu.memory_space<vmem>>, %arg2: memref<32x64xf32, #tpu.memory_space<vmem>>, %arg3: memref<1x64xf32, #tpu.memory_space<vmem>>, %arg4: memref<64x32xf32, #tpu.memory_space<vmem>>, %arg5: memref<1x32xf32, #tpu.memory_space<vmem>>, %arg6: memref<128x32xf32, #tpu.memory_space<vmem>>, %arg7: memref<56x1xi32, #tpu.memory_space<vmem>>, %arg8: memref<56x1xi32, #tpu.memory_space<vmem>>, %arg9: memref<32x256xf32, #tpu.memory_space<vmem>>, %arg10: memref<64x256xf32, #tpu.memory_space<vmem>>, %arg11: memref<1x256xf32, #tpu.memory_space<vmem>>, %arg12: memref<64x256xf32, #tpu.memory_space<vmem>>, %arg13: memref<64x256xf32, #tpu.memory_space<vmem>>, %arg14: memref<1x256xf32, #tpu.memory_space<vmem>>, %arg15: memref<64x128xf32, #tpu.memory_space<vmem>>, %arg16: memref<1x128xf32, #tpu.memory_space<vmem>>, %arg17: memref<56x128xf32, #tpu.memory_space<vmem>>, %arg18: memref<1x1xf32, #tpu.memory_space<smem>>, %arg19: memref<56x64xf32, #tpu.memory_space<vmem>>) attributes {dimension_semantics = [], scalar_prefetch = 0 : i64, scratch_operands = 1 : i64, tpu.core_type = #tpu.core_type<tc>} {
    %c0 = arith.constant 0 : index
    %c0_0 = arith.constant 0 : index
    %0 = vector.load %arg0[%c0, %c0_0] : memref<512x32xf32, #tpu.memory_space<vmem>>, vector<512x32xf32>
    %c0_1 = arith.constant 0 : index
    %c0_2 = arith.constant 0 : index
    %1 = vector.load %arg2[%c0_1, %c0_2] : memref<32x64xf32, #tpu.memory_space<vmem>>, vector<32x64xf32>
    %cst = arith.constant dense<0.000000e+00> : vector<512x64xf32>
    %2 = tpu.matmul %0, %1, %cst {dimension_numbers = #tpu.dot_dimension_numbers<[1], [0], [0], [1], [0, 0, 1, 1], [], []>} : vector<512x32xf32>, vector<32x64xf32>, vector<512x64xf32> -> vector<512x64xf32>
    %c0_3 = arith.constant 0 : index
    %c0_4 = arith.constant 0 : index
    %3 = vector.load %arg3[%c0_3, %c0_4] : memref<1x64xf32, #tpu.memory_space<vmem>>, vector<1x64xf32>
    %4 = vector.broadcast %3 : vector<1x64xf32> to vector<512x64xf32>
    %5 = arith.addf %2, %4 : vector<512x64xf32>
    %cst_5 = arith.constant 0.000000e+00 : f32
    %6 = vector.broadcast %cst_5 : f32 to vector<512x64xf32>
    %7 = arith.maximumf %5, %6 : vector<512x64xf32>
    %c0_6 = arith.constant 0 : index
    %c0_7 = arith.constant 0 : index
    %8 = vector.load %arg1[%c0_6, %c0_7] : memref<8x512xf32, #tpu.memory_space<vmem>>, vector<8x512xf32>
    %cst_8 = arith.constant dense<0.000000e+00> : vector<8x64xf32>
    %9 = tpu.matmul %8, %7, %cst_8 {dimension_numbers = #tpu.dot_dimension_numbers<[1], [0], [0], [1], [0, 0, 1, 1], [], []>} : vector<8x512xf32>, vector<512x64xf32>, vector<8x64xf32> -> vector<8x64xf32>
    %c0_9 = arith.constant 0 : index
    %c0_10 = arith.constant 0 : index
    %10 = vector.load %arg4[%c0_9, %c0_10] : memref<64x32xf32, #tpu.memory_space<vmem>>, vector<64x32xf32>
    %cst_11 = arith.constant dense<0.000000e+00> : vector<8x32xf32>
    %11 = tpu.matmul %9, %10, %cst_11 {dimension_numbers = #tpu.dot_dimension_numbers<[1], [0], [0], [1], [0, 0, 1, 1], [], []>} : vector<8x64xf32>, vector<64x32xf32>, vector<8x32xf32> -> vector<8x32xf32>
    %c0_12 = arith.constant 0 : index
    %c0_13 = arith.constant 0 : index
    %12 = vector.load %arg5[%c0_12, %c0_13] : memref<1x32xf32, #tpu.memory_space<vmem>>, vector<1x32xf32>
    %13 = vector.broadcast %12 : vector<1x32xf32> to vector<8x32xf32>
    %14 = arith.addf %11, %13 : vector<8x32xf32>
    %c0_14 = arith.constant 0 : index
    %c0_15 = arith.constant 0 : index
    %15 = vector.load %arg7[%c0_14, %c0_15] : memref<56x1xi32, #tpu.memory_space<vmem>>, vector<56x1xi32>
    %16 = tpu.iota {dimensions = array<i32: 1>} : vector<56x128xi32>
    %17 = vector.broadcast %15 : vector<56x1xi32> to vector<56x128xi32>
    %18 = arith.cmpi eq, %16, %17 : vector<56x128xi32>
    %19 = arith.extui %18 : vector<56x128xi1> to vector<56x128xi32>
    %20 = arith.sitofp %19 : vector<56x128xi32> to vector<56x128xf32>
    %c0_16 = arith.constant 0 : index
    %c0_17 = arith.constant 0 : index
    %21 = vector.load %arg6[%c0_16, %c0_17] : memref<128x32xf32, #tpu.memory_space<vmem>>, vector<128x32xf32>
    %cst_18 = arith.constant dense<0.000000e+00> : vector<56x32xf32>
    %22 = tpu.matmul %20, %21, %cst_18 {dimension_numbers = #tpu.dot_dimension_numbers<[1], [0], [0], [1], [0, 0, 1, 1], [], []>} : vector<56x128xf32>, vector<128x32xf32>, vector<56x32xf32> -> vector<56x32xf32>
    %23 = tpu.concatenate %14, %22 in 0 : vector<8x32xf32>, vector<56x32xf32> -> vector<64x32xf32>
    %c0_19 = arith.constant 0 : index
    %c0_20 = arith.constant 0 : index
    %24 = vector.load %arg9[%c0_19, %c0_20] : memref<32x256xf32, #tpu.memory_space<vmem>>, vector<32x256xf32>
    %cst_21 = arith.constant dense<0.000000e+00> : vector<64x256xf32>
    %25 = tpu.matmul %23, %24, %cst_21 {dimension_numbers = #tpu.dot_dimension_numbers<[1], [0], [0], [1], [0, 0, 1, 1], [], []>} : vector<64x32xf32>, vector<32x256xf32>, vector<64x256xf32> -> vector<64x256xf32>
    %c0_22 = arith.constant 0 : index
    %c0_23 = arith.constant 0 : index
    %26 = vector.load %arg11[%c0_22, %c0_23] : memref<1x256xf32, #tpu.memory_space<vmem>>, vector<1x256xf32>
    %27 = vector.broadcast %26 : vector<1x256xf32> to vector<64x256xf32>
    %28 = arith.addf %25, %27 : vector<64x256xf32>
    %cst_24 = arith.constant 0.000000e+00 : f32
    %29 = vector.broadcast %cst_24 : f32 to vector<8x64xf32>
    %c0_25 = arith.constant 0 : index
    %c0_26 = arith.constant 0 : index
    %30 = vector.load %arg14[%c0_25, %c0_26] : memref<1x256xf32, #tpu.memory_space<vmem>>, vector<1x256xf32>
    %31 = vector.shape_cast %30 : vector<1x256xf32> to vector<1x256xf32>
    %32 = vector.broadcast %31 : vector<1x256xf32> to vector<8x256xf32>
    %33 = vector.extract_strided_slice %28 {offsets = [0, 0], sizes = [8, 256], strides = [1, 1]} : vector<64x256xf32> to vector<8x256xf32>
    %c0_27 = arith.constant 0 : index
    %c0_28 = arith.constant 0 : index
    %34 = vector.load %arg10[%c0_27, %c0_28] : memref<64x256xf32, #tpu.memory_space<vmem>>, vector<64x256xf32>
    %cst_29 = arith.constant dense<0.000000e+00> : vector<8x256xf32>
    %35 = tpu.matmul %29, %34, %cst_29 {dimension_numbers = #tpu.dot_dimension_numbers<[1], [0], [0], [1], [0, 0, 1, 1], [], []>} : vector<8x64xf32>, vector<64x256xf32>, vector<8x256xf32> -> vector<8x256xf32>
    %36 = arith.addf %33, %35 : vector<8x256xf32>
    %37 = math.tanh %36 : vector<8x256xf32>
    %38 = vector.extract_strided_slice %37 {offsets = [0, 0], sizes = [8, 64], strides = [1, 1]} : vector<8x256xf32> to vector<8x64xf32>
    %cst_30 = arith.constant 5.000000e-01 : f32
    %39 = vector.broadcast %cst_30 : f32 to vector<8x64xf32>
    %40 = arith.mulf %39, %38 : vector<8x64xf32>
    %cst_31 = arith.constant 5.000000e-01 : f32
    %41 = vector.broadcast %cst_31 : f32 to vector<8x64xf32>
    %42 = arith.addf %40, %41 : vector<8x64xf32>
    %43 = vector.extract_strided_slice %37 {offsets = [0, 64], sizes = [8, 64], strides = [1, 1]} : vector<8x256xf32> to vector<8x64xf32>
    %cst_32 = arith.constant 5.000000e-01 : f32
    %44 = vector.broadcast %cst_32 : f32 to vector<8x64xf32>
    %45 = arith.mulf %44, %43 : vector<8x64xf32>
    %cst_33 = arith.constant 5.000000e-01 : f32
    %46 = vector.broadcast %cst_33 : f32 to vector<8x64xf32>
    %47 = arith.addf %45, %46 : vector<8x64xf32>
    %48 = vector.extract_strided_slice %37 {offsets = [0, 128], sizes = [8, 64], strides = [1, 1]} : vector<8x256xf32> to vector<8x64xf32>
    %49 = vector.extract_strided_slice %37 {offsets = [0, 192], sizes = [8, 64], strides = [1, 1]} : vector<8x256xf32> to vector<8x64xf32>
    %cst_34 = arith.constant 5.000000e-01 : f32
    %50 = vector.broadcast %cst_34 : f32 to vector<8x64xf32>
    %51 = arith.mulf %50, %49 : vector<8x64xf32>
    %cst_35 = arith.constant 5.000000e-01 : f32
    %52 = vector.broadcast %cst_35 : f32 to vector<8x64xf32>
    %53 = arith.addf %51, %52 : vector<8x64xf32>
    %54 = arith.mulf %47, %29 : vector<8x64xf32>
    %55 = arith.mulf %42, %48 : vector<8x64xf32>
    %56 = arith.addf %54, %55 : vector<8x64xf32>
    %57 = math.tanh %56 : vector<8x64xf32>
    %58 = arith.mulf %53, %57 : vector<8x64xf32>
    %c0_36 = arith.constant 0 : index
    %c0_37 = arith.constant 0 : index
    %59 = vector.load %arg12[%c0_36, %c0_37] : memref<64x256xf32, #tpu.memory_space<vmem>>, vector<64x256xf32>
    %cst_38 = arith.constant dense<0.000000e+00> : vector<8x256xf32>
    %60 = tpu.matmul %58, %59, %cst_38 {dimension_numbers = #tpu.dot_dimension_numbers<[1], [0], [0], [1], [0, 0, 1, 1], [], []>} : vector<8x64xf32>, vector<64x256xf32>, vector<8x256xf32> -> vector<8x256xf32>
    %61 = arith.addf %60, %32 : vector<8x256xf32>
    %62 = math.tanh %61 : vector<8x256xf32>
    %63 = vector.extract_strided_slice %62 {offsets = [0, 0], sizes = [8, 64], strides = [1, 1]} : vector<8x256xf32> to vector<8x64xf32>
    %cst_39 = arith.constant 5.000000e-01 : f32
    %64 = vector.broadcast %cst_39 : f32 to vector<8x64xf32>
    %65 = arith.mulf %64, %63 : vector<8x64xf32>
    %cst_40 = arith.constant 5.000000e-01 : f32
    %66 = vector.broadcast %cst_40 : f32 to vector<8x64xf32>
    %67 = arith.addf %65, %66 : vector<8x64xf32>
    %68 = vector.extract_strided_slice %62 {offsets = [0, 64], sizes = [8, 64], strides = [1, 1]} : vector<8x256xf32> to vector<8x64xf32>
    %cst_41 = arith.constant 5.000000e-01 : f32
    %69 = vector.broadcast %cst_41 : f32 to vector<8x64xf32>
    %70 = arith.mulf %69, %68 : vector<8x64xf32>
    %cst_42 = arith.constant 5.000000e-01 : f32
    %71 = vector.broadcast %cst_42 : f32 to vector<8x64xf32>
    %72 = arith.addf %70, %71 : vector<8x64xf32>
    %73 = vector.extract_strided_slice %62 {offsets = [0, 128], sizes = [8, 64], strides = [1, 1]} : vector<8x256xf32> to vector<8x64xf32>
    %74 = vector.extract_strided_slice %62 {offsets = [0, 192], sizes = [8, 64], strides = [1, 1]} : vector<8x256xf32> to vector<8x64xf32>
    %cst_43 = arith.constant 5.000000e-01 : f32
    %75 = vector.broadcast %cst_43 : f32 to vector<8x64xf32>
    %76 = arith.mulf %75, %74 : vector<8x64xf32>
    %cst_44 = arith.constant 5.000000e-01 : f32
    %77 = vector.broadcast %cst_44 : f32 to vector<8x64xf32>
    %78 = arith.addf %76, %77 : vector<8x64xf32>
    %79 = arith.mulf %72, %29 : vector<8x64xf32>
    %80 = arith.mulf %67, %73 : vector<8x64xf32>
    %81 = arith.addf %79, %80 : vector<8x64xf32>
    %82 = math.tanh %81 : vector<8x64xf32>
    %83 = arith.mulf %78, %82 : vector<8x64xf32>
    %c0_45 = arith.constant 0 : index
    %c0_46 = arith.constant 0 : index
    %84 = vector.load %arg13[%c0_45, %c0_46] : memref<64x256xf32, #tpu.memory_space<vmem>>, vector<64x256xf32>
    %cst_47 = arith.constant dense<0.000000e+00> : vector<8x256xf32>
    %85 = tpu.matmul %83, %84, %cst_47 {dimension_numbers = #tpu.dot_dimension_numbers<[1], [0], [0], [1], [0, 0, 1, 1], [], []>} : vector<8x64xf32>, vector<64x256xf32>, vector<8x256xf32> -> vector<8x256xf32>
    %86 = arith.addf %85, %32 : vector<8x256xf32>
    %87 = vector.extract_strided_slice %28 {offsets = [8, 0], sizes = [8, 256], strides = [1, 1]} : vector<64x256xf32> to vector<8x256xf32>
    %c0_48 = arith.constant 0 : index
    %c0_49 = arith.constant 0 : index
    %88 = vector.load %arg10[%c0_48, %c0_49] : memref<64x256xf32, #tpu.memory_space<vmem>>, vector<64x256xf32>
    %cst_50 = arith.constant dense<0.000000e+00> : vector<8x256xf32>
    %89 = tpu.matmul %58, %88, %cst_50 {dimension_numbers = #tpu.dot_dimension_numbers<[1], [0], [0], [1], [0, 0, 1, 1], [], []>} : vector<8x64xf32>, vector<64x256xf32>, vector<8x256xf32> -> vector<8x256xf32>
    %90 = arith.addf %87, %89 : vector<8x256xf32>
    %91 = math.tanh %90 : vector<8x256xf32>
    %92 = vector.extract_strided_slice %91 {offsets = [0, 0], sizes = [8, 64], strides = [1, 1]} : vector<8x256xf32> to vector<8x64xf32>
    %cst_51 = arith.constant 5.000000e-01 : f32
    %93 = vector.broadcast %cst_51 : f32 to vector<8x64xf32>
    %94 = arith.mulf %93, %92 : vector<8x64xf32>
    %cst_52 = arith.constant 5.000000e-01 : f32
    %95 = vector.broadcast %cst_52 : f32 to vector<8x64xf32>
    %96 = arith.addf %94, %95 : vector<8x64xf32>
    %97 = vector.extract_strided_slice %91 {offsets = [0, 64], sizes = [8, 64], strides = [1, 1]} : vector<8x256xf32> to vector<8x64xf32>
    %cst_53 = arith.constant 5.000000e-01 : f32
    %98 = vector.broadcast %cst_53 : f32 to vector<8x64xf32>
    %99 = arith.mulf %98, %97 : vector<8x64xf32>
    %cst_54 = arith.constant 5.000000e-01 : f32
    %100 = vector.broadcast %cst_54 : f32 to vector<8x64xf32>
    %101 = arith.addf %99, %100 : vector<8x64xf32>
    %102 = vector.extract_strided_slice %91 {offsets = [0, 128], sizes = [8, 64], strides = [1, 1]} : vector<8x256xf32> to vector<8x64xf32>
    %103 = vector.extract_strided_slice %91 {offsets = [0, 192], sizes = [8, 64], strides = [1, 1]} : vector<8x256xf32> to vector<8x64xf32>
    %cst_55 = arith.constant 5.000000e-01 : f32
    %104 = vector.broadcast %cst_55 : f32 to vector<8x64xf32>
    %105 = arith.mulf %104, %103 : vector<8x64xf32>
    %cst_56 = arith.constant 5.000000e-01 : f32
    %106 = vector.broadcast %cst_56 : f32 to vector<8x64xf32>
    %107 = arith.addf %105, %106 : vector<8x64xf32>
    %108 = arith.mulf %101, %56 : vector<8x64xf32>
    %109 = arith.mulf %96, %102 : vector<8x64xf32>
    %110 = arith.addf %108, %109 : vector<8x64xf32>
    %111 = math.tanh %110 : vector<8x64xf32>
    %112 = arith.mulf %107, %111 : vector<8x64xf32>
    %c0_57 = arith.constant 0 : index
    %c0_58 = arith.constant 0 : index
    %113 = vector.load %arg12[%c0_57, %c0_58] : memref<64x256xf32, #tpu.memory_space<vmem>>, vector<64x256xf32>
    %cst_59 = arith.constant dense<0.000000e+00> : vector<8x256xf32>
    %114 = tpu.matmul %112, %113, %cst_59 {dimension_numbers = #tpu.dot_dimension_numbers<[1], [0], [0], [1], [0, 0, 1, 1], [], []>} : vector<8x64xf32>, vector<64x256xf32>, vector<8x256xf32> -> vector<8x256xf32>
    %115 = arith.addf %114, %86 : vector<8x256xf32>
    %116 = math.tanh %115 : vector<8x256xf32>
    %117 = vector.extract_strided_slice %116 {offsets = [0, 0], sizes = [8, 64], strides = [1, 1]} : vector<8x256xf32> to vector<8x64xf32>
    %cst_60 = arith.constant 5.000000e-01 : f32
    %118 = vector.broadcast %cst_60 : f32 to vector<8x64xf32>
    %119 = arith.mulf %118, %117 : vector<8x64xf32>
    %cst_61 = arith.constant 5.000000e-01 : f32
    %120 = vector.broadcast %cst_61 : f32 to vector<8x64xf32>
    %121 = arith.addf %119, %120 : vector<8x64xf32>
    %122 = vector.extract_strided_slice %116 {offsets = [0, 64], sizes = [8, 64], strides = [1, 1]} : vector<8x256xf32> to vector<8x64xf32>
    %cst_62 = arith.constant 5.000000e-01 : f32
    %123 = vector.broadcast %cst_62 : f32 to vector<8x64xf32>
    %124 = arith.mulf %123, %122 : vector<8x64xf32>
    %cst_63 = arith.constant 5.000000e-01 : f32
    %125 = vector.broadcast %cst_63 : f32 to vector<8x64xf32>
    %126 = arith.addf %124, %125 : vector<8x64xf32>
    %127 = vector.extract_strided_slice %116 {offsets = [0, 128], sizes = [8, 64], strides = [1, 1]} : vector<8x256xf32> to vector<8x64xf32>
    %128 = vector.extract_strided_slice %116 {offsets = [0, 192], sizes = [8, 64], strides = [1, 1]} : vector<8x256xf32> to vector<8x64xf32>
    %cst_64 = arith.constant 5.000000e-01 : f32
    %129 = vector.broadcast %cst_64 : f32 to vector<8x64xf32>
    %130 = arith.mulf %129, %128 : vector<8x64xf32>
    %cst_65 = arith.constant 5.000000e-01 : f32
    %131 = vector.broadcast %cst_65 : f32 to vector<8x64xf32>
    %132 = arith.addf %130, %131 : vector<8x64xf32>
    %133 = arith.mulf %126, %81 : vector<8x64xf32>
    %134 = arith.mulf %121, %127 : vector<8x64xf32>
    %135 = arith.addf %133, %134 : vector<8x64xf32>
    %136 = math.tanh %135 : vector<8x64xf32>
    %137 = arith.mulf %132, %136 : vector<8x64xf32>
    %c0_66 = arith.constant 0 : index
    %c0_67 = arith.constant 0 : index
    %138 = vector.load %arg19[%c0_66, %c0_67] : memref<56x64xf32, #tpu.memory_space<vmem>>, vector<8x64xf32>
    tpu.vector_store %arg19[%c0_66, %c0_67], %137 {strides = array<i32>} : memref<56x64xf32, #tpu.memory_space<vmem>>, vector<8x64xf32>,
    %c0_68 = arith.constant 0 : index
    %c0_69 = arith.constant 0 : index
    %139 = vector.load %arg13[%c0_68, %c0_69] : memref<64x256xf32, #tpu.memory_space<vmem>>, vector<64x256xf32>
    %cst_70 = arith.constant dense<0.000000e+00> : vector<8x256xf32>
    %140 = tpu.matmul %137, %139, %cst_70 {dimension_numbers = #tpu.dot_dimension_numbers<[1], [0], [0], [1], [0, 0, 1, 1], [], []>} : vector<8x64xf32>, vector<64x256xf32>, vector<8x256xf32> -> vector<8x256xf32>
    %141 = arith.addf %140, %32 : vector<8x256xf32>
    %142 = vector.extract_strided_slice %28 {offsets = [16, 0], sizes = [8, 256], strides = [1, 1]} : vector<64x256xf32> to vector<8x256xf32>
    %c0_71 = arith.constant 0 : index
    %c0_72 = arith.constant 0 : index
    %143 = vector.load %arg10[%c0_71, %c0_72] : memref<64x256xf32, #tpu.memory_space<vmem>>, vector<64x256xf32>
    %cst_73 = arith.constant dense<0.000000e+00> : vector<8x256xf32>
    %144 = tpu.matmul %112, %143, %cst_73 {dimension_numbers = #tpu.dot_dimension_numbers<[1], [0], [0], [1], [0, 0, 1, 1], [], []>} : vector<8x64xf32>, vector<64x256xf32>, vector<8x256xf32> -> vector<8x256xf32>
    %145 = arith.addf %142, %144 : vector<8x256xf32>
    %146 = math.tanh %145 : vector<8x256xf32>
    %147 = vector.extract_strided_slice %146 {offsets = [0, 0], sizes = [8, 64], strides = [1, 1]} : vector<8x256xf32> to vector<8x64xf32>
    %cst_74 = arith.constant 5.000000e-01 : f32
    %148 = vector.broadcast %cst_74 : f32 to vector<8x64xf32>
    %149 = arith.mulf %148, %147 : vector<8x64xf32>
    %cst_75 = arith.constant 5.000000e-01 : f32
    %150 = vector.broadcast %cst_75 : f32 to vector<8x64xf32>
    %151 = arith.addf %149, %150 : vector<8x64xf32>
    %152 = vector.extract_strided_slice %146 {offsets = [0, 64], sizes = [8, 64], strides = [1, 1]} : vector<8x256xf32> to vector<8x64xf32>
    %cst_76 = arith.constant 5.000000e-01 : f32
    %153 = vector.broadcast %cst_76 : f32 to vector<8x64xf32>
    %154 = arith.mulf %153, %152 : vector<8x64xf32>
    %cst_77 = arith.constant 5.000000e-01 : f32
    %155 = vector.broadcast %cst_77 : f32 to vector<8x64xf32>
    %156 = arith.addf %154, %155 : vector<8x64xf32>
    %157 = vector.extract_strided_slice %146 {offsets = [0, 128], sizes = [8, 64], strides = [1, 1]} : vector<8x256xf32> to vector<8x64xf32>
    %158 = vector.extract_strided_slice %146 {offsets = [0, 192], sizes = [8, 64], strides = [1, 1]} : vector<8x256xf32> to vector<8x64xf32>
    %cst_78 = arith.constant 5.000000e-01 : f32
    %159 = vector.broadcast %cst_78 : f32 to vector<8x64xf32>
    %160 = arith.mulf %159, %158 : vector<8x64xf32>
    %cst_79 = arith.constant 5.000000e-01 : f32
    %161 = vector.broadcast %cst_79 : f32 to vector<8x64xf32>
    %162 = arith.addf %160, %161 : vector<8x64xf32>
    %163 = arith.mulf %156, %110 : vector<8x64xf32>
    %164 = arith.mulf %151, %157 : vector<8x64xf32>
    %165 = arith.addf %163, %164 : vector<8x64xf32>
    %166 = math.tanh %165 : vector<8x64xf32>
    %167 = arith.mulf %162, %166 : vector<8x64xf32>
    %c0_80 = arith.constant 0 : index
    %c0_81 = arith.constant 0 : index
    %168 = vector.load %arg12[%c0_80, %c0_81] : memref<64x256xf32, #tpu.memory_space<vmem>>, vector<64x256xf32>
    %cst_82 = arith.constant dense<0.000000e+00> : vector<8x256xf32>
    %169 = tpu.matmul %167, %168, %cst_82 {dimension_numbers = #tpu.dot_dimension_numbers<[1], [0], [0], [1], [0, 0, 1, 1], [], []>} : vector<8x64xf32>, vector<64x256xf32>, vector<8x256xf32> -> vector<8x256xf32>
    %170 = arith.addf %169, %141 : vector<8x256xf32>
    %171 = math.tanh %170 : vector<8x256xf32>
    %172 = vector.extract_strided_slice %171 {offsets = [0, 0], sizes = [8, 64], strides = [1, 1]} : vector<8x256xf32> to vector<8x64xf32>
    %cst_83 = arith.constant 5.000000e-01 : f32
    %173 = vector.broadcast %cst_83 : f32 to vector<8x64xf32>
    %174 = arith.mulf %173, %172 : vector<8x64xf32>
    %cst_84 = arith.constant 5.000000e-01 : f32
    %175 = vector.broadcast %cst_84 : f32 to vector<8x64xf32>
    %176 = arith.addf %174, %175 : vector<8x64xf32>
    %177 = vector.extract_strided_slice %171 {offsets = [0, 64], sizes = [8, 64], strides = [1, 1]} : vector<8x256xf32> to vector<8x64xf32>
    %cst_85 = arith.constant 5.000000e-01 : f32
    %178 = vector.broadcast %cst_85 : f32 to vector<8x64xf32>
    %179 = arith.mulf %178, %177 : vector<8x64xf32>
    %cst_86 = arith.constant 5.000000e-01 : f32
    %180 = vector.broadcast %cst_86 : f32 to vector<8x64xf32>
    %181 = arith.addf %179, %180 : vector<8x64xf32>
    %182 = vector.extract_strided_slice %171 {offsets = [0, 128], sizes = [8, 64], strides = [1, 1]} : vector<8x256xf32> to vector<8x64xf32>
    %183 = vector.extract_strided_slice %171 {offsets = [0, 192], sizes = [8, 64], strides = [1, 1]} : vector<8x256xf32> to vector<8x64xf32>
    %cst_87 = arith.constant 5.000000e-01 : f32
    %184 = vector.broadcast %cst_87 : f32 to vector<8x64xf32>
    %185 = arith.mulf %184, %183 : vector<8x64xf32>
    %cst_88 = arith.constant 5.000000e-01 : f32
    %186 = vector.broadcast %cst_88 : f32 to vector<8x64xf32>
    %187 = arith.addf %185, %186 : vector<8x64xf32>
    %188 = arith.mulf %181, %135 : vector<8x64xf32>
    %189 = arith.mulf %176, %182 : vector<8x64xf32>
    %190 = arith.addf %188, %189 : vector<8x64xf32>
    %191 = math.tanh %190 : vector<8x64xf32>
    %192 = arith.mulf %187, %191 : vector<8x64xf32>
    %c8 = arith.constant 8 : index
    %c0_89 = arith.constant 0 : index
    %193 = vector.load %arg19[%c8, %c0_89] : memref<56x64xf32, #tpu.memory_space<vmem>>, vector<8x64xf32>
    tpu.vector_store %arg19[%c8, %c0_89], %192 {strides = array<i32>} : memref<56x64xf32, #tpu.memory_space<vmem>>, vector<8x64xf32>,
    %c0_90 = arith.constant 0 : index
    %c0_91 = arith.constant 0 : index
    %194 = vector.load %arg13[%c0_90, %c0_91] : memref<64x256xf32, #tpu.memory_space<vmem>>, vector<64x256xf32>
    %cst_92 = arith.constant dense<0.000000e+00> : vector<8x256xf32>
    %195 = tpu.matmul %192, %194, %cst_92 {dimension_numbers = #tpu.dot_dimension_numbers<[1], [0], [0], [1], [0, 0, 1, 1], [], []>} : vector<8x64xf32>, vector<64x256xf32>, vector<8x256xf32> -> vector<8x256xf32>
    %196 = arith.addf %195, %32 : vector<8x256xf32>
    %197 = vector.extract_strided_slice %28 {offsets = [24, 0], sizes = [8, 256], strides = [1, 1]} : vector<64x256xf32> to vector<8x256xf32>
    %c0_93 = arith.constant 0 : index
    %c0_94 = arith.constant 0 : index
    %198 = vector.load %arg10[%c0_93, %c0_94] : memref<64x256xf32, #tpu.memory_space<vmem>>, vector<64x256xf32>
    %cst_95 = arith.constant dense<0.000000e+00> : vector<8x256xf32>
    %199 = tpu.matmul %167, %198, %cst_95 {dimension_numbers = #tpu.dot_dimension_numbers<[1], [0], [0], [1], [0, 0, 1, 1], [], []>} : vector<8x64xf32>, vector<64x256xf32>, vector<8x256xf32> -> vector<8x256xf32>
    %200 = arith.addf %197, %199 : vector<8x256xf32>
    %201 = math.tanh %200 : vector<8x256xf32>
    %202 = vector.extract_strided_slice %201 {offsets = [0, 0], sizes = [8, 64], strides = [1, 1]} : vector<8x256xf32> to vector<8x64xf32>
    %cst_96 = arith.constant 5.000000e-01 : f32
    %203 = vector.broadcast %cst_96 : f32 to vector<8x64xf32>
    %204 = arith.mulf %203, %202 : vector<8x64xf32>
    %cst_97 = arith.constant 5.000000e-01 : f32
    %205 = vector.broadcast %cst_97 : f32 to vector<8x64xf32>
    %206 = arith.addf %204, %205 : vector<8x64xf32>
    %207 = vector.extract_strided_slice %201 {offsets = [0, 64], sizes = [8, 64], strides = [1, 1]} : vector<8x256xf32> to vector<8x64xf32>
    %cst_98 = arith.constant 5.000000e-01 : f32
    %208 = vector.broadcast %cst_98 : f32 to vector<8x64xf32>
    %209 = arith.mulf %208, %207 : vector<8x64xf32>
    %cst_99 = arith.constant 5.000000e-01 : f32
    %210 = vector.broadcast %cst_99 : f32 to vector<8x64xf32>
    %211 = arith.addf %209, %210 : vector<8x64xf32>
    %212 = vector.extract_strided_slice %201 {offsets = [0, 128], sizes = [8, 64], strides = [1, 1]} : vector<8x256xf32> to vector<8x64xf32>
    %213 = vector.extract_strided_slice %201 {offsets = [0, 192], sizes = [8, 64], strides = [1, 1]} : vector<8x256xf32> to vector<8x64xf32>
    %cst_100 = arith.constant 5.000000e-01 : f32
    %214 = vector.broadcast %cst_100 : f32 to vector<8x64xf32>
    %215 = arith.mulf %214, %213 : vector<8x64xf32>
    %cst_101 = arith.constant 5.000000e-01 : f32
    %216 = vector.broadcast %cst_101 : f32 to vector<8x64xf32>
    %217 = arith.addf %215, %216 : vector<8x64xf32>
    %218 = arith.mulf %211, %165 : vector<8x64xf32>
    %219 = arith.mulf %206, %212 : vector<8x64xf32>
    %220 = arith.addf %218, %219 : vector<8x64xf32>
    %221 = math.tanh %220 : vector<8x64xf32>
    %222 = arith.mulf %217, %221 : vector<8x64xf32>
    %c0_102 = arith.constant 0 : index
    %c0_103 = arith.constant 0 : index
    %223 = vector.load %arg12[%c0_102, %c0_103] : memref<64x256xf32, #tpu.memory_space<vmem>>, vector<64x256xf32>
    %cst_104 = arith.constant dense<0.000000e+00> : vector<8x256xf32>
    %224 = tpu.matmul %222, %223, %cst_104 {dimension_numbers = #tpu.dot_dimension_numbers<[1], [0], [0], [1], [0, 0, 1, 1], [], []>} : vector<8x64xf32>, vector<64x256xf32>, vector<8x256xf32> -> vector<8x256xf32>
    %225 = arith.addf %224, %196 : vector<8x256xf32>
    %226 = math.tanh %225 : vector<8x256xf32>
    %227 = vector.extract_strided_slice %226 {offsets = [0, 0], sizes = [8, 64], strides = [1, 1]} : vector<8x256xf32> to vector<8x64xf32>
    %cst_105 = arith.constant 5.000000e-01 : f32
    %228 = vector.broadcast %cst_105 : f32 to vector<8x64xf32>
    %229 = arith.mulf %228, %227 : vector<8x64xf32>
    %cst_106 = arith.constant 5.000000e-01 : f32
    %230 = vector.broadcast %cst_106 : f32 to vector<8x64xf32>
    %231 = arith.addf %229, %230 : vector<8x64xf32>
    %232 = vector.extract_strided_slice %226 {offsets = [0, 64], sizes = [8, 64], strides = [1, 1]} : vector<8x256xf32> to vector<8x64xf32>
    %cst_107 = arith.constant 5.000000e-01 : f32
    %233 = vector.broadcast %cst_107 : f32 to vector<8x64xf32>
    %234 = arith.mulf %233, %232 : vector<8x64xf32>
    %cst_108 = arith.constant 5.000000e-01 : f32
    %235 = vector.broadcast %cst_108 : f32 to vector<8x64xf32>
    %236 = arith.addf %234, %235 : vector<8x64xf32>
    %237 = vector.extract_strided_slice %226 {offsets = [0, 128], sizes = [8, 64], strides = [1, 1]} : vector<8x256xf32> to vector<8x64xf32>
    %238 = vector.extract_strided_slice %226 {offsets = [0, 192], sizes = [8, 64], strides = [1, 1]} : vector<8x256xf32> to vector<8x64xf32>
    %cst_109 = arith.constant 5.000000e-01 : f32
    %239 = vector.broadcast %cst_109 : f32 to vector<8x64xf32>
    %240 = arith.mulf %239, %238 : vector<8x64xf32>
    %cst_110 = arith.constant 5.000000e-01 : f32
    %241 = vector.broadcast %cst_110 : f32 to vector<8x64xf32>
    %242 = arith.addf %240, %241 : vector<8x64xf32>
    %243 = arith.mulf %236, %190 : vector<8x64xf32>
    %244 = arith.mulf %231, %237 : vector<8x64xf32>
    %245 = arith.addf %243, %244 : vector<8x64xf32>
    %246 = math.tanh %245 : vector<8x64xf32>
    %247 = arith.mulf %242, %246 : vector<8x64xf32>
    %c16 = arith.constant 16 : index
    %c0_111 = arith.constant 0 : index
    %248 = vector.load %arg19[%c16, %c0_111] : memref<56x64xf32, #tpu.memory_space<vmem>>, vector<8x64xf32>
    tpu.vector_store %arg19[%c16, %c0_111], %247 {strides = array<i32>} : memref<56x64xf32, #tpu.memory_space<vmem>>, vector<8x64xf32>,
    %c0_112 = arith.constant 0 : index
    %c0_113 = arith.constant 0 : index
    %249 = vector.load %arg13[%c0_112, %c0_113] : memref<64x256xf32, #tpu.memory_space<vmem>>, vector<64x256xf32>
    %cst_114 = arith.constant dense<0.000000e+00> : vector<8x256xf32>
    %250 = tpu.matmul %247, %249, %cst_114 {dimension_numbers = #tpu.dot_dimension_numbers<[1], [0], [0], [1], [0, 0, 1, 1], [], []>} : vector<8x64xf32>, vector<64x256xf32>, vector<8x256xf32> -> vector<8x256xf32>
    %251 = arith.addf %250, %32 : vector<8x256xf32>
    %252 = vector.extract_strided_slice %28 {offsets = [32, 0], sizes = [8, 256], strides = [1, 1]} : vector<64x256xf32> to vector<8x256xf32>
    %c0_115 = arith.constant 0 : index
    %c0_116 = arith.constant 0 : index
    %253 = vector.load %arg10[%c0_115, %c0_116] : memref<64x256xf32, #tpu.memory_space<vmem>>, vector<64x256xf32>
    %cst_117 = arith.constant dense<0.000000e+00> : vector<8x256xf32>
    %254 = tpu.matmul %222, %253, %cst_117 {dimension_numbers = #tpu.dot_dimension_numbers<[1], [0], [0], [1], [0, 0, 1, 1], [], []>} : vector<8x64xf32>, vector<64x256xf32>, vector<8x256xf32> -> vector<8x256xf32>
    %255 = arith.addf %252, %254 : vector<8x256xf32>
    %256 = math.tanh %255 : vector<8x256xf32>
    %257 = vector.extract_strided_slice %256 {offsets = [0, 0], sizes = [8, 64], strides = [1, 1]} : vector<8x256xf32> to vector<8x64xf32>
    %cst_118 = arith.constant 5.000000e-01 : f32
    %258 = vector.broadcast %cst_118 : f32 to vector<8x64xf32>
    %259 = arith.mulf %258, %257 : vector<8x64xf32>
    %cst_119 = arith.constant 5.000000e-01 : f32
    %260 = vector.broadcast %cst_119 : f32 to vector<8x64xf32>
    %261 = arith.addf %259, %260 : vector<8x64xf32>
    %262 = vector.extract_strided_slice %256 {offsets = [0, 64], sizes = [8, 64], strides = [1, 1]} : vector<8x256xf32> to vector<8x64xf32>
    %cst_120 = arith.constant 5.000000e-01 : f32
    %263 = vector.broadcast %cst_120 : f32 to vector<8x64xf32>
    %264 = arith.mulf %263, %262 : vector<8x64xf32>
    %cst_121 = arith.constant 5.000000e-01 : f32
    %265 = vector.broadcast %cst_121 : f32 to vector<8x64xf32>
    %266 = arith.addf %264, %265 : vector<8x64xf32>
    %267 = vector.extract_strided_slice %256 {offsets = [0, 128], sizes = [8, 64], strides = [1, 1]} : vector<8x256xf32> to vector<8x64xf32>
    %268 = vector.extract_strided_slice %256 {offsets = [0, 192], sizes = [8, 64], strides = [1, 1]} : vector<8x256xf32> to vector<8x64xf32>
    %cst_122 = arith.constant 5.000000e-01 : f32
    %269 = vector.broadcast %cst_122 : f32 to vector<8x64xf32>
    %270 = arith.mulf %269, %268 : vector<8x64xf32>
    %cst_123 = arith.constant 5.000000e-01 : f32
    %271 = vector.broadcast %cst_123 : f32 to vector<8x64xf32>
    %272 = arith.addf %270, %271 : vector<8x64xf32>
    %273 = arith.mulf %266, %220 : vector<8x64xf32>
    %274 = arith.mulf %261, %267 : vector<8x64xf32>
    %275 = arith.addf %273, %274 : vector<8x64xf32>
    %276 = math.tanh %275 : vector<8x64xf32>
    %277 = arith.mulf %272, %276 : vector<8x64xf32>
    %c0_124 = arith.constant 0 : index
    %c0_125 = arith.constant 0 : index
    %278 = vector.load %arg12[%c0_124, %c0_125] : memref<64x256xf32, #tpu.memory_space<vmem>>, vector<64x256xf32>
    %cst_126 = arith.constant dense<0.000000e+00> : vector<8x256xf32>
    %279 = tpu.matmul %277, %278, %cst_126 {dimension_numbers = #tpu.dot_dimension_numbers<[1], [0], [0], [1], [0, 0, 1, 1], [], []>} : vector<8x64xf32>, vector<64x256xf32>, vector<8x256xf32> -> vector<8x256xf32>
    %280 = arith.addf %279, %251 : vector<8x256xf32>
    %281 = math.tanh %280 : vector<8x256xf32>
    %282 = vector.extract_strided_slice %281 {offsets = [0, 0], sizes = [8, 64], strides = [1, 1]} : vector<8x256xf32> to vector<8x64xf32>
    %cst_127 = arith.constant 5.000000e-01 : f32
    %283 = vector.broadcast %cst_127 : f32 to vector<8x64xf32>
    %284 = arith.mulf %283, %282 : vector<8x64xf32>
    %cst_128 = arith.constant 5.000000e-01 : f32
    %285 = vector.broadcast %cst_128 : f32 to vector<8x64xf32>
    %286 = arith.addf %284, %285 : vector<8x64xf32>
    %287 = vector.extract_strided_slice %281 {offsets = [0, 64], sizes = [8, 64], strides = [1, 1]} : vector<8x256xf32> to vector<8x64xf32>
    %cst_129 = arith.constant 5.000000e-01 : f32
    %288 = vector.broadcast %cst_129 : f32 to vector<8x64xf32>
    %289 = arith.mulf %288, %287 : vector<8x64xf32>
    %cst_130 = arith.constant 5.000000e-01 : f32
    %290 = vector.broadcast %cst_130 : f32 to vector<8x64xf32>
    %291 = arith.addf %289, %290 : vector<8x64xf32>
    %292 = vector.extract_strided_slice %281 {offsets = [0, 128], sizes = [8, 64], strides = [1, 1]} : vector<8x256xf32> to vector<8x64xf32>
    %293 = vector.extract_strided_slice %281 {offsets = [0, 192], sizes = [8, 64], strides = [1, 1]} : vector<8x256xf32> to vector<8x64xf32>
    %cst_131 = arith.constant 5.000000e-01 : f32
    %294 = vector.broadcast %cst_131 : f32 to vector<8x64xf32>
    %295 = arith.mulf %294, %293 : vector<8x64xf32>
    %cst_132 = arith.constant 5.000000e-01 : f32
    %296 = vector.broadcast %cst_132 : f32 to vector<8x64xf32>
    %297 = arith.addf %295, %296 : vector<8x64xf32>
    %298 = arith.mulf %291, %245 : vector<8x64xf32>
    %299 = arith.mulf %286, %292 : vector<8x64xf32>
    %300 = arith.addf %298, %299 : vector<8x64xf32>
    %301 = math.tanh %300 : vector<8x64xf32>
    %302 = arith.mulf %297, %301 : vector<8x64xf32>
    %c24 = arith.constant 24 : index
    %c0_133 = arith.constant 0 : index
    %303 = vector.load %arg19[%c24, %c0_133] : memref<56x64xf32, #tpu.memory_space<vmem>>, vector<8x64xf32>
    tpu.vector_store %arg19[%c24, %c0_133], %302 {strides = array<i32>} : memref<56x64xf32, #tpu.memory_space<vmem>>, vector<8x64xf32>,
    %c0_134 = arith.constant 0 : index
    %c0_135 = arith.constant 0 : index
    %304 = vector.load %arg13[%c0_134, %c0_135] : memref<64x256xf32, #tpu.memory_space<vmem>>, vector<64x256xf32>
    %cst_136 = arith.constant dense<0.000000e+00> : vector<8x256xf32>
    %305 = tpu.matmul %302, %304, %cst_136 {dimension_numbers = #tpu.dot_dimension_numbers<[1], [0], [0], [1], [0, 0, 1, 1], [], []>} : vector<8x64xf32>, vector<64x256xf32>, vector<8x256xf32> -> vector<8x256xf32>
    %306 = arith.addf %305, %32 : vector<8x256xf32>
    %307 = vector.extract_strided_slice %28 {offsets = [40, 0], sizes = [8, 256], strides = [1, 1]} : vector<64x256xf32> to vector<8x256xf32>
    %c0_137 = arith.constant 0 : index
    %c0_138 = arith.constant 0 : index
    %308 = vector.load %arg10[%c0_137, %c0_138] : memref<64x256xf32, #tpu.memory_space<vmem>>, vector<64x256xf32>
    %cst_139 = arith.constant dense<0.000000e+00> : vector<8x256xf32>
    %309 = tpu.matmul %277, %308, %cst_139 {dimension_numbers = #tpu.dot_dimension_numbers<[1], [0], [0], [1], [0, 0, 1, 1], [], []>} : vector<8x64xf32>, vector<64x256xf32>, vector<8x256xf32> -> vector<8x256xf32>
    %310 = arith.addf %307, %309 : vector<8x256xf32>
    %311 = math.tanh %310 : vector<8x256xf32>
    %312 = vector.extract_strided_slice %311 {offsets = [0, 0], sizes = [8, 64], strides = [1, 1]} : vector<8x256xf32> to vector<8x64xf32>
    %cst_140 = arith.constant 5.000000e-01 : f32
    %313 = vector.broadcast %cst_140 : f32 to vector<8x64xf32>
    %314 = arith.mulf %313, %312 : vector<8x64xf32>
    %cst_141 = arith.constant 5.000000e-01 : f32
    %315 = vector.broadcast %cst_141 : f32 to vector<8x64xf32>
    %316 = arith.addf %314, %315 : vector<8x64xf32>
    %317 = vector.extract_strided_slice %311 {offsets = [0, 64], sizes = [8, 64], strides = [1, 1]} : vector<8x256xf32> to vector<8x64xf32>
    %cst_142 = arith.constant 5.000000e-01 : f32
    %318 = vector.broadcast %cst_142 : f32 to vector<8x64xf32>
    %319 = arith.mulf %318, %317 : vector<8x64xf32>
    %cst_143 = arith.constant 5.000000e-01 : f32
    %320 = vector.broadcast %cst_143 : f32 to vector<8x64xf32>
    %321 = arith.addf %319, %320 : vector<8x64xf32>
    %322 = vector.extract_strided_slice %311 {offsets = [0, 128], sizes = [8, 64], strides = [1, 1]} : vector<8x256xf32> to vector<8x64xf32>
    %323 = vector.extract_strided_slice %311 {offsets = [0, 192], sizes = [8, 64], strides = [1, 1]} : vector<8x256xf32> to vector<8x64xf32>
    %cst_144 = arith.constant 5.000000e-01 : f32
    %324 = vector.broadcast %cst_144 : f32 to vector<8x64xf32>
    %325 = arith.mulf %324, %323 : vector<8x64xf32>
    %cst_145 = arith.constant 5.000000e-01 : f32
    %326 = vector.broadcast %cst_145 : f32 to vector<8x64xf32>
    %327 = arith.addf %325, %326 : vector<8x64xf32>
    %328 = arith.mulf %321, %275 : vector<8x64xf32>
    %329 = arith.mulf %316, %322 : vector<8x64xf32>
    %330 = arith.addf %328, %329 : vector<8x64xf32>
    %331 = math.tanh %330 : vector<8x64xf32>
    %332 = arith.mulf %327, %331 : vector<8x64xf32>
    %c0_146 = arith.constant 0 : index
    %c0_147 = arith.constant 0 : index
    %333 = vector.load %arg12[%c0_146, %c0_147] : memref<64x256xf32, #tpu.memory_space<vmem>>, vector<64x256xf32>
    %cst_148 = arith.constant dense<0.000000e+00> : vector<8x256xf32>
    %334 = tpu.matmul %332, %333, %cst_148 {dimension_numbers = #tpu.dot_dimension_numbers<[1], [0], [0], [1], [0, 0, 1, 1], [], []>} : vector<8x64xf32>, vector<64x256xf32>, vector<8x256xf32> -> vector<8x256xf32>
    %335 = arith.addf %334, %306 : vector<8x256xf32>
    %336 = math.tanh %335 : vector<8x256xf32>
    %337 = vector.extract_strided_slice %336 {offsets = [0, 0], sizes = [8, 64], strides = [1, 1]} : vector<8x256xf32> to vector<8x64xf32>
    %cst_149 = arith.constant 5.000000e-01 : f32
    %338 = vector.broadcast %cst_149 : f32 to vector<8x64xf32>
    %339 = arith.mulf %338, %337 : vector<8x64xf32>
    %cst_150 = arith.constant 5.000000e-01 : f32
    %340 = vector.broadcast %cst_150 : f32 to vector<8x64xf32>
    %341 = arith.addf %339, %340 : vector<8x64xf32>
    %342 = vector.extract_strided_slice %336 {offsets = [0, 64], sizes = [8, 64], strides = [1, 1]} : vector<8x256xf32> to vector<8x64xf32>
    %cst_151 = arith.constant 5.000000e-01 : f32
    %343 = vector.broadcast %cst_151 : f32 to vector<8x64xf32>
    %344 = arith.mulf %343, %342 : vector<8x64xf32>
    %cst_152 = arith.constant 5.000000e-01 : f32
    %345 = vector.broadcast %cst_152 : f32 to vector<8x64xf32>
    %346 = arith.addf %344, %345 : vector<8x64xf32>
    %347 = vector.extract_strided_slice %336 {offsets = [0, 128], sizes = [8, 64], strides = [1, 1]} : vector<8x256xf32> to vector<8x64xf32>
    %348 = vector.extract_strided_slice %336 {offsets = [0, 192], sizes = [8, 64], strides = [1, 1]} : vector<8x256xf32> to vector<8x64xf32>
    %cst_153 = arith.constant 5.000000e-01 : f32
    %349 = vector.broadcast %cst_153 : f32 to vector<8x64xf32>
    %350 = arith.mulf %349, %348 : vector<8x64xf32>
    %cst_154 = arith.constant 5.000000e-01 : f32
    %351 = vector.broadcast %cst_154 : f32 to vector<8x64xf32>
    %352 = arith.addf %350, %351 : vector<8x64xf32>
    %353 = arith.mulf %346, %300 : vector<8x64xf32>
    %354 = arith.mulf %341, %347 : vector<8x64xf32>
    %355 = arith.addf %353, %354 : vector<8x64xf32>
    %356 = math.tanh %355 : vector<8x64xf32>
    %357 = arith.mulf %352, %356 : vector<8x64xf32>
    %c32 = arith.constant 32 : index
    %c0_155 = arith.constant 0 : index
    %358 = vector.load %arg19[%c32, %c0_155] : memref<56x64xf32, #tpu.memory_space<vmem>>, vector<8x64xf32>
    tpu.vector_store %arg19[%c32, %c0_155], %357 {strides = array<i32>} : memref<56x64xf32, #tpu.memory_space<vmem>>, vector<8x64xf32>,
    %c0_156 = arith.constant 0 : index
    %c0_157 = arith.constant 0 : index
    %359 = vector.load %arg13[%c0_156, %c0_157] : memref<64x256xf32, #tpu.memory_space<vmem>>, vector<64x256xf32>
    %cst_158 = arith.constant dense<0.000000e+00> : vector<8x256xf32>
    %360 = tpu.matmul %357, %359, %cst_158 {dimension_numbers = #tpu.dot_dimension_numbers<[1], [0], [0], [1], [0, 0, 1, 1], [], []>} : vector<8x64xf32>, vector<64x256xf32>, vector<8x256xf32> -> vector<8x256xf32>
    %361 = arith.addf %360, %32 : vector<8x256xf32>
    %362 = vector.extract_strided_slice %28 {offsets = [48, 0], sizes = [8, 256], strides = [1, 1]} : vector<64x256xf32> to vector<8x256xf32>
    %c0_159 = arith.constant 0 : index
    %c0_160 = arith.constant 0 : index
    %363 = vector.load %arg10[%c0_159, %c0_160] : memref<64x256xf32, #tpu.memory_space<vmem>>, vector<64x256xf32>
    %cst_161 = arith.constant dense<0.000000e+00> : vector<8x256xf32>
    %364 = tpu.matmul %332, %363, %cst_161 {dimension_numbers = #tpu.dot_dimension_numbers<[1], [0], [0], [1], [0, 0, 1, 1], [], []>} : vector<8x64xf32>, vector<64x256xf32>, vector<8x256xf32> -> vector<8x256xf32>
    %365 = arith.addf %362, %364 : vector<8x256xf32>
    %366 = math.tanh %365 : vector<8x256xf32>
    %367 = vector.extract_strided_slice %366 {offsets = [0, 0], sizes = [8, 64], strides = [1, 1]} : vector<8x256xf32> to vector<8x64xf32>
    %cst_162 = arith.constant 5.000000e-01 : f32
    %368 = vector.broadcast %cst_162 : f32 to vector<8x64xf32>
    %369 = arith.mulf %368, %367 : vector<8x64xf32>
    %cst_163 = arith.constant 5.000000e-01 : f32
    %370 = vector.broadcast %cst_163 : f32 to vector<8x64xf32>
    %371 = arith.addf %369, %370 : vector<8x64xf32>
    %372 = vector.extract_strided_slice %366 {offsets = [0, 64], sizes = [8, 64], strides = [1, 1]} : vector<8x256xf32> to vector<8x64xf32>
    %cst_164 = arith.constant 5.000000e-01 : f32
    %373 = vector.broadcast %cst_164 : f32 to vector<8x64xf32>
    %374 = arith.mulf %373, %372 : vector<8x64xf32>
    %cst_165 = arith.constant 5.000000e-01 : f32
    %375 = vector.broadcast %cst_165 : f32 to vector<8x64xf32>
    %376 = arith.addf %374, %375 : vector<8x64xf32>
    %377 = vector.extract_strided_slice %366 {offsets = [0, 128], sizes = [8, 64], strides = [1, 1]} : vector<8x256xf32> to vector<8x64xf32>
    %378 = vector.extract_strided_slice %366 {offsets = [0, 192], sizes = [8, 64], strides = [1, 1]} : vector<8x256xf32> to vector<8x64xf32>
    %cst_166 = arith.constant 5.000000e-01 : f32
    %379 = vector.broadcast %cst_166 : f32 to vector<8x64xf32>
    %380 = arith.mulf %379, %378 : vector<8x64xf32>
    %cst_167 = arith.constant 5.000000e-01 : f32
    %381 = vector.broadcast %cst_167 : f32 to vector<8x64xf32>
    %382 = arith.addf %380, %381 : vector<8x64xf32>
    %383 = arith.mulf %376, %330 : vector<8x64xf32>
    %384 = arith.mulf %371, %377 : vector<8x64xf32>
    %385 = arith.addf %383, %384 : vector<8x64xf32>
    %386 = math.tanh %385 : vector<8x64xf32>
    %387 = arith.mulf %382, %386 : vector<8x64xf32>
    %c0_168 = arith.constant 0 : index
    %c0_169 = arith.constant 0 : index
    %388 = vector.load %arg12[%c0_168, %c0_169] : memref<64x256xf32, #tpu.memory_space<vmem>>, vector<64x256xf32>
    %cst_170 = arith.constant dense<0.000000e+00> : vector<8x256xf32>
    %389 = tpu.matmul %387, %388, %cst_170 {dimension_numbers = #tpu.dot_dimension_numbers<[1], [0], [0], [1], [0, 0, 1, 1], [], []>} : vector<8x64xf32>, vector<64x256xf32>, vector<8x256xf32> -> vector<8x256xf32>
    %390 = arith.addf %389, %361 : vector<8x256xf32>
    %391 = math.tanh %390 : vector<8x256xf32>
    %392 = vector.extract_strided_slice %391 {offsets = [0, 0], sizes = [8, 64], strides = [1, 1]} : vector<8x256xf32> to vector<8x64xf32>
    %cst_171 = arith.constant 5.000000e-01 : f32
    %393 = vector.broadcast %cst_171 : f32 to vector<8x64xf32>
    %394 = arith.mulf %393, %392 : vector<8x64xf32>
    %cst_172 = arith.constant 5.000000e-01 : f32
    %395 = vector.broadcast %cst_172 : f32 to vector<8x64xf32>
    %396 = arith.addf %394, %395 : vector<8x64xf32>
    %397 = vector.extract_strided_slice %391 {offsets = [0, 64], sizes = [8, 64], strides = [1, 1]} : vector<8x256xf32> to vector<8x64xf32>
    %cst_173 = arith.constant 5.000000e-01 : f32
    %398 = vector.broadcast %cst_173 : f32 to vector<8x64xf32>
    %399 = arith.mulf %398, %397 : vector<8x64xf32>
    %cst_174 = arith.constant 5.000000e-01 : f32
    %400 = vector.broadcast %cst_174 : f32 to vector<8x64xf32>
    %401 = arith.addf %399, %400 : vector<8x64xf32>
    %402 = vector.extract_strided_slice %391 {offsets = [0, 128], sizes = [8, 64], strides = [1, 1]} : vector<8x256xf32> to vector<8x64xf32>
    %403 = vector.extract_strided_slice %391 {offsets = [0, 192], sizes = [8, 64], strides = [1, 1]} : vector<8x256xf32> to vector<8x64xf32>
    %cst_175 = arith.constant 5.000000e-01 : f32
    %404 = vector.broadcast %cst_175 : f32 to vector<8x64xf32>
    %405 = arith.mulf %404, %403 : vector<8x64xf32>
    %cst_176 = arith.constant 5.000000e-01 : f32
    %406 = vector.broadcast %cst_176 : f32 to vector<8x64xf32>
    %407 = arith.addf %405, %406 : vector<8x64xf32>
    %408 = arith.mulf %401, %355 : vector<8x64xf32>
    %409 = arith.mulf %396, %402 : vector<8x64xf32>
    %410 = arith.addf %408, %409 : vector<8x64xf32>
    %411 = math.tanh %410 : vector<8x64xf32>
    %412 = arith.mulf %407, %411 : vector<8x64xf32>
    %c40 = arith.constant 40 : index
    %c0_177 = arith.constant 0 : index
    %413 = vector.load %arg19[%c40, %c0_177] : memref<56x64xf32, #tpu.memory_space<vmem>>, vector<8x64xf32>
    tpu.vector_store %arg19[%c40, %c0_177], %412 {strides = array<i32>} : memref<56x64xf32, #tpu.memory_space<vmem>>, vector<8x64xf32>,
    %c0_178 = arith.constant 0 : index
    %c0_179 = arith.constant 0 : index
    %414 = vector.load %arg13[%c0_178, %c0_179] : memref<64x256xf32, #tpu.memory_space<vmem>>, vector<64x256xf32>
    %cst_180 = arith.constant dense<0.000000e+00> : vector<8x256xf32>
    %415 = tpu.matmul %412, %414, %cst_180 {dimension_numbers = #tpu.dot_dimension_numbers<[1], [0], [0], [1], [0, 0, 1, 1], [], []>} : vector<8x64xf32>, vector<64x256xf32>, vector<8x256xf32> -> vector<8x256xf32>
    %416 = arith.addf %415, %32 : vector<8x256xf32>
    %417 = vector.extract_strided_slice %28 {offsets = [56, 0], sizes = [8, 256], strides = [1, 1]} : vector<64x256xf32> to vector<8x256xf32>
    %c0_181 = arith.constant 0 : index
    %c0_182 = arith.constant 0 : index
    %418 = vector.load %arg10[%c0_181, %c0_182] : memref<64x256xf32, #tpu.memory_space<vmem>>, vector<64x256xf32>
    %cst_183 = arith.constant dense<0.000000e+00> : vector<8x256xf32>
    %419 = tpu.matmul %387, %418, %cst_183 {dimension_numbers = #tpu.dot_dimension_numbers<[1], [0], [0], [1], [0, 0, 1, 1], [], []>} : vector<8x64xf32>, vector<64x256xf32>, vector<8x256xf32> -> vector<8x256xf32>
    %420 = arith.addf %417, %419 : vector<8x256xf32>
    %421 = math.tanh %420 : vector<8x256xf32>
    %422 = vector.extract_strided_slice %421 {offsets = [0, 0], sizes = [8, 64], strides = [1, 1]} : vector<8x256xf32> to vector<8x64xf32>
    %cst_184 = arith.constant 5.000000e-01 : f32
    %423 = vector.broadcast %cst_184 : f32 to vector<8x64xf32>
    %424 = arith.mulf %423, %422 : vector<8x64xf32>
    %cst_185 = arith.constant 5.000000e-01 : f32
    %425 = vector.broadcast %cst_185 : f32 to vector<8x64xf32>
    %426 = arith.addf %424, %425 : vector<8x64xf32>
    %427 = vector.extract_strided_slice %421 {offsets = [0, 64], sizes = [8, 64], strides = [1, 1]} : vector<8x256xf32> to vector<8x64xf32>
    %cst_186 = arith.constant 5.000000e-01 : f32
    %428 = vector.broadcast %cst_186 : f32 to vector<8x64xf32>
    %429 = arith.mulf %428, %427 : vector<8x64xf32>
    %cst_187 = arith.constant 5.000000e-01 : f32
    %430 = vector.broadcast %cst_187 : f32 to vector<8x64xf32>
    %431 = arith.addf %429, %430 : vector<8x64xf32>
    %432 = vector.extract_strided_slice %421 {offsets = [0, 128], sizes = [8, 64], strides = [1, 1]} : vector<8x256xf32> to vector<8x64xf32>
    %433 = vector.extract_strided_slice %421 {offsets = [0, 192], sizes = [8, 64], strides = [1, 1]} : vector<8x256xf32> to vector<8x64xf32>
    %cst_188 = arith.constant 5.000000e-01 : f32
    %434 = vector.broadcast %cst_188 : f32 to vector<8x64xf32>
    %435 = arith.mulf %434, %433 : vector<8x64xf32>
    %cst_189 = arith.constant 5.000000e-01 : f32
    %436 = vector.broadcast %cst_189 : f32 to vector<8x64xf32>
    %437 = arith.addf %435, %436 : vector<8x64xf32>
    %438 = arith.mulf %431, %385 : vector<8x64xf32>
    %439 = arith.mulf %426, %432 : vector<8x64xf32>
    %440 = arith.addf %438, %439 : vector<8x64xf32>
    %441 = math.tanh %440 : vector<8x64xf32>
    %442 = arith.mulf %437, %441 : vector<8x64xf32>
    %c0_190 = arith.constant 0 : index
    %c0_191 = arith.constant 0 : index
    %443 = vector.load %arg12[%c0_190, %c0_191] : memref<64x256xf32, #tpu.memory_space<vmem>>, vector<64x256xf32>
    %cst_192 = arith.constant dense<0.000000e+00> : vector<8x256xf32>
    %444 = tpu.matmul %442, %443, %cst_192 {dimension_numbers = #tpu.dot_dimension_numbers<[1], [0], [0], [1], [0, 0, 1, 1], [], []>} : vector<8x64xf32>, vector<64x256xf32>, vector<8x256xf32> -> vector<8x256xf32>
    %445 = arith.addf %444, %416 : vector<8x256xf32>
    %446 = math.tanh %445 : vector<8x256xf32>
    %447 = vector.extract_strided_slice %446 {offsets = [0, 0], sizes = [8, 64], strides = [1, 1]} : vector<8x256xf32> to vector<8x64xf32>
    %cst_193 = arith.constant 5.000000e-01 : f32
    %448 = vector.broadcast %cst_193 : f32 to vector<8x64xf32>
    %449 = arith.mulf %448, %447 : vector<8x64xf32>
    %cst_194 = arith.constant 5.000000e-01 : f32
    %450 = vector.broadcast %cst_194 : f32 to vector<8x64xf32>
    %451 = arith.addf %449, %450 : vector<8x64xf32>
    %452 = vector.extract_strided_slice %446 {offsets = [0, 64], sizes = [8, 64], strides = [1, 1]} : vector<8x256xf32> to vector<8x64xf32>
    %cst_195 = arith.constant 5.000000e-01 : f32
    %453 = vector.broadcast %cst_195 : f32 to vector<8x64xf32>
    %454 = arith.mulf %453, %452 : vector<8x64xf32>
    %cst_196 = arith.constant 5.000000e-01 : f32
    %455 = vector.broadcast %cst_196 : f32 to vector<8x64xf32>
    %456 = arith.addf %454, %455 : vector<8x64xf32>
    %457 = vector.extract_strided_slice %446 {offsets = [0, 128], sizes = [8, 64], strides = [1, 1]} : vector<8x256xf32> to vector<8x64xf32>
    %458 = vector.extract_strided_slice %446 {offsets = [0, 192], sizes = [8, 64], strides = [1, 1]} : vector<8x256xf32> to vector<8x64xf32>
    %cst_197 = arith.constant 5.000000e-01 : f32
    %459 = vector.broadcast %cst_197 : f32 to vector<8x64xf32>
    %460 = arith.mulf %459, %458 : vector<8x64xf32>
    %cst_198 = arith.constant 5.000000e-01 : f32
    %461 = vector.broadcast %cst_198 : f32 to vector<8x64xf32>
    %462 = arith.addf %460, %461 : vector<8x64xf32>
    %463 = arith.mulf %456, %410 : vector<8x64xf32>
    %464 = arith.mulf %451, %457 : vector<8x64xf32>
    %465 = arith.addf %463, %464 : vector<8x64xf32>
    %466 = math.tanh %465 : vector<8x64xf32>
    %467 = arith.mulf %462, %466 : vector<8x64xf32>
    %c48 = arith.constant 48 : index
    %c0_199 = arith.constant 0 : index
    %468 = vector.load %arg19[%c48, %c0_199] : memref<56x64xf32, #tpu.memory_space<vmem>>, vector<8x64xf32>
    tpu.vector_store %arg19[%c48, %c0_199], %467 {strides = array<i32>} : memref<56x64xf32, #tpu.memory_space<vmem>>, vector<8x64xf32>,
    %c0_200 = arith.constant 0 : index
    %c0_201 = arith.constant 0 : index
    %469 = vector.load %arg19[%c0_200, %c0_201] : memref<56x64xf32, #tpu.memory_space<vmem>>, vector<56x64xf32>
    %c0_202 = arith.constant 0 : index
    %c0_203 = arith.constant 0 : index
    %470 = vector.load %arg15[%c0_202, %c0_203] : memref<64x128xf32, #tpu.memory_space<vmem>>, vector<64x128xf32>
    %cst_204 = arith.constant dense<0.000000e+00> : vector<56x128xf32>
    %471 = tpu.matmul %469, %470, %cst_204 {dimension_numbers = #tpu.dot_dimension_numbers<[1], [0], [0], [1], [0, 0, 1, 1], [], []>} : vector<56x64xf32>, vector<64x128xf32>, vector<56x128xf32> -> vector<56x128xf32>
    %c0_205 = arith.constant 0 : index
    %c0_206 = arith.constant 0 : index
    %472 = vector.load %arg16[%c0_205, %c0_206] : memref<1x128xf32, #tpu.memory_space<vmem>>, vector<1x128xf32>
    %473 = vector.broadcast %472 : vector<1x128xf32> to vector<56x128xf32>
    %474 = arith.addf %471, %473 : vector<56x128xf32>
    %c0_207 = arith.constant 0 : index
    %c0_208 = arith.constant 0 : index
    %475 = vector.load %arg17[%c0_207, %c0_208] : memref<56x128xf32, #tpu.memory_space<vmem>>, vector<56x128xf32>
    tpu.vector_store %arg17[%c0_207, %c0_208], %474 {strides = array<i32>} : memref<56x128xf32, #tpu.memory_space<vmem>>, vector<56x128xf32>,
    %cst_209 = arith.constant dense<0xFF800000> : vector<56xf32>
    %476 = vector.multi_reduction <maximumf>, %474, %cst_209 [1] : vector<56x128xf32> to vector<56xf32>
    %477 = vector.shape_cast %476 : vector<56xf32> to vector<56x1xf32>
    %478 = vector.broadcast %477 : vector<56x1xf32> to vector<56x128xf32>
    %479 = arith.subf %474, %478 : vector<56x128xf32>
    %480 = math.exp %479 : vector<56x128xf32>
    %cst_210 = arith.constant dense<0.000000e+00> : vector<56xf32>
    %481 = vector.multi_reduction <add>, %480, %cst_210 [1] : vector<56x128xf32> to vector<56xf32>
    %482 = vector.shape_cast %481 : vector<56xf32> to vector<56x1xf32>
    %483 = math.log %482 : vector<56x1xf32>
    %484 = arith.addf %477, %483 : vector<56x1xf32>
    %485 = vector.broadcast %484 : vector<56x1xf32> to vector<56x128xf32>
    %486 = arith.subf %474, %485 : vector<56x128xf32>
    %c0_211 = arith.constant 0 : index
    %c0_212 = arith.constant 0 : index
    %487 = vector.load %arg8[%c0_211, %c0_212] : memref<56x1xi32, #tpu.memory_space<vmem>>, vector<56x1xi32>
    %488 = tpu.iota {dimensions = array<i32: 1>} : vector<56x128xi32>
    %489 = vector.broadcast %487 : vector<56x1xi32> to vector<56x128xi32>
    %490 = arith.cmpi eq, %488, %489 : vector<56x128xi32>
    %cst_213 = arith.constant 0.000000e+00 : f32
    %491 = vector.broadcast %cst_213 : f32 to vector<56x128xf32>
    %492 = arith.select %490, %486, %491 : vector<56x128xi1>, vector<56x128xf32>
    %cst_214 = arith.constant dense<0.000000e+00> : vector<56xf32>
    %493 = vector.multi_reduction <add>, %492, %cst_214 [1] : vector<56x128xf32> to vector<56xf32>
    %494 = vector.shape_cast %493 : vector<56xf32> to vector<56x1xf32>
    %cst_215 = arith.constant 0.000000e+00 : f32
    %495 = vector.broadcast %cst_215 : f32 to vector<56x1xf32>
    %496 = arith.subf %495, %494 : vector<56x1xf32>
    %cst_216 = arith.constant dense<0.000000e+00> : vector<56xf32>
    %497 = vector.multi_reduction <add>, %486, %cst_216 [1] : vector<56x128xf32> to vector<56xf32>
    %498 = vector.shape_cast %497 : vector<56xf32> to vector<56x1xf32>
    %cst_217 = arith.constant 1.280000e+02 : f32
    %499 = vector.broadcast %cst_217 : f32 to vector<56x1xf32>
    %500 = arith.divf %498, %499 : vector<56x1xf32>
    %cst_218 = arith.constant 0.000000e+00 : f32
    %501 = vector.broadcast %cst_218 : f32 to vector<56x1xf32>
    %502 = arith.subf %501, %500 : vector<56x1xf32>
    %cst_219 = arith.constant 0.899999976 : f32
    %503 = vector.broadcast %cst_219 : f32 to vector<56x1xf32>
    %504 = arith.mulf %503, %496 : vector<56x1xf32>
    %cst_220 = arith.constant 1.000000e-01 : f32
    %505 = vector.broadcast %cst_220 : f32 to vector<56x1xf32>
    %506 = arith.mulf %505, %502 : vector<56x1xf32>
    %507 = arith.addf %504, %506 : vector<56x1xf32>
    %c0_i32 = arith.constant 0 : i32
    %508 = vector.broadcast %c0_i32 : i32 to vector<56x1xi32>
    %509 = arith.cmpi ne, %487, %508 : vector<56x1xi32>
    %510 = arith.extui %509 : vector<56x1xi1> to vector<56x1xi32>
    %511 = arith.sitofp %510 : vector<56x1xi32> to vector<56x1xf32>
    %512 = arith.mulf %507, %511 : vector<56x1xf32>
    %513 = vector.shape_cast %512 : vector<56x1xf32> to vector<1x56x1xf32>
    %cst_221 = arith.constant dense<0.000000e+00> : vector<1xf32>
    %514 = vector.multi_reduction <add>, %513, %cst_221 [1, 2] : vector<1x56x1xf32> to vector<1xf32>
    %515 = vector.shape_cast %514 : vector<1xf32> to vector<1x1x1xf32>
    %516 = vector.extract %515[0, 0, 0] : f32 from vector<1x1x1xf32>
    %517 = vector.shape_cast %511 : vector<56x1xf32> to vector<1x56x1xf32>
    %cst_222 = arith.constant dense<0.000000e+00> : vector<1xf32>
    %518 = vector.multi_reduction <add>, %517, %cst_222 [1, 2] : vector<1x56x1xf32> to vector<1xf32>
    %519 = vector.shape_cast %518 : vector<1xf32> to vector<1x1x1xf32>
    %520 = vector.extract %519[0, 0, 0] : f32 from vector<1x1x1xf32>
    %521 = arith.divf %516, %520 : f32
    %c0_223 = arith.constant 0 : index
    %c0_224 = arith.constant 0 : index
    %522 = memref.load %arg18[%c0_223, %c0_224] : memref<1x1xf32, #tpu.memory_space<smem>>
    memref.store %521, %arg18[%c0_223, %c0_224] : memref<1x1xf32, #tpu.memory_space<smem>>
    return
  }
}

</mosaic_0001>

<llo_original>
// kernel: tpu_custom_call.1
$region0: #{tpu_custom_call.1}
  #allocation0 [shape = 'u32[]', space=smem, size = 0x4, offset = 0x4, fixed_abs, tag = 'smem constant byte address 0x4 - core index']
  #allocation1 [shape = 'u32[144,128]{1,0:T(1,128)}', space=vmem, size = 0x12000, scoped, tag = 'internal scratch']
  #allocation2 [shape = 'f32[56,64]{1,0:T(8,128)}', space=vmem, size = 0x7000, scoped, tag = 'scratch operand']
  %s0 = inlined_call_operand.vmem [shape: f32[512,32], index: 0, kind: input, shape index: {}]
  %s1 = inlined_call_operand.vmem [shape: f32[8,512], index: 1, kind: input, shape index: {}]
  %s2 = inlined_call_operand.vmem [shape: f32[32,64], index: 2, kind: input, shape index: {}]
  %s3 = inlined_call_operand.vmem [shape: f32[1,64], index: 3, kind: input, shape index: {}]
  %s4 = inlined_call_operand.vmem [shape: f32[64,32], index: 4, kind: input, shape index: {}]
  %s5 = inlined_call_operand.vmem [shape: f32[1,32], index: 5, kind: input, shape index: {}]
  %s6 = inlined_call_operand.vmem [shape: f32[128,32], index: 6, kind: input, shape index: {}]
  %s7 = inlined_call_operand.vmem [shape: s32[56,1], index: 7, kind: input, shape index: {}]
  %s8 = inlined_call_operand.vmem [shape: s32[56,1], index: 8, kind: input, shape index: {}]
  %s9 = inlined_call_operand.vmem [shape: f32[32,256], index: 9, kind: input, shape index: {}]
  %s10 = inlined_call_operand.vmem [shape: f32[64,256], index: 10, kind: input, shape index: {}]
  %s11 = inlined_call_operand.vmem [shape: f32[1,256], index: 11, kind: input, shape index: {}]
  %s12 = inlined_call_operand.vmem [shape: f32[64,256], index: 12, kind: input, shape index: {}]
  %s13 = inlined_call_operand.vmem [shape: f32[64,256], index: 13, kind: input, shape index: {}]
  %s14 = inlined_call_operand.vmem [shape: f32[1,256], index: 14, kind: input, shape index: {}]
  %s15 = inlined_call_operand.vmem [shape: f32[64,128], index: 15, kind: input, shape index: {}]
  %s16 = inlined_call_operand.vmem [shape: f32[1,128], index: 16, kind: input, shape index: {}]
  %s17 = inlined_call_operand.hbm [shape: f32[56,128], index: 17, kind: output, shape index: {0}]
  %s18 = inlined_call_operand.hbm [shape: f32[1,1], index: 18, kind: output, shape index: {1}]
  %19 = xla_tuple %s17, %s18
  %s20 = sld [smem:[#allocation0]]
  $region86: #{tpu_custom_call.1} parent=0
    _
  %s22 = ssub.s32 1, %s20
  %s23 = scalar_select 0, %s22, %s20
  $region1: #{tpu_custom_call.1} parent=0
    #allocation3 [shape = 'u8[28672]{0}', space=vmem, size = 0x7000, scoped, tag = 'output window, operand 0, single buffered']
    #allocation4 [shape = 's32[1]{0}', space=sflag, size = 0x4, scoped, tag = 'scoped memory for tpu_custom_call.1']
    #allocation5 [shape = 's32[1]{0}', space=sflag, size = 0x4, scoped, tag = 'scoped memory for tpu_custom_call.1']
    #allocation6 [shape = 'u8[512]{0}', space=smem, size = 0x200, scoped, tag = 'output window, operand 1, single buffered']
    %24 = vsyncpa [#allocation4], 0
    %25 = vsyncpa [#allocation5], 0
    // Predicated region
    $region2: #{tpu_custom_call.1} parent=1 // pred_check
      _
    $region3: #{tpu_custom_call.1} parent=1 // pred_check_branch
      %27 = sbr.rel (0) target = $region5
    $region4: #{tpu_custom_call.1} parent=1 // pred_region
      _
    $region5: #{tpu_custom_call.1} parent=1 // pred_fallthru
      _
    // Predicated region
    $region6: #{tpu_custom_call.1} parent=1 // pred_check
      _
    $region7: #{tpu_custom_call.1} parent=1 // pred_check_branch
      %29 = sbr.rel (0) target = $region9
    $region8: #{tpu_custom_call.1} parent=1 // pred_region
      _
    $region9: #{tpu_custom_call.1} parent=1 // pred_fallthru
      _
    // Predicated region
    $region10: #{tpu_custom_call.1} parent=1 // pred_check
      _
    $region11: #{tpu_custom_call.1} parent=1 // pred_check_branch
      %31 = sbr.rel (0) target = $region13
    $region12: #{tpu_custom_call.1} parent=1 // pred_region
      _
    $region13: #{tpu_custom_call.1} parent=1 // pred_fallthru
      _
    // Predicated region
    $region14: #{tpu_custom_call.1} parent=1 // pred_check
      _
    $region15: #{tpu_custom_call.1} parent=1 // pred_check_branch
      %33 = sbr.rel (0) target = $region17
    $region16: #{tpu_custom_call.1} parent=1 // pred_region
      _
    $region17: #{tpu_custom_call.1} parent=1 // pred_fallthru
      _
    // Predicated region
    $region18: #{tpu_custom_call.1} parent=1 // pred_check
      _
    $region19: #{tpu_custom_call.1} parent=1 // pred_check_branch
      %35 = sbr.rel (0) target = $region21
    $region20: #{tpu_custom_call.1} parent=1 // pred_region
      _
    $region21: #{tpu_custom_call.1} parent=1 // pred_fallthru
      _
    // Predicated region
    $region22: #{tpu_custom_call.1} parent=1 // pred_check
      _
    $region23: #{tpu_custom_call.1} parent=1 // pred_check_branch
      %37 = sbr.rel (0) target = $region25
    $region24: #{tpu_custom_call.1} parent=1 // pred_region
      _
    $region25: #{tpu_custom_call.1} parent=1 // pred_fallthru
      _
    // Predicated region
    $region26: #{tpu_custom_call.1} parent=1 // pred_check
      _
    $region27: #{tpu_custom_call.1} parent=1 // pred_check_branch
      %39 = sbr.rel (0) target = $region29
    $region28: #{tpu_custom_call.1} parent=1 // pred_region
      _
    $region29: #{tpu_custom_call.1} parent=1 // pred_fallthru
      _
    // Predicated region
    $region30: #{tpu_custom_call.1} parent=1 // pred_check
      _
    $region31: #{tpu_custom_call.1} parent=1 // pred_check_branch
      %41 = sbr.rel (0) target = $region33
    $region32: #{tpu_custom_call.1} parent=1 // pred_region
      _
    $region33: #{tpu_custom_call.1} parent=1 // pred_fallthru
      _
    // Predicated region
    $region34: #{tpu_custom_call.1} parent=1 // pred_check
      _
    $region35: #{tpu_custom_call.1} parent=1 // pred_check_branch
      %43 = sbr.rel (0) target = $region37
    $region36: #{tpu_custom_call.1} parent=1 // pred_region
      _
    $region37: #{tpu_custom_call.1} parent=1 // pred_fallthru
      _
    // Predicated region
    $region38: #{tpu_custom_call.1} parent=1 // pred_check
      _
    $region39: #{tpu_custom_call.1} parent=1 // pred_check_branch
      %45 = sbr.rel (0) target = $region41
    $region40: #{tpu_custom_call.1} parent=1 // pred_region
      _
    $region41: #{tpu_custom_call.1} parent=1 // pred_fallthru
      _
    // Predicated region
    $region42: #{tpu_custom_call.1} parent=1 // pred_check
      _
    $region43: #{tpu_custom_call.1} parent=1 // pred_check_branch
      %47 = sbr.rel (0) target = $region45
    $region44: #{tpu_custom_call.1} parent=1 // pred_region
      _
    $region45: #{tpu_custom_call.1} parent=1 // pred_fallthru
      _
    // Predicated region
    $region46: #{tpu_custom_call.1} parent=1 // pred_check
      _
    $region47: #{tpu_custom_call.1} parent=1 // pred_check_branch
      %49 = sbr.rel (0) target = $region49
    $region48: #{tpu_custom_call.1} parent=1 // pred_region
      _
    $region49: #{tpu_custom_call.1} parent=1 // pred_fallthru
      _
    // Predicated region
    $region50: #{tpu_custom_call.1} parent=1 // pred_check
      _
    $region51: #{tpu_custom_call.1} parent=1 // pred_check_branch
      %51 = sbr.rel (0) target = $region53
    $region52: #{tpu_custom_call.1} parent=1 // pred_region
      _
    $region53: #{tpu_custom_call.1} parent=1 // pred_fallthru
      _
    // Predicated region
    $region54: #{tpu_custom_call.1} parent=1 // pred_check
      _
    $region55: #{tpu_custom_call.1} parent=1 // pred_check_branch
      %53 = sbr.rel (0) target = $region57
    $region56: #{tpu_custom_call.1} parent=1 // pred_region
      _
    $region57: #{tpu_custom_call.1} parent=1 // pred_fallthru
      _
    // Predicated region
    $region58: #{tpu_custom_call.1} parent=1 // pred_check
      _
    $region59: #{tpu_custom_call.1} parent=1 // pred_check_branch
      %55 = sbr.rel (0) target = $region61
    $region60: #{tpu_custom_call.1} parent=1 // pred_region
      _
    $region61: #{tpu_custom_call.1} parent=1 // pred_fallthru
      _
    // Predicated region
    $region62: #{tpu_custom_call.1} parent=1 // pred_check
      _
    $region63: #{tpu_custom_call.1} parent=1 // pred_check_branch
      %57 = sbr.rel (0) target = $region65
    $region64: #{tpu_custom_call.1} parent=1 // pred_region
      _
    $region65: #{tpu_custom_call.1} parent=1 // pred_fallthru
      _
    // Predicated region
    $region66: #{tpu_custom_call.1} parent=1 // pred_check
      _
    $region67: #{tpu_custom_call.1} parent=1 // pred_check_branch
      %59 = sbr.rel (0) target = $region69
    $region68: #{tpu_custom_call.1} parent=1 // pred_region
      _
    $region69: #{tpu_custom_call.1} parent=1 // pred_fallthru
      _
    %v60 = vld [vmem:[%s0] sm:$0xff]
    %v61 = vld [vmem:[%s0 + $0x8] sm:$0xff]
    %v62 = vld [vmem:[%s0 + $0x10] sm:$0xff]
    %v63 = vld [vmem:[%s0 + $0x18] sm:$0xff]
    %v64 = vld [vmem:[%s0 + $0x20] sm:$0xff]
    %v65 = vld [vmem:[%s0 + $0x28] sm:$0xff]
    %v66 = vld [vmem:[%s0 + $0x30] sm:$0xff]
    %v67 = vld [vmem:[%s0 + $0x38] sm:$0xff]
    %v68 = vld [vmem:[%s0 + $0x40] sm:$0xff]
    %v69 = vld [vmem:[%s0 + $0x48] sm:$0xff]
    %v70 = vld [vmem:[%s0 + $0x50] sm:$0xff]
    %v71 = vld [vmem:[%s0 + $0x58] sm:$0xff]
    %v72 = vld [vmem:[%s0 + $0x60] sm:$0xff]
    %v73 = vld [vmem:[%s0 + $0x68] sm:$0xff]
    %v74 = vld [vmem:[%s0 + $0x70] sm:$0xff]
    %v75 = vld [vmem:[%s0 + $0x78] sm:$0xff]
    %v76 = vld [vmem:[%s0 + $0x80] sm:$0xff]
    %v77 = vld [vmem:[%s0 + $0x88] sm:$0xff]
    %v78 = vld [vmem:[%s0 + $0x90] sm:$0xff]
    %v79 = vld [vmem:[%s0 + $0x98] sm:$0xff]
    %v80 = vld [vmem:[%s0 + $0xa0] sm:$0xff]
    %v81 = vld [vmem:[%s0 + $0xa8] sm:$0xff]
    %v82 = vld [vmem:[%s0 + $0xb0] sm:$0xff]
    %v83 = vld [vmem:[%s0 + $0xb8] sm:$0xff]
    %v84 = vld [vmem:[%s0 + $0xc0] sm:$0xff]
    %v85 = vld [vmem:[%s0 + $0xc8] sm:$0xff]
    %v86 = vld [vmem:[%s0 + $0xd0] sm:$0xff]
    %v87 = vld [vmem:[%s0 + $0xd8] sm:$0xff]
    %v88 = vld [vmem:[%s0 + $0xe0] sm:$0xff]
    %v89 = vld [vmem:[%s0 + $0xe8] sm:$0xff]
    %v90 = vld [vmem:[%s0 + $0xf0] sm:$0xff]
    %v91 = vld [vmem:[%s0 + $0xf8] sm:$0xff]
    %v92 = vld [vmem:[%s0 + $0x100] sm:$0xff]
    %v93 = vld [vmem:[%s0 + $0x108] sm:$0xff]
    %v94 = vld [vmem:[%s0 + $0x110] sm:$0xff]
    %v95 = vld [vmem:[%s0 + $0x118] sm:$0xff]
    %v96 = vld [vmem:[%s0 + $0x120] sm:$0xff]
    %v97 = vld [vmem:[%s0 + $0x128] sm:$0xff]
    %v98 = vld [vmem:[%s0 + $0x130] sm:$0xff]
    %v99 = vld [vmem:[%s0 + $0x138] sm:$0xff]
    %v100 = vld [vmem:[%s0 + $0x140] sm:$0xff]
    %v101 = vld [vmem:[%s0 + $0x148] sm:$0xff]
    %v102 = vld [vmem:[%s0 + $0x150] sm:$0xff]
    %v103 = vld [vmem:[%s0 + $0x158] sm:$0xff]
    %v104 = vld [vmem:[%s0 + $0x160] sm:$0xff]
    %v105 = vld [vmem:[%s0 + $0x168] sm:$0xff]
    %v106 = vld [vmem:[%s0 + $0x170] sm:$0xff]
    %v107 = vld [vmem:[%s0 + $0x178] sm:$0xff]
    %v108 = vld [vmem:[%s0 + $0x180] sm:$0xff]
    %v109 = vld [vmem:[%s0 + $0x188] sm:$0xff]
    %v110 = vld [vmem:[%s0 + $0x190] sm:$0xff]
    %v111 = vld [vmem:[%s0 + $0x198] sm:$0xff]
    %v112 = vld [vmem:[%s0 + $0x1a0] sm:$0xff]
    %v113 = vld [vmem:[%s0 + $0x1a8] sm:$0xff]
    %v114 = vld [vmem:[%s0 + $0x1b0] sm:$0xff]
    %v115 = vld [vmem:[%s0 + $0x1b8] sm:$0xff]
    %v116 = vld [vmem:[%s0 + $0x1c0] sm:$0xff]
    %v117 = vld [vmem:[%s0 + $0x1c8] sm:$0xff]
    %v118 = vld [vmem:[%s0 + $0x1d0] sm:$0xff]
    %v119 = vld [vmem:[%s0 + $0x1d8] sm:$0xff]
    %v120 = vld [vmem:[%s0 + $0x1e0] sm:$0xff]
    %v121 = vld [vmem:[%s0 + $0x1e8] sm:$0xff]
    %v122 = vld [vmem:[%s0 + $0x1f0] sm:$0xff]
    %v123 = vld [vmem:[%s0 + $0x1f8] sm:$0xff]
    %v124 = vld [vmem:[%s2] sm:$0xff]
    %v125 = vld [vmem:[%s2 + $0x8] sm:$0xff]
    %v126 = vld [vmem:[%s2 + $0x10] sm:$0xff]
    %v127 = vld [vmem:[%s2 + $0x18] sm:$0xff]
    %v128 = vld [vmem:[%s3] sm:$0x1]
    %v130 = vlaneseq
    %v131 = vshrl.u32 %v130, 7
    %v132 = vsub.s32 0, %v131
    %v133 = vrot.slane %v128, %v132
    %vm135 = vcmask 261120
    %v137 = vsel %vm135, %v60, 0
    %v140 = vsel %vm135, %v61, 0
    %v143 = vsel %vm135, %v62, 0
    %v146 = vsel %vm135, %v63, 0
    %v149 = vsel %vm135, %v64, 0
    %v152 = vsel %vm135, %v65, 0
    %v155 = vsel %vm135, %v66, 0
    %v158 = vsel %vm135, %v67, 0
    %v161 = vsel %vm135, %v68, 0
    %v164 = vsel %vm135, %v69, 0
    %v167 = vsel %vm135, %v70, 0
    %v170 = vsel %vm135, %v71, 0
    %v173 = vsel %vm135, %v72, 0
    %v176 = vsel %vm135, %v73, 0
    %v179 = vsel %vm135, %v74, 0
    %v182 = vsel %vm135, %v75, 0
    %v185 = vsel %vm135, %v76, 0
    %v188 = vsel %vm135, %v77, 0
    %v191 = vsel %vm135, %v78, 0
    %v194 = vsel %vm135, %v79, 0
    %v197 = vsel %vm135, %v80, 0
    %v200 = vsel %vm135, %v81, 0
    %v203 = vsel %vm135, %v82, 0
    %v206 = vsel %vm135, %v83, 0
    %v209 = vsel %vm135, %v84, 0
    %v212 = vsel %vm135, %v85, 0
    %v215 = vsel %vm135, %v86, 0
    %v218 = vsel %vm135, %v87, 0
    %v221 = vsel %vm135, %v88, 0
    %v224 = vsel %vm135, %v89, 0
    %v227 = vsel %vm135, %v90, 0
    %v230 = vsel %vm135, %v91, 0
    %v233 = vsel %vm135, %v92, 0
    %v236 = vsel %vm135, %v93, 0
    %v239 = vsel %vm135, %v94, 0
    %v242 = vsel %vm135, %v95, 0
    %v245 = vsel %vm135, %v96, 0
    %v248 = vsel %vm135, %v97, 0
    %v251 = vsel %vm135, %v98, 0
    %v254 = vsel %vm135, %v99, 0
    %v257 = vsel %vm135, %v100, 0
    %v260 = vsel %vm135, %v101, 0
    %v263 = vsel %vm135, %v102, 0
    %v266 = vsel %vm135, %v103, 0
    %v269 = vsel %vm135, %v104, 0
    %v272 = vsel %vm135, %v105, 0
    %v275 = vsel %vm135, %v106, 0
    %v278 = vsel %vm135, %v107, 0
    %v281 = vsel %vm135, %v108, 0
    %v284 = vsel %vm135, %v109, 0
    %v287 = vsel %vm135, %v110, 0
    %v290 = vsel %vm135, %v111, 0
    %v293 = vsel %vm135, %v112, 0
    %v296 = vsel %vm135, %v113, 0
    %v299 = vsel %vm135, %v114, 0
    %v302 = vsel %vm135, %v115, 0
    %v305 = vsel %vm135, %v116, 0
    %v308 = vsel %vm135, %v117, 0
    %v311 = vsel %vm135, %v118, 0
    %v314 = vsel %vm135, %v119, 0
    %v317 = vsel %vm135, %v120, 0
    %v320 = vsel %vm135, %v121, 0
    %v323 = vsel %vm135, %v122, 0
    %v326 = vsel %vm135, %v123, 0
    %328 = vmatprep.subr.mxu0 0.0
    %329 = vmatpush1.msra.mxu0 %v124
    %330 = vmatprep.subr.mxu0 0.0
    %331 = vmatpush1.msra.mxu0 %v125
    %332 = vmatprep.subr.mxu0 0.0
    %333 = vmatpush1.msra.mxu0 %v126
    %334 = vmatprep.subr.mxu0 0.0
    %335 = vmatpush1.msra.mxu0 %v127
    %336 = vmatprep.subr.mxu0 0.0
    %337 = vmatpush1.msra.mxu0 0.0
    %338 = vmatprep.subr.mxu0 0.0
    %339 = vmatpush1.msra.mxu0 0.0
    %340 = vmatprep.subr.mxu0 0.0
    %341 = vmatpush1.msra.mxu0 0.0
    %342 = vmatprep.subr.mxu0 0.0
    %343 = vmatpush1.msra.mxu0 0.0
    %344 = vmatprep.subr.mxu0 0.0
    %345 = vmatpush1.msra.mxu0 0.0
    %346 = vmatprep.subr.mxu0 0.0
    %347 = vmatpush1.msra.mxu0 0.0
    %348 = vmatprep.subr.mxu0 0.0
    %349 = vmatpush1.msra.mxu0 0.0
    %350 = vmatprep.subr.mxu0 0.0
    %351 = vmatpush1.msra.mxu0 0.0
    %352 = vmatprep.subr.mxu0 0.0
    %353 = vmatpush1.msra.mxu0 0.0
    %354 = vmatprep.subr.mxu0 0.0
    %355 = vmatpush1.msra.mxu0 0.0
    %356 = vmatprep.subr.mxu0 0.0
    %357 = vmatpush1.msra.mxu0 0.0
    %358 = vmatprep.subr.mxu0 0.0
    %359 = vmatpush1.msra.mxu0 0.0
    %360 = vmatprep.subr.mxu0 0.0
    %361 = vmatpush1.msra.mxu0 0.0
    %362 = vmatprep.subr.mxu0 0.0
    %363 = vmatpush1.msra.mxu0 0.0
    %364 = vmatprep.subr.mxu0 0.0
    %365 = vmatpush1.msra.mxu0 0.0
    %366 = vmatprep.subr.mxu0 0.0
    %367 = vmatpush1.msra.mxu0 0.0
    %368 = vmatprep.subr.mxu0 0.0
    %369 = vmatpush1.msra.mxu0 0.0
    %370 = vmatprep.subr.mxu0 0.0
    %371 = vmatpush1.msra.mxu0 0.0
    %372 = vmatprep.subr.mxu0 0.0
    %373 = vmatpush1.msra.mxu0 0.0
    %374 = vmatprep.subr.mxu0 0.0
    %375 = vmatpush1.msra.mxu0 0.0
    %376 = vmatprep.subr.mxu0 0.0
    %377 = vmatpush1.msra.mxu0 0.0
    %378 = vmatprep.subr.mxu0 0.0
    %379 = vmatpush1.msra.mxu0 0.0
    %380 = vmatprep.subr.mxu0 0.0
    %381 = vmatpush1.msra.mxu0 0.0
    %382 = vmatprep.subr.mxu0 0.0
    %383 = vmatpush1.msra.mxu0 0.0
    %384 = vmatprep.subr.mxu0 0.0
    %385 = vmatpush1.msra.mxu0 0.0
    %386 = vmatprep.subr.mxu0 0.0
    %387 = vmatpush1.msra.mxu0 0.0
    %388 = vmatprep.subr.mxu0 0.0
    %389 = vmatpush1.msra.mxu0 0.0
    %390 = vmatprep.subr.mxu0 0.0
    %391 = vmatpush1.msra.mxu0 0.0
    %392 = vmatprep.mubr.f32.mxu0 0.0
    %393 = vmatmul.mubr.f32.gmra.mrb[0].mxu0 %v137
    %v394 = vpop.f32.mrb[0].mxu0
    %v395 = vadd.f32 %v133, %v394
    %v396 = vpop.f32.mrb[0].mxu0
    %397 = vmatprep.mubr.f32.mxu0 0.0
    %398 = vmatmul.mubr.f32.gmra.mrb[0].mxu0 %v140
    %v399 = vpop.f32.mrb[0].mxu0
    %v400 = vadd.f32 %v133, %v399
    %v401 = vpop.f32.mrb[0].mxu0
    %402 = vmatprep.mubr.f32.mxu0 0.0
    %403 = vmatmul.mubr.f32.gmra.mrb[0].mxu0 %v143
    %v404 = vpop.f32.mrb[0].mxu0
    %v405 = vadd.f32 %v133, %v404
    %v406 = vpop.f32.mrb[0].mxu0
    %407 = vmatprep.mubr.f32.mxu0 0.0
    %408 = vmatmul.mubr.f32.gmra.mrb[0].mxu0 %v146
    %v409 = vpop.f32.mrb[0].mxu0
    %v410 = vadd.f32 %v133, %v409
    %v411 = vpop.f32.mrb[0].mxu0
    %412 = vmatprep.mubr.f32.mxu0 0.0
    %413 = vmatmul.mubr.f32.gmra.mrb[0].mxu0 %v149
    %v414 = vpop.f32.mrb[0].mxu0
    %v415 = vadd.f32 %v133, %v414
    %v416 = vpop.f32.mrb[0].mxu0
    %417 = vmatprep.mubr.f32.mxu0 0.0
    %418 = vmatmul.mubr.f32.gmra.mrb[0].mxu0 %v152
    %v419 = vpop.f32.mrb[0].mxu0
    %v420 = vadd.f32 %v133, %v419
    %v421 = vpop.f32.mrb[0].mxu0
    %422 = vmatprep.mubr.f32.mxu0 0.0
    %423 = vmatmul.mubr.f32.gmra.mrb[0].mxu0 %v155
    %v424 = vpop.f32.mrb[0].mxu0
    %v425 = vadd.f32 %v133, %v424
    %v426 = vpop.f32.mrb[0].mxu0
    %427 = vmatprep.mubr.f32.mxu0 0.0
    %428 = vmatmul.mubr.f32.gmra.mrb[0].mxu0 %v158
    %v429 = vpop.f32.mrb[0].mxu0
    %v430 = vadd.f32 %v133, %v429
    %v431 = vpop.f32.mrb[0].mxu0
    %432 = vmatprep.mubr.f32.mxu0 0.0
    %433 = vmatmul.mubr.f32.gmra.mrb[0].mxu0 %v161
    %v434 = vpop.f32.mrb[0].mxu0
    %v435 = vadd.f32 %v133, %v434
    %v436 = vpop.f32.mrb[0].mxu0
    %437 = vmatprep.mubr.f32.mxu0 0.0
    %438 = vmatmul.mubr.f32.gmra.mrb[0].mxu0 %v164
    %v439 = vpop.f32.mrb[0].mxu0
    %v440 = vadd.f32 %v133, %v439
    %v441 = vpop.f32.mrb[0].mxu0
    %442 = vmatprep.mubr.f32.mxu0 0.0
    %443 = vmatmul.mubr.f32.gmra.mrb[0].mxu0 %v167
    %v444 = vpop.f32.mrb[0].mxu0
    %v445 = vadd.f32 %v133, %v444
    %v446 = vpop.f32.mrb[0].mxu0
    %447 = vmatprep.mubr.f32.mxu0 0.0
    %448 = vmatmul.mubr.f32.gmra.mrb[0].mxu0 %v170
    %v449 = vpop.f32.mrb[0].mxu0
    %v450 = vadd.f32 %v133, %v449
    %v451 = vpop.f32.mrb[0].mxu0
    %452 = vmatprep.mubr.f32.mxu0 0.0
    %453 = vmatmul.mubr.f32.gmra.mrb[0].mxu0 %v173
    %v454 = vpop.f32.mrb[0].mxu0
    %v455 = vadd.f32 %v133, %v454
    %v456 = vpop.f32.mrb[0].mxu0
    %457 = vmatprep.mubr.f32.mxu0 0.0
    %458 = vmatmul.mubr.f32.gmra.mrb[0].mxu0 %v176
    %v459 = vpop.f32.mrb[0].mxu0
    %v460 = vadd.f32 %v133, %v459
    %v461 = vpop.f32.mrb[0].mxu0
    %462 = vmatprep.mubr.f32.mxu0 0.0
    %463 = vmatmul.mubr.f32.gmra.mrb[0].mxu0 %v179
    %v464 = vpop.f32.mrb[0].mxu0
    %v465 = vadd.f32 %v133, %v464
    %v466 = vpop.f32.mrb[0].mxu0
    %467 = vmatprep.mubr.f32.mxu0 0.0
    %468 = vmatmul.mubr.f32.gmra.mrb[0].mxu0 %v182
    %v469 = vpop.f32.mrb[0].mxu0
    %v470 = vadd.f32 %v133, %v469
    %v471 = vpop.f32.mrb[0].mxu0
    %472 = vmatprep.mubr.f32.mxu0 0.0
    %473 = vmatmul.mubr.f32.gmra.mrb[0].mxu0 %v185
    %v474 = vpop.f32.mrb[0].mxu0
    %v475 = vadd.f32 %v133, %v474
    %v476 = vpop.f32.mrb[0].mxu0
    %477 = vmatprep.mubr.f32.mxu0 0.0
    %478 = vmatmul.mubr.f32.gmra.mrb[0].mxu0 %v188
    %v479 = vpop.f32.mrb[0].mxu0
    %v480 = vadd.f32 %v133, %v479
    %v481 = vpop.f32.mrb[0].mxu0
    %482 = vmatprep.mubr.f32.mxu0 0.0
    %483 = vmatmul.mubr.f32.gmra.mrb[0].mxu0 %v191
    %v484 = vpop.f32.mrb[0].mxu0
    %v485 = vadd.f32 %v133, %v484
    %v486 = vpop.f32.mrb[0].mxu0
    %487 = vmatprep.mubr.f32.mxu0 0.0
    %488 = vmatmul.mubr.f32.gmra.mrb[0].mxu0 %v194
    %v489 = vpop.f32.mrb[0].mxu0
    %v490 = vadd.f32 %v133, %v489
    %v491 = vpop.f32.mrb[0].mxu0
    %492 = vmatprep.mubr.f32.mxu0 0.0
    %493 = vmatmul.mubr.f32.gmra.mrb[0].mxu0 %v197
    %v494 = vpop.f32.mrb[0].mxu0
    %v495 = vadd.f32 %v133, %v494
    %v496 = vpop.f32.mrb[0].mxu0
    %497 = vmatprep.mubr.f32.mxu0 0.0
    %498 = vmatmul.mubr.f32.gmra.mrb[0].mxu0 %v200
    %v499 = vpop.f32.mrb[0].mxu0
    %v500 = vadd.f32 %v133, %v499
    %v501 = vpop.f32.mrb[0].mxu0
    %502 = vmatprep.mubr.f32.mxu0 0.0
    %503 = vmatmul.mubr.f32.gmra.mrb[0].mxu0 %v203
    %v504 = vpop.f32.mrb[0].mxu0
    %v505 = vadd.f32 %v133, %v504
    %v506 = vpop.f32.mrb[0].mxu0
    %507 = vmatprep.mubr.f32.mxu0 0.0
    %508 = vmatmul.mubr.f32.gmra.mrb[0].mxu0 %v206
    %v509 = vpop.f32.mrb[0].mxu0
    %v510 = vadd.f32 %v133, %v509
    %v511 = vpop.f32.mrb[0].mxu0
    %512 = vmatprep.mubr.f32.mxu0 0.0
    %513 = vmatmul.mubr.f32.gmra.mrb[0].mxu0 %v209
    %v514 = vpop.f32.mrb[0].mxu0
    %v515 = vadd.f32 %v133, %v514
    %v516 = vpop.f32.mrb[0].mxu0
    %517 = vmatprep.mubr.f32.mxu0 0.0
    %518 = vmatmul.mubr.f32.gmra.mrb[0].mxu0 %v212
    %v519 = vpop.f32.mrb[0].mxu0
    %v520 = vadd.f32 %v133, %v519
    %v521 = vpop.f32.mrb[0].mxu0
    %522 = vmatprep.mubr.f32.mxu0 0.0
    %523 = vmatmul.mubr.f32.gmra.mrb[0].mxu0 %v215
    %v524 = vpop.f32.mrb[0].mxu0
    %v525 = vadd.f32 %v133, %v524
    %v526 = vpop.f32.mrb[0].mxu0
    %527 = vmatprep.mubr.f32.mxu0 0.0
    %528 = vmatmul.mubr.f32.gmra.mrb[0].mxu0 %v218
    %v529 = vpop.f32.mrb[0].mxu0
    %v530 = vadd.f32 %v133, %v529
    %v531 = vpop.f32.mrb[0].mxu0
    %532 = vmatprep.mubr.f32.mxu0 0.0
    %533 = vmatmul.mubr.f32.gmra.mrb[0].mxu0 %v221
    %v534 = vpop.f32.mrb[0].mxu0
    %v535 = vadd.f32 %v133, %v534
    %v536 = vpop.f32.mrb[0].mxu0
    %537 = vmatprep.mubr.f32.mxu0 0.0
    %538 = vmatmul.mubr.f32.gmra.mrb[0].mxu0 %v224
    %v539 = vpop.f32.mrb[0].mxu0
    %v540 = vadd.f32 %v133, %v539
    %v541 = vpop.f32.mrb[0].mxu0
    %542 = vmatprep.mubr.f32.mxu0 0.0
    %543 = vmatmul.mubr.f32.gmra.mrb[0].mxu0 %v227
    %v544 = vpop.f32.mrb[0].mxu0
    %v545 = vadd.f32 %v133, %v544
    %v546 = vpop.f32.mrb[0].mxu0
    %547 = vmatprep.mubr.f32.mxu0 0.0
    %548 = vmatmul.mubr.f32.gmra.mrb[0].mxu0 %v230
    %v549 = vpop.f32.mrb[0].mxu0
    %v550 = vadd.f32 %v133, %v549
    %v551 = vpop.f32.mrb[0].mxu0
    %552 = vmatprep.mubr.f32.mxu0 0.0
    %553 = vmatmul.mubr.f32.gmra.mrb[0].mxu0 %v233
    %v554 = vpop.f32.mrb[0].mxu0
    %v555 = vadd.f32 %v133, %v554
    %v556 = vpop.f32.mrb[0].mxu0
    %557 = vmatprep.mubr.f32.mxu0 0.0
    %558 = vmatmul.mubr.f32.gmra.mrb[0].mxu0 %v236
    %v559 = vpop.f32.mrb[0].mxu0
    %v560 = vadd.f32 %v133, %v559
    %v561 = vpop.f32.mrb[0].mxu0
    %562 = vmatprep.mubr.f32.mxu0 0.0
    %563 = vmatmul.mubr.f32.gmra.mrb[0].mxu0 %v239
    %v564 = vpop.f32.mrb[0].mxu0
    %v565 = vadd.f32 %v133, %v564
    %v566 = vpop.f32.mrb[0].mxu0
    %567 = vmatprep.mubr.f32.mxu0 0.0
    %568 = vmatmul.mubr.f32.gmra.mrb[0].mxu0 %v242
    %v569 = vpop.f32.mrb[0].mxu0
    %v570 = vadd.f32 %v133, %v569
    %v571 = vpop.f32.mrb[0].mxu0
    %572 = vmatprep.mubr.f32.mxu0 0.0
    %573 = vmatmul.mubr.f32.gmra.mrb[0].mxu0 %v245
    %v574 = vpop.f32.mrb[0].mxu0
    %v575 = vadd.f32 %v133, %v574
    %v576 = vpop.f32.mrb[0].mxu0
    %577 = vmatprep.mubr.f32.mxu0 0.0
    %578 = vmatmul.mubr.f32.gmra.mrb[0].mxu0 %v248
    %v579 = vpop.f32.mrb[0].mxu0
    %v580 = vadd.f32 %v133, %v579
    %v581 = vpop.f32.mrb[0].mxu0
    %582 = vmatprep.mubr.f32.mxu0 0.0
    %583 = vmatmul.mubr.f32.gmra.mrb[0].mxu0 %v251
    %v584 = vpop.f32.mrb[0].mxu0
    %v585 = vadd.f32 %v133, %v584
    %v586 = vpop.f32.mrb[0].mxu0
    %587 = vmatprep.mubr.f32.mxu0 0.0
    %588 = vmatmul.mubr.f32.gmra.mrb[0].mxu0 %v254
    %v589 = vpop.f32.mrb[0].mxu0
    %v590 = vadd.f32 %v133, %v589
    %v591 = vpop.f32.mrb[0].mxu0
    %592 = vmatprep.mubr.f32.mxu0 0.0
    %593 = vmatmul.mubr.f32.gmra.mrb[0].mxu0 %v257
    %v594 = vpop.f32.mrb[0].mxu0
    %v595 = vadd.f32 %v133, %v594
    %v596 = vpop.f32.mrb[0].mxu0
    %597 = vmatprep.mubr.f32.mxu0 0.0
    %598 = vmatmul.mubr.f32.gmra.mrb[0].mxu0 %v260
    %v599 = vpop.f32.mrb[0].mxu0
    %v600 = vadd.f32 %v133, %v599
    %v601 = vpop.f32.mrb[0].mxu0
    %602 = vmatprep.mubr.f32.mxu0 0.0
    %603 = vmatmul.mubr.f32.gmra.mrb[0].mxu0 %v263
    %v604 = vpop.f32.mrb[0].mxu0
    %v605 = vadd.f32 %v133, %v604
    %v606 = vpop.f32.mrb[0].mxu0
    %607 = vmatprep.mubr.f32.mxu0 0.0
    %608 = vmatmul.mubr.f32.gmra.mrb[0].mxu0 %v266
    %v609 = vpop.f32.mrb[0].mxu0
    %v610 = vadd.f32 %v133, %v609
    %v611 = vpop.f32.mrb[0].mxu0
    %612 = vmatprep.mubr.f32.mxu0 0.0
    %613 = vmatmul.mubr.f32.gmra.mrb[0].mxu0 %v269
    %v614 = vpop.f32.mrb[0].mxu0
    %v615 = vadd.f32 %v133, %v614
    %v616 = vpop.f32.mrb[0].mxu0
    %617 = vmatprep.mubr.f32.mxu0 0.0
    %618 = vmatmul.mubr.f32.gmra.mrb[0].mxu0 %v272
    %v619 = vpop.f32.mrb[0].mxu0
    %v620 = vadd.f32 %v133, %v619
    %v621 = vpop.f32.mrb[0].mxu0
    %622 = vmatprep.mubr.f32.mxu0 0.0
    %623 = vmatmul.mubr.f32.gmra.mrb[0].mxu0 %v275
    %v624 = vpop.f32.mrb[0].mxu0
    %v625 = vadd.f32 %v133, %v624
    %v626 = vpop.f32.mrb[0].mxu0
    %627 = vmatprep.mubr.f32.mxu0 0.0
    %628 = vmatmul.mubr.f32.gmra.mrb[0].mxu0 %v278
    %v629 = vpop.f32.mrb[0].mxu0
    %v630 = vadd.f32 %v133, %v629
    %v631 = vpop.f32.mrb[0].mxu0
    %632 = vmatprep.mubr.f32.mxu0 0.0
    %633 = vmatmul.mubr.f32.gmra.mrb[0].mxu0 %v281
    %v634 = vpop.f32.mrb[0].mxu0
    %v635 = vadd.f32 %v133, %v634
    %v636 = vpop.f32.mrb[0].mxu0
    %637 = vmatprep.mubr.f32.mxu0 0.0
    %638 = vmatmul.mubr.f32.gmra.mrb[0].mxu0 %v284
    %v639 = vpop.f32.mrb[0].mxu0
    %v640 = vadd.f32 %v133, %v639
    %v641 = vpop.f32.mrb[0].mxu0
    %642 = vmatprep.mubr.f32.mxu0 0.0
    %643 = vmatmul.mubr.f32.gmra.mrb[0].mxu0 %v287
    %v644 = vpop.f32.mrb[0].mxu0
    %v645 = vadd.f32 %v133, %v644
    %v646 = vpop.f32.mrb[0].mxu0
    %647 = vmatprep.mubr.f32.mxu0 0.0
    %648 = vmatmul.mubr.f32.gmra.mrb[0].mxu0 %v290
    %v649 = vpop.f32.mrb[0].mxu0
    %v650 = vadd.f32 %v133, %v649
    %v651 = vpop.f32.mrb[0].mxu0
    %652 = vmatprep.mubr.f32.mxu0 0.0
    %653 = vmatmul.mubr.f32.gmra.mrb[0].mxu0 %v293
    %v654 = vpop.f32.mrb[0].mxu0
    %v655 = vadd.f32 %v133, %v654
    %v656 = vpop.f32.mrb[0].mxu0
    %657 = vmatprep.mubr.f32.mxu0 0.0
    %658 = vmatmul.mubr.f32.gmra.mrb[0].mxu0 %v296
    %v659 = vpop.f32.mrb[0].mxu0
    %v660 = vadd.f32 %v133, %v659
    %v661 = vpop.f32.mrb[0].mxu0
    %662 = vmatprep.mubr.f32.mxu0 0.0
    %663 = vmatmul.mubr.f32.gmra.mrb[0].mxu0 %v299
    %v664 = vpop.f32.mrb[0].mxu0
    %v665 = vadd.f32 %v133, %v664
    %v666 = vpop.f32.mrb[0].mxu0
    %667 = vmatprep.mubr.f32.mxu0 0.0
    %668 = vmatmul.mubr.f32.gmra.mrb[0].mxu0 %v302
    %v669 = vpop.f32.mrb[0].mxu0
    %v670 = vadd.f32 %v133, %v669
    %v671 = vpop.f32.mrb[0].mxu0
    %672 = vmatprep.mubr.f32.mxu0 0.0
    %673 = vmatmul.mubr.f32.gmra.mrb[0].mxu0 %v305
    %v674 = vpop.f32.mrb[0].mxu0
    %v675 = vadd.f32 %v133, %v674
    %v676 = vpop.f32.mrb[0].mxu0
    %677 = vmatprep.mubr.f32.mxu0 0.0
    %678 = vmatmul.mubr.f32.gmra.mrb[0].mxu0 %v308
    %v679 = vpop.f32.mrb[0].mxu0
    %v680 = vadd.f32 %v133, %v679
    %v681 = vpop.f32.mrb[0].mxu0
    %682 = vmatprep.mubr.f32.mxu0 0.0
    %683 = vmatmul.mubr.f32.gmra.mrb[0].mxu0 %v311
    %v684 = vpop.f32.mrb[0].mxu0
    %v685 = vadd.f32 %v133, %v684
    %v686 = vpop.f32.mrb[0].mxu0
    %687 = vmatprep.mubr.f32.mxu0 0.0
    %688 = vmatmul.mubr.f32.gmra.mrb[0].mxu0 %v314
    %v689 = vpop.f32.mrb[0].mxu0
    %v690 = vadd.f32 %v133, %v689
    %v691 = vpop.f32.mrb[0].mxu0
    %692 = vmatprep.mubr.f32.mxu0 0.0
    %693 = vmatmul.mubr.f32.gmra.mrb[0].mxu0 %v317
    %v694 = vpop.f32.mrb[0].mxu0
    %v695 = vadd.f32 %v133, %v694
    %v696 = vpop.f32.mrb[0].mxu0
    %697 = vmatprep.mubr.f32.mxu0 0.0
    %698 = vmatmul.mubr.f32.gmra.mrb[0].mxu0 %v320
    %v699 = vpop.f32.mrb[0].mxu0
    %v700 = vadd.f32 %v133, %v699
    %v701 = vpop.f32.mrb[0].mxu0
    %702 = vmatprep.mubr.f32.mxu0 0.0
    %703 = vmatmul.mubr.f32.gmra.mrb[0].mxu0 %v323
    %v704 = vpop.f32.mrb[0].mxu0
    %v705 = vadd.f32 %v133, %v704
    %v706 = vpop.f32.mrb[0].mxu0
    %707 = vmatprep.mubr.f32.mxu0 0.0
    %708 = vmatmul.mubr.f32.gmra.mrb[0].mxu0 %v326
    %v709 = vpop.f32.mrb[0].mxu0
    %v710 = vadd.f32 %v133, %v709
    %v711 = vpop.f32.mrb[0].mxu0
    %712 = vdwg.mxu0
    %v713 = vmax.f32 %v395, 0.0
    %v714 = vmax.f32 %v400, 0.0
    %v715 = vmax.f32 %v405, 0.0
    %v716 = vmax.f32 %v410, 0.0
    %v717 = vmax.f32 %v415, 0.0
    %v718 = vmax.f32 %v420, 0.0
    %v719 = vmax.f32 %v425, 0.0
    %v720 = vmax.f32 %v430, 0.0
    %v721 = vmax.f32 %v435, 0.0
    %v722 = vmax.f32 %v440, 0.0
    %v723 = vmax.f32 %v445, 0.0
    %v724 = vmax.f32 %v450, 0.0
    %v725 = vmax.f32 %v455, 0.0
    %v726 = vmax.f32 %v460, 0.0
    %v727 = vmax.f32 %v465, 0.0
    %v728 = vmax.f32 %v470, 0.0
    %v729 = vmax.f32 %v475, 0.0
    %v730 = vmax.f32 %v480, 0.0
    %v731 = vmax.f32 %v485, 0.0
    %v732 = vmax.f32 %v490, 0.0
    %v733 = vmax.f32 %v495, 0.0
    %v734 = vmax.f32 %v500, 0.0
    %v735 = vmax.f32 %v505, 0.0
    %v736 = vmax.f32 %v510, 0.0
    %v737 = vmax.f32 %v515, 0.0
    %v738 = vmax.f32 %v520, 0.0
    %v739 = vmax.f32 %v525, 0.0
    %v740 = vmax.f32 %v530, 0.0
    %v741 = vmax.f32 %v535, 0.0
    %v742 = vmax.f32 %v540, 0.0
    %v743 = vmax.f32 %v545, 0.0
    %v744 = vmax.f32 %v550, 0.0
    %v745 = vmax.f32 %v555, 0.0
    %v746 = vmax.f32 %v560, 0.0
    %v747 = vmax.f32 %v565, 0.0
    %v748 = vmax.f32 %v570, 0.0
    %v749 = vmax.f32 %v575, 0.0
    %v750 = vmax.f32 %v580, 0.0
    %v751 = vmax.f32 %v585, 0.0
    %v752 = vmax.f32 %v590, 0.0
    %v753 = vmax.f32 %v595, 0.0
    %v754 = vmax.f32 %v600, 0.0
    %v755 = vmax.f32 %v605, 0.0
    %v756 = vmax.f32 %v610, 0.0
    %v757 = vmax.f32 %v615, 0.0
    %v758 = vmax.f32 %v620, 0.0
    %v759 = vmax.f32 %v625, 0.0
    %v760 = vmax.f32 %v630, 0.0
    %v761 = vmax.f32 %v635, 0.0
    %v762 = vmax.f32 %v640, 0.0
    %v763 = vmax.f32 %v645, 0.0
    %v764 = vmax.f32 %v650, 0.0
    %v765 = vmax.f32 %v655, 0.0
    %v766 = vmax.f32 %v660, 0.0
    %v767 = vmax.f32 %v665, 0.0
    %v768 = vmax.f32 %v670, 0.0
    %v769 = vmax.f32 %v675, 0.0
    %v770 = vmax.f32 %v680, 0.0
    %v771 = vmax.f32 %v685, 0.0
    %v772 = vmax.f32 %v690, 0.0
    %v773 = vmax.f32 %v695, 0.0
    %v774 = vmax.f32 %v700, 0.0
    %v775 = vmax.f32 %v705, 0.0
    %v776 = vmax.f32 %v710, 0.0
    %v777 = vld [vmem:[%s1] sm:$0xff]
    %v778 = vld [vmem:[%s1 + $0x8] sm:$0xff]
    %v779 = vld [vmem:[%s1 + $0x10] sm:$0xff]
    %v780 = vld [vmem:[%s1 + $0x18] sm:$0xff]
    %781 = vmatprep.subr.mxu0 0.0
    %782 = vmatpush1.msra.mxu0 %v713
    %783 = vmatprep.subr.mxu0 0.0
    %784 = vmatpush1.msra.mxu0 %v714
    %785 = vmatprep.subr.mxu0 0.0
    %786 = vmatpush1.msra.mxu0 %v715
    %787 = vmatprep.subr.mxu0 0.0
    %788 = vmatpush1.msra.mxu0 %v716
    %789 = vmatprep.subr.mxu0 0.0
    %790 = vmatpush1.msra.mxu0 %v717
    %791 = vmatprep.subr.mxu0 0.0
    %792 = vmatpush1.msra.mxu0 %v718
    %793 = vmatprep.subr.mxu0 0.0
    %794 = vmatpush1.msra.mxu0 %v719
    %795 = vmatprep.subr.mxu0 0.0
    %796 = vmatpush1.msra.mxu0 %v720
    %797 = vmatprep.subr.mxu0 0.0
    %798 = vmatpush1.msra.mxu0 %v721
    %799 = vmatprep.subr.mxu0 0.0
    %800 = vmatpush1.msra.mxu0 %v722
    %801 = vmatprep.subr.mxu0 0.0
    %802 = vmatpush1.msra.mxu0 %v723
    %803 = vmatprep.subr.mxu0 0.0
    %804 = vmatpush1.msra.mxu0 %v724
    %805 = vmatprep.subr.mxu0 0.0
    %806 = vmatpush1.msra.mxu0 %v725
    %807 = vmatprep.subr.mxu0 0.0
    %808 = vmatpush1.msra.mxu0 %v726
    %809 = vmatprep.subr.mxu0 0.0
    %810 = vmatpush1.msra.mxu0 %v727
    %811 = vmatprep.subr.mxu0 0.0
    %812 = vmatpush1.msra.mxu0 %v728
    %813 = vmatprep.subr.mxu0 0.0
    %814 = vmatpush1.msra.mxu0 %v729
    %815 = vmatprep.subr.mxu0 0.0
    %816 = vmatpush1.msra.mxu0 %v730
    %817 = vmatprep.subr.mxu0 0.0
    %818 = vmatpush1.msra.mxu0 %v731
    %819 = vmatprep.subr.mxu0 0.0
    %820 = vmatpush1.msra.mxu0 %v732
    %821 = vmatprep.subr.mxu0 0.0
    %822 = vmatpush1.msra.mxu0 %v733
    %823 = vmatprep.subr.mxu0 0.0
    %824 = vmatpush1.msra.mxu0 %v734
    %825 = vmatprep.subr.mxu0 0.0
    %826 = vmatpush1.msra.mxu0 %v735
    %827 = vmatprep.subr.mxu0 0.0
    %828 = vmatpush1.msra.mxu0 %v736
    %829 = vmatprep.subr.mxu0 0.0
    %830 = vmatpush1.msra.mxu0 %v737
    %831 = vmatprep.subr.mxu0 0.0
    %832 = vmatpush1.msra.mxu0 %v738
    %833 = vmatprep.subr.mxu0 0.0
    %834 = vmatpush1.msra.mxu0 %v739
    %835 = vmatprep.subr.mxu0 0.0
    %836 = vmatpush1.msra.mxu0 %v740
    %837 = vmatprep.subr.mxu0 0.0
    %838 = vmatpush1.msra.mxu0 %v741
    %839 = vmatprep.subr.mxu0 0.0
    %840 = vmatpush1.msra.mxu0 %v742
    %841 = vmatprep.subr.mxu0 0.0
    %842 = vmatpush1.msra.mxu0 %v743
    %843 = vmatprep.subr.mxu0 0.0
    %844 = vmatpush1.msra.mxu0 %v744
    %845 = vmatprep.mubr.f32.mxu0 %v778
    %846 = vmatmul.mubr.f32.gmra.mrb[0].mxu0 %v777
    %v847 = vpop.f32.mrb[0].mxu0
    %v848 = vadd.f32 0.0, %v847
    %v849 = vpop.f32.mrb[0].mxu0
    %850 = vdwg.mxu0
    %851 = vmatprep.subr.mxu0 0.0
    %852 = vmatpush1.msra.mxu0 %v745
    %853 = vmatprep.subr.mxu0 0.0
    %854 = vmatpush1.msra.mxu0 %v746
    %855 = vmatprep.subr.mxu0 0.0
    %856 = vmatpush1.msra.mxu0 %v747
    %857 = vmatprep.subr.mxu0 0.0
    %858 = vmatpush1.msra.mxu0 %v748
    %859 = vmatprep.subr.mxu0 0.0
    %860 = vmatpush1.msra.mxu0 %v749
    %861 = vmatprep.subr.mxu0 0.0
    %862 = vmatpush1.msra.mxu0 %v750
    %863 = vmatprep.subr.mxu0 0.0
    %864 = vmatpush1.msra.mxu0 %v751
    %865 = vmatprep.subr.mxu0 0.0
    %866 = vmatpush1.msra.mxu0 %v752
    %867 = vmatprep.subr.mxu0 0.0
    %868 = vmatpush1.msra.mxu0 %v753
    %869 = vmatprep.subr.mxu0 0.0
    %870 = vmatpush1.msra.mxu0 %v754
    %871 = vmatprep.subr.mxu0 0.0
    %872 = vmatpush1.msra.mxu0 %v755
    %873 = vmatprep.subr.mxu0 0.0
    %874 = vmatpush1.msra.mxu0 %v756
    %875 = vmatprep.subr.mxu0 0.0
    %876 = vmatpush1.msra.mxu0 %v757
    %877 = vmatprep.subr.mxu0 0.0
    %878 = vmatpush1.msra.mxu0 %v758
    %879 = vmatprep.subr.mxu0 0.0
    %880 = vmatpush1.msra.mxu0 %v759
    %881 = vmatprep.subr.mxu0 0.0
    %882 = vmatpush1.msra.mxu0 %v760
    %883 = vmatprep.subr.mxu0 0.0
    %884 = vmatpush1.msra.mxu0 %v761
    %885 = vmatprep.subr.mxu0 0.0
    %886 = vmatpush1.msra.mxu0 %v762
    %887 = vmatprep.subr.mxu0 0.0
    %888 = vmatpush1.msra.mxu0 %v763
    %889 = vmatprep.subr.mxu0 0.0
    %890 = vmatpush1.msra.mxu0 %v764
    %891 = vmatprep.subr.mxu0 0.0
    %892 = vmatpush1.msra.mxu0 %v765
    %893 = vmatprep.subr.mxu0 0.0
    %894 = vmatpush1.msra.mxu0 %v766
    %895 = vmatprep.subr.mxu0 0.0
    %896 = vmatpush1.msra.mxu0 %v767
    %897 = vmatprep.subr.mxu0 0.0
    %898 = vmatpush1.msra.mxu0 %v768
    %899 = vmatprep.subr.mxu0 0.0
    %900 = vmatpush1.msra.mxu0 %v769
    %901 = vmatprep.subr.mxu0 0.0
    %902 = vmatpush1.msra.mxu0 %v770
    %903 = vmatprep.subr.mxu0 0.0
    %904 = vmatpush1.msra.mxu0 %v771
    %905 = vmatprep.subr.mxu0 0.0
    %906 = vmatpush1.msra.mxu0 %v772
    %907 = vmatprep.subr.mxu0 0.0
    %908 = vmatpush1.msra.mxu0 %v773
    %909 = vmatprep.subr.mxu0 0.0
    %910 = vmatpush1.msra.mxu0 %v774
    %911 = vmatprep.subr.mxu0 0.0
    %912 = vmatpush1.msra.mxu0 %v775
    %913 = vmatprep.subr.mxu0 0.0
    %914 = vmatpush1.msra.mxu0 %v776
    %915 = vmatprep.mubr.f32.mxu0 %v780
    %916 = vmatmul.mubr.f32.gmra.mrb[0].mxu0 %v779
    %v917 = vpop.f32.mrb[0].mxu0
    %v918 = vadd.f32 %v848, %v917
    %v919 = vpop.f32.mrb[0].mxu0
    %920 = vdwg.mxu0
    %v921 = vld [vmem:[%s4] sm:$0xff]
    %v922 = vld [vmem:[%s4 + $0x8] sm:$0xff]
    %v923 = vld [vmem:[%s4 + $0x10] sm:$0xff]
    %v924 = vld [vmem:[%s4 + $0x18] sm:$0xff]
    %v925 = vld [vmem:[%s4 + $0x20] sm:$0xff]
    %v926 = vld [vmem:[%s4 + $0x28] sm:$0xff]
    %v927 = vld [vmem:[%s4 + $0x30] sm:$0xff]
    %v928 = vld [vmem:[%s4 + $0x38] sm:$0xff]
    %v929 = vld [vmem:[%s5] sm:$0x1]
    %v931 = vlaneseq
    %v932 = vshrl.u32 %v931, 7
    %v933 = vsub.s32 0, %v932
    %v934 = vrot.slane %v929, %v933
    %vm936 = vcmask 523264
    %v938 = vsel %vm936, %v918, 0
    %940 = vmatprep.subr.mxu0 0.0
    %941 = vmatpush1.msra.mxu0 %v921
    %942 = vmatprep.subr.mxu0 0.0
    %943 = vmatpush1.msra.mxu0 %v922
    %944 = vmatprep.subr.mxu0 0.0
    %945 = vmatpush1.msra.mxu0 %v923
    %946 = vmatprep.subr.mxu0 0.0
    %947 = vmatpush1.msra.mxu0 %v924
    %948 = vmatprep.subr.mxu0 0.0
    %949 = vmatpush1.msra.mxu0 %v925
    %950 = vmatprep.subr.mxu0 0.0
    %951 = vmatpush1.msra.mxu0 %v926
    %952 = vmatprep.subr.mxu0 0.0
    %953 = vmatpush1.msra.mxu0 %v927
    %954 = vmatprep.subr.mxu0 0.0
    %955 = vmatpush1.msra.mxu0 %v928
    %956 = vmatprep.subr.mxu0 0.0
    %957 = vmatpush1.msra.mxu0 0.0
    %958 = vmatprep.subr.mxu0 0.0
    %959 = vmatpush1.msra.mxu0 0.0
    %960 = vmatprep.subr.mxu0 0.0
    %961 = vmatpush1.msra.mxu0 0.0
    %962 = vmatprep.subr.mxu0 0.0
    %963 = vmatpush1.msra.mxu0 0.0
    %964 = vmatprep.subr.mxu0 0.0
    %965 = vmatpush1.msra.mxu0 0.0
    %966 = vmatprep.subr.mxu0 0.0
    %967 = vmatpush1.msra.mxu0 0.0
    %968 = vmatprep.subr.mxu0 0.0
    %969 = vmatpush1.msra.mxu0 0.0
    %970 = vmatprep.subr.mxu0 0.0
    %971 = vmatpush1.msra.mxu0 0.0
    %972 = vmatprep.subr.mxu0 0.0
    %973 = vmatpush1.msra.mxu0 0.0
    %974 = vmatprep.subr.mxu0 0.0
    %975 = vmatpush1.msra.mxu0 0.0
    %976 = vmatprep.subr.mxu0 0.0
    %977 = vmatpush1.msra.mxu0 0.0
    %978 = vmatprep.subr.mxu0 0.0
    %979 = vmatpush1.msra.mxu0 0.0
    %980 = vmatprep.subr.mxu0 0.0
    %981 = vmatpush1.msra.mxu0 0.0
    %982 = vmatprep.subr.mxu0 0.0
    %983 = vmatpush1.msra.mxu0 0.0
    %984 = vmatprep.subr.mxu0 0.0
    %985 = vmatpush1.msra.mxu0 0.0
    %986 = vmatprep.subr.mxu0 0.0
    %987 = vmatpush1.msra.mxu0 0.0
    %988 = vmatprep.subr.mxu0 0.0
    %989 = vmatpush1.msra.mxu0 0.0
    %990 = vmatprep.subr.mxu0 0.0
    %991 = vmatpush1.msra.mxu0 0.0
    %992 = vmatprep.subr.mxu0 0.0
    %993 = vmatpush1.msra.mxu0 0.0
    %994 = vmatprep.subr.mxu0 0.0
    %995 = vmatpush1.msra.mxu0 0.0
    %996 = vmatprep.subr.mxu0 0.0
    %997 = vmatpush1.msra.mxu0 0.0
    %998 = vmatprep.subr.mxu0 0.0
    %999 = vmatpush1.msra.mxu0 0.0
    %1000 = vmatprep.subr.mxu0 0.0
    %1001 = vmatpush1.msra.mxu0 0.0
    %1002 = vmatprep.subr.mxu0 0.0
    %1003 = vmatpush1.msra.mxu0 0.0
    %1004 = vmatprep.mubr.f32.mxu0 0.0
    %1005 = vmatmul.mubr.f32.gmra.mrb[0].mxu0 %v938
    %v1006 = vpop.f32.mrb[0].mxu0
    %v1007 = vadd.f32 %v934, %v1006
    %v1008 = vpop.f32.mrb[0].mxu0
    %1009 = vdwg.mxu0
    %v1010 = vld [vmem:[%s7] sm:$0xff]
    %v1011 = vld [vmem:[%s7 + $0x8] sm:$0xff]
    %v1012 = vld [vmem:[%s7 + $0x10] sm:$0xff]
    %v1013 = vld [vmem:[%s7 + $0x18] sm:$0xff]
    %v1014 = vld [vmem:[%s7 + $0x20] sm:$0xff]
    %v1015 = vld [vmem:[%s7 + $0x28] sm:$0xff]
    %v1016 = vld [vmem:[%s7 + $0x30] sm:$0xff]
    %v1017 = vlaneseq
    %v1018 = vand.u32 %v1017, 127
    %1019 = vset.pattern.permute.xlu0 0
    %1020 = vperm.xlu0 %1019, %v1010
    %v1021 = vpop.permute.xlu0 %1020
    %1022 = vset.pattern.permute.xlu0 0
    %1023 = vperm.xlu0 %1022, %v1011
    %v1024 = vpop.permute.xlu0 %1023
    %1025 = vset.pattern.permute.xlu0 0
    %1026 = vperm.xlu0 %1025, %v1012
    %v1027 = vpop.permute.xlu0 %1026
    %1028 = vset.pattern.permute.xlu0 0
    %1029 = vperm.xlu0 %1028, %v1013
    %v1030 = vpop.permute.xlu0 %1029
    %1031 = vset.pattern.permute.xlu0 0
    %1032 = vperm.xlu0 %1031, %v1014
    %v1033 = vpop.permute.xlu0 %1032
    %1034 = vset.pattern.permute.xlu0 0
    %1035 = vperm.xlu0 %1034, %v1015
    %v1036 = vpop.permute.xlu0 %1035
    %1037 = vset.pattern.permute.xlu0 0
    %1038 = vperm.xlu0 %1037, %v1016
    %v1039 = vpop.permute.xlu0 %1038
    %vm1040 = vcmp.eq.s32.totalorder %v1018, %v1021
    %vm1041 = vcmp.eq.s32.totalorder %v1018, %v1024
    %vm1042 = vcmp.eq.s32.totalorder %v1018, %v1027
    %vm1043 = vcmp.eq.s32.totalorder %v1018, %v1030
    %vm1044 = vcmp.eq.s32.totalorder %v1018, %v1033
    %vm1045 = vcmp.eq.s32.totalorder %v1018, %v1036
    %vm1046 = vcmp.eq.s32.totalorder %v1018, %v1039
    %v1047 = vsel %vm1040, 1, 0
    %v1048 = vsel %vm1041, 1, 0
    %v1049 = vsel %vm1042, 1, 0
    %v1050 = vsel %vm1043, 1, 0
    %v1051 = vsel %vm1044, 1, 0
    %v1052 = vsel %vm1045, 1, 0
    %v1053 = vsel %vm1046, 1, 0
    %v1054 = vcvt.s32.f32 %v1047
    %v1055 = vcvt.s32.f32 %v1048
    %v1056 = vcvt.s32.f32 %v1049
    %v1057 = vcvt.s32.f32 %v1050
    %v1058 = vcvt.s32.f32 %v1051
    %v1059 = vcvt.s32.f32 %v1052
    %v1060 = vcvt.s32.f32 %v1053
    %v1061 = vld [vmem:[%s6] sm:$0xff]
    %v1062 = vld [vmem:[%s6 + $0x8] sm:$0xff]
    %v1063 = vld [vmem:[%s6 + $0x10] sm:$0xff]
    %v1064 = vld [vmem:[%s6 + $0x18] sm:$0xff]
    %v1065 = vld [vmem:[%s6 + $0x20] sm:$0xff]
    %v1066 = vld [vmem:[%s6 + $0x28] sm:$0xff]
    %v1067 = vld [vmem:[%s6 + $0x30] sm:$0xff]
    %v1068 = vld [vmem:[%s6 + $0x38] sm:$0xff]
    %v1069 = vld [vmem:[%s6 + $0x40] sm:$0xff]
    %v1070 = vld [vmem:[%s6 + $0x48] sm:$0xff]
    %v1071 = vld [vmem:[%s6 + $0x50] sm:$0xff]
    %v1072 = vld [vmem:[%s6 + $0x58] sm:$0xff]
    %v1073 = vld [vmem:[%s6 + $0x60] sm:$0xff]
    %v1074 = vld [vmem:[%s6 + $0x68] sm:$0xff]
    %v1075 = vld [vmem:[%s6 + $0x70] sm:$0xff]
    %v1076 = vld [vmem:[%s6 + $0x78] sm:$0xff]
    %1077 = vmatprep.subr.mxu0 0.0
    %1078 = vmatpush1.msra.mxu0 %v1061
    %1079 = vmatprep.subr.mxu0 0.0
    %1080 = vmatpush1.msra.mxu0 %v1062
    %1081 = vmatprep.subr.mxu0 0.0
    %1082 = vmatpush1.msra.mxu0 %v1063
    %1083 = vmatprep.subr.mxu0 0.0
    %1084 = vmatpush1.msra.mxu0 %v1064
    %1085 = vmatprep.subr.mxu0 0.0
    %1086 = vmatpush1.msra.mxu0 %v1065
    %1087 = vmatprep.subr.mxu0 0.0
    %1088 = vmatpush1.msra.mxu0 %v1066
    %1089 = vmatprep.subr.mxu0 0.0
    %1090 = vmatpush1.msra.mxu0 %v1067
    %1091 = vmatprep.subr.mxu0 0.0
    %1092 = vmatpush1.msra.mxu0 %v1068
    %1093 = vmatprep.subr.mxu0 0.0
    %1094 = vmatpush1.msra.mxu0 %v1069
    %1095 = vmatprep.subr.mxu0 0.0
    %1096 = vmatpush1.msra.mxu0 %v1070
    %1097 = vmatprep.subr.mxu0 0.0
    %1098 = vmatpush1.msra.mxu0 %v1071
    %1099 = vmatprep.subr.mxu0 0.0
    %1100 = vmatpush1.msra.mxu0 %v1072
    %1101 = vmatprep.subr.mxu0 0.0
    %1102 = vmatpush1.msra.mxu0 %v1073
    %1103 = vmatprep.subr.mxu0 0.0
    %1104 = vmatpush1.msra.mxu0 %v1074
    %1105 = vmatprep.subr.mxu0 0.0
    %1106 = vmatpush1.msra.mxu0 %v1075
    %1107 = vmatprep.subr.mxu0 0.0
    %1108 = vmatpush1.msra.mxu0 %v1076
    %1109 = vmatprep.subr.mxu0 0.0
    %1110 = vmatpush1.msra.mxu0 0.0
    %1111 = vmatprep.subr.mxu0 0.0
    %1112 = vmatpush1.msra.mxu0 0.0
    %1113 = vmatprep.subr.mxu0 0.0
    %1114 = vmatpush1.msra.mxu0 0.0
    %1115 = vmatprep.subr.mxu0 0.0
    %1116 = vmatpush1.msra.mxu0 0.0
    %1117 = vmatprep.subr.mxu0 0.0
    %1118 = vmatpush1.msra.mxu0 0.0
    %1119 = vmatprep.subr.mxu0 0.0
    %1120 = vmatpush1.msra.mxu0 0.0
    %1121 = vmatprep.subr.mxu0 0.0
    %1122 = vmatpush1.msra.mxu0 0.0
    %1123 = vmatprep.subr.mxu0 0.0
    %1124 = vmatpush1.msra.mxu0 0.0
    %1125 = vmatprep.subr.mxu0 0.0
    %1126 = vmatpush1.msra.mxu0 0.0
    %1127 = vmatprep.subr.mxu0 0.0
    %1128 = vmatpush1.msra.mxu0 0.0
    %1129 = vmatprep.subr.mxu0 0.0
    %1130 = vmatpush1.msra.mxu0 0.0
    %1131 = vmatprep.subr.mxu0 0.0
    %1132 = vmatpush1.msra.mxu0 0.0
    %1133 = vmatprep.subr.mxu0 0.0
    %1134 = vmatpush1.msra.mxu0 0.0
    %1135 = vmatprep.subr.mxu0 0.0
    %1136 = vmatpush1.msra.mxu0 0.0
    %1137 = vmatprep.subr.mxu0 0.0
    %1138 = vmatpush1.msra.mxu0 0.0
    %1139 = vmatprep.subr.mxu0 0.0
    %1140 = vmatpush1.msra.mxu0 0.0
    %1141 = vmatprep.mubr.f32.mxu0 0.0
    %1142 = vmatmul.mubr.f32.gmra.mrb[0].mxu0 %v1054
    %v1143 = vpop.f32.mrb[0].mxu0
    %v1144 = vadd.f32 0.0, %v1143
    %v1145 = vpop.f32.mrb[0].mxu0
    %1146 = vmatprep.mubr.f32.mxu0 0.0
    %1147 = vmatmul.mubr.f32.gmra.mrb[0].mxu0 %v1055
    %v1148 = vpop.f32.mrb[0].mxu0
    %v1149 = vadd.f32 0.0, %v1148
    %v1150 = vpop.f32.mrb[0].mxu0
    %1151 = vmatprep.mubr.f32.mxu0 0.0
    %1152 = vmatmul.mubr.f32.gmra.mrb[0].mxu0 %v1056
    %v1153 = vpop.f32.mrb[0].mxu0
    %v1154 = vadd.f32 0.0, %v1153
    %v1155 = vpop.f32.mrb[0].mxu0
    %1156 = vmatprep.mubr.f32.mxu0 0.0
    %1157 = vmatmul.mubr.f32.gmra.mrb[0].mxu0 %v1057
    %v1158 = vpop.f32.mrb[0].mxu0
    %v1159 = vadd.f32 0.0, %v1158
    %v1160 = vpop.f32.mrb[0].mxu0
    %1161 = vmatprep.mubr.f32.mxu0 0.0
    %1162 = vmatmul.mubr.f32.gmra.mrb[0].mxu0 %v1058
    %v1163 = vpop.f32.mrb[0].mxu0
    %v1164 = vadd.f32 0.0, %v1163
    %v1165 = vpop.f32.mrb[0].mxu0
    %1166 = vmatprep.mubr.f32.mxu0 0.0
    %1167 = vmatmul.mubr.f32.gmra.mrb[0].mxu0 %v1059
    %v1168 = vpop.f32.mrb[0].mxu0
    %v1169 = vadd.f32 0.0, %v1168
    %v1170 = vpop.f32.mrb[0].mxu0
    %1171 = vmatprep.mubr.f32.mxu0 0.0
    %1172 = vmatmul.mubr.f32.gmra.mrb[0].mxu0 %v1060
    %v1173 = vpop.f32.mrb[0].mxu0
    %v1174 = vadd.f32 0.0, %v1173
    %v1175 = vpop.f32.mrb[0].mxu0
    %1176 = vdwg.mxu0
    %v1177 = vld [vmem:[%s9] sm:$0xff]
    %v1178 = vld [vmem:[%s9 + $0x8] sm:$0xff]
    %v1179 = vld [vmem:[%s9 + $0x10] sm:$0xff]
    %v1180 = vld [vmem:[%s9 + $0x18] sm:$0xff]
    %v1181 = vld [vmem:[%s9 + $0x20] sm:$0xff]
    %v1182 = vld [vmem:[%s9 + $0x28] sm:$0xff]
    %v1183 = vld [vmem:[%s9 + $0x30] sm:$0xff]
    %v1184 = vld [vmem:[%s9 + $0x38] sm:$0xff]
    %v1185 = vld [vmem:[%s11] sm:$0x3]
    %v1187 = vlaneseq
    %v1188 = vshrl.u32 %v1187, 7
    %v1189 = vsub.s32 0, %v1188
    %v1190 = vrot.slane %v1185, %v1189
    %v1191 = vlaneseq
    %v1192 = vshrl.u32 %v1191, 7
    %v1193 = vsub.s32 1, %v1192
    %v1194 = vrot.slane %v1185, %v1193
    %v1198 = vsel %vm135, %v1007, 0
    %v1201 = vsel %vm135, %v1144, 0
    %v1204 = vsel %vm135, %v1149, 0
    %v1207 = vsel %vm135, %v1154, 0
    %v1210 = vsel %vm135, %v1159, 0
    %v1213 = vsel %vm135, %v1164, 0
    %v1216 = vsel %vm135, %v1169, 0
    %v1219 = vsel %vm135, %v1174, 0
    %1221 = vmatprep.subr.mxu0 %v1178
    %1222 = vmatpush1.msra.mxu0 %v1177
    %1223 = vmatprep.subr.mxu0 %v1180
    %1224 = vmatpush1.msra.mxu0 %v1179
    %1225 = vmatprep.subr.mxu0 %v1182
    %1226 = vmatpush1.msra.mxu0 %v1181
    %1227 = vmatprep.subr.mxu0 %v1184
    %1228 = vmatpush1.msra.mxu0 %v1183
    %1229 = vmatprep.subr.mxu0 0.0
    %1230 = vmatpush1.msra.mxu0 0.0
    %1231 = vmatprep.subr.mxu0 0.0
    %1232 = vmatpush1.msra.mxu0 0.0
    %1233 = vmatprep.subr.mxu0 0.0
    %1234 = vmatpush1.msra.mxu0 0.0
    %1235 = vmatprep.subr.mxu0 0.0
    %1236 = vmatpush1.msra.mxu0 0.0
    %1237 = vmatprep.subr.mxu0 0.0
    %1238 = vmatpush1.msra.mxu0 0.0
    %1239 = vmatprep.subr.mxu0 0.0
    %1240 = vmatpush1.msra.mxu0 0.0
    %1241 = vmatprep.subr.mxu0 0.0
    %1242 = vmatpush1.msra.mxu0 0.0
    %1243 = vmatprep.subr.mxu0 0.0
    %1244 = vmatpush1.msra.mxu0 0.0
    %1245 = vmatprep.subr.mxu0 0.0
    %1246 = vmatpush1.msra.mxu0 0.0
    %1247 = vmatprep.subr.mxu0 0.0
    %1248 = vmatpush1.msra.mxu0 0.0
    %1249 = vmatprep.subr.mxu0 0.0
    %1250 = vmatpush1.msra.mxu0 0.0
    %1251 = vmatprep.subr.mxu0 0.0
    %1252 = vmatpush1.msra.mxu0 0.0
    %1253 = vmatprep.subr.mxu0 0.0
    %1254 = vmatpush1.msra.mxu0 0.0
    %1255 = vmatprep.subr.mxu0 0.0
    %1256 = vmatpush1.msra.mxu0 0.0
    %1257 = vmatprep.subr.mxu0 0.0
    %1258 = vmatpush1.msra.mxu0 0.0
    %1259 = vmatprep.subr.mxu0 0.0
    %1260 = vmatpush1.msra.mxu0 0.0
    %1261 = vmatprep.subr.mxu0 0.0
    %1262 = vmatpush1.msra.mxu0 0.0
    %1263 = vmatprep.subr.mxu0 0.0
    %1264 = vmatpush1.msra.mxu0 0.0
    %1265 = vmatprep.subr.mxu0 0.0
    %1266 = vmatpush1.msra.mxu0 0.0
    %1267 = vmatprep.subr.mxu0 0.0
    %1268 = vmatpush1.msra.mxu0 0.0
    %1269 = vmatprep.subr.mxu0 0.0
    %1270 = vmatpush1.msra.mxu0 0.0
    %1271 = vmatprep.subr.mxu0 0.0
    %1272 = vmatpush1.msra.mxu0 0.0
    %1273 = vmatprep.subr.mxu0 0.0
    %1274 = vmatpush1.msra.mxu0 0.0
    %1275 = vmatprep.subr.mxu0 0.0
    %1276 = vmatpush1.msra.mxu0 0.0
    %1277 = vmatprep.subr.mxu0 0.0
    %1278 = vmatpush1.msra.mxu0 0.0
    %1279 = vmatprep.subr.mxu0 0.0
    %1280 = vmatpush1.msra.mxu0 0.0
    %1281 = vmatprep.subr.mxu0 0.0
    %1282 = vmatpush1.msra.mxu0 0.0
    %1283 = vmatprep.subr.mxu0 0.0
    %1284 = vmatpush1.msra.mxu0 0.0
    %1285 = vmatprep.mubr.f32.mxu0 0.0
    %1286 = vmatmul.mubr.f32.gmra.mrb[0].mxu0 %v1198
    %v1287 = vpop.f32.mrb[0].mxu0
    %v1288 = vadd.f32 %v1190, %v1287
    %v1289 = vpop.f32.mrb[0].mxu0
    %v1290 = vadd.f32 %v1194, %v1289
    %1291 = vmatprep.mubr.f32.mxu0 0.0
    %1292 = vmatmul.mubr.f32.gmra.mrb[0].mxu0 %v1201
    %v1293 = vpop.f32.mrb[0].mxu0
    %v1294 = vadd.f32 %v1190, %v1293
    %v1295 = vpop.f32.mrb[0].mxu0
    %v1296 = vadd.f32 %v1194, %v1295
    %1297 = vmatprep.mubr.f32.mxu0 0.0
    %1298 = vmatmul.mubr.f32.gmra.mrb[0].mxu0 %v1204
    %v1299 = vpop.f32.mrb[0].mxu0
    %v1300 = vadd.f32 %v1190, %v1299
    %v1301 = vpop.f32.mrb[0].mxu0
    %v1302 = vadd.f32 %v1194, %v1301
    %1303 = vmatprep.mubr.f32.mxu0 0.0
    %1304 = vmatmul.mubr.f32.gmra.mrb[0].mxu0 %v1207
    %v1305 = vpop.f32.mrb[0].mxu0
    %v1306 = vadd.f32 %v1190, %v1305
    %v1307 = vpop.f32.mrb[0].mxu0
    %v1308 = vadd.f32 %v1194, %v1307
    %1309 = vmatprep.mubr.f32.mxu0 0.0
    %1310 = vmatmul.mubr.f32.gmra.mrb[0].mxu0 %v1210
    %v1311 = vpop.f32.mrb[0].mxu0
    %v1312 = vadd.f32 %v1190, %v1311
    %v1313 = vpop.f32.mrb[0].mxu0
    %v1314 = vadd.f32 %v1194, %v1313
    %1315 = vmatprep.mubr.f32.mxu0 0.0
    %1316 = vmatmul.mubr.f32.gmra.mrb[0].mxu0 %v1213
    %v1317 = vpop.f32.mrb[0].mxu0
    %v1318 = vadd.f32 %v1190, %v1317
    %v1319 = vpop.f32.mrb[0].mxu0
    %v1320 = vadd.f32 %v1194, %v1319
    %1321 = vmatprep.mubr.f32.mxu0 0.0
    %1322 = vmatmul.mubr.f32.gmra.mrb[0].mxu0 %v1216
    %v1323 = vpop.f32.mrb[0].mxu0
    %v1324 = vadd.f32 %v1190, %v1323
    %v1325 = vpop.f32.mrb[0].mxu0
    %v1326 = vadd.f32 %v1194, %v1325
    %1327 = vmatprep.mubr.f32.mxu0 0.0
    %1328 = vmatmul.mubr.f32.gmra.mrb[0].mxu0 %v1219
    %v1329 = vpop.f32.mrb[0].mxu0
    %v1330 = vadd.f32 %v1190, %v1329
    %v1331 = vpop.f32.mrb[0].mxu0
    %v1332 = vadd.f32 %v1194, %v1331
    %1333 = vdwg.mxu0
    %v1334 = vld [vmem:[%s14] sm:$0x3]
    %v1336 = vlaneseq
    %v1337 = vshrl.u32 %v1336, 7
    %v1338 = vsub.s32 0, %v1337
    %v1339 = vrot.slane %v1334, %v1338
    %v1340 = vlaneseq
    %v1341 = vshrl.u32 %v1340, 7
    %v1342 = vsub.s32 1, %v1341
    %v1343 = vrot.slane %v1334, %v1342
    %v1346 = vld [vmem:[%s10] sm:$0xff]
    %v1347 = vld [vmem:[%s10 + $0x8] sm:$0xff]
    %v1348 = vld [vmem:[%s10 + $0x10] sm:$0xff]
    %v1349 = vld [vmem:[%s10 + $0x18] sm:$0xff]
    %v1350 = vld [vmem:[%s10 + $0x20] sm:$0xff]
    %v1351 = vld [vmem:[%s10 + $0x28] sm:$0xff]
    %v1352 = vld [vmem:[%s10 + $0x30] sm:$0xff]
    %v1353 = vld [vmem:[%s10 + $0x38] sm:$0xff]
    %v1354 = vld [vmem:[%s10 + $0x40] sm:$0xff]
    %v1355 = vld [vmem:[%s10 + $0x48] sm:$0xff]
    %v1356 = vld [vmem:[%s10 + $0x50] sm:$0xff]
    %v1357 = vld [vmem:[%s10 + $0x58] sm:$0xff]
    %v1358 = vld [vmem:[%s10 + $0x60] sm:$0xff]
    %v1359 = vld [vmem:[%s10 + $0x68] sm:$0xff]
    %v1360 = vld [vmem:[%s10 + $0x70] sm:$0xff]
    %v1361 = vld [vmem:[%s10 + $0x78] sm:$0xff]
    %v1363 = vsel %vm936, 0.0, 0
    %1365 = vmatprep.subr.mxu0 %v1347
    %1366 = vmatpush1.msra.mxu0 %v1346
    %1367 = vmatprep.subr.mxu0 %v1349
    %1368 = vmatpush1.msra.mxu0 %v1348
    %1369 = vmatprep.subr.mxu0 %v1351
    %1370 = vmatpush1.msra.mxu0 %v1350
    %1371 = vmatprep.subr.mxu0 %v1353
    %1372 = vmatpush1.msra.mxu0 %v1352
    %1373 = vmatprep.subr.mxu0 %v1355
    %1374 = vmatpush1.msra.mxu0 %v1354
    %1375 = vmatprep.subr.mxu0 %v1357
    %1376 = vmatpush1.msra.mxu0 %v1356
    %1377 = vmatprep.subr.mxu0 %v1359
    %1378 = vmatpush1.msra.mxu0 %v1358
    %1379 = vmatprep.subr.mxu0 %v1361
    %1380 = vmatpush1.msra.mxu0 %v1360
    %1381 = vmatprep.subr.mxu0 0.0
    %1382 = vmatpush1.msra.mxu0 0.0
    %1383 = vmatprep.subr.mxu0 0.0
    %1384 = vmatpush1.msra.mxu0 0.0
    %1385 = vmatprep.subr.mxu0 0.0
    %1386 = vmatpush1.msra.mxu0 0.0
    %1387 = vmatprep.subr.mxu0 0.0
    %1388 = vmatpush1.msra.mxu0 0.0
    %1389 = vmatprep.subr.mxu0 0.0
    %1390 = vmatpush1.msra.mxu0 0.0
    %1391 = vmatprep.subr.mxu0 0.0
    %1392 = vmatpush1.msra.mxu0 0.0
    %1393 = vmatprep.subr.mxu0 0.0
    %1394 = vmatpush1.msra.mxu0 0.0
    %1395 = vmatprep.subr.mxu0 0.0
    %1396 = vmatpush1.msra.mxu0 0.0
    %1397 = vmatprep.subr.mxu0 0.0
    %1398 = vmatpush1.msra.mxu0 0.0
    %1399 = vmatprep.subr.mxu0 0.0
    %1400 = vmatpush1.msra.mxu0 0.0
    %1401 = vmatprep.subr.mxu0 0.0
    %1402 = vmatpush1.msra.mxu0 0.0
    %1403 = vmatprep.subr.mxu0 0.0
    %1404 = vmatpush1.msra.mxu0 0.0
    %1405 = vmatprep.subr.mxu0 0.0
    %1406 = vmatpush1.msra.mxu0 0.0
    %1407 = vmatprep.subr.mxu0 0.0
    %1408 = vmatpush1.msra.mxu0 0.0
    %1409 = vmatprep.subr.mxu0 0.0
    %1410 = vmatpush1.msra.mxu0 0.0
    %1411 = vmatprep.subr.mxu0 0.0
    %1412 = vmatpush1.msra.mxu0 0.0
    %1413 = vmatprep.subr.mxu0 0.0
    %1414 = vmatpush1.msra.mxu0 0.0
    %1415 = vmatprep.subr.mxu0 0.0
    %1416 = vmatpush1.msra.mxu0 0.0
    %1417 = vmatprep.subr.mxu0 0.0
    %1418 = vmatpush1.msra.mxu0 0.0
    %1419 = vmatprep.subr.mxu0 0.0
    %1420 = vmatpush1.msra.mxu0 0.0
    %1421 = vmatprep.subr.mxu0 0.0
    %1422 = vmatpush1.msra.mxu0 0.0
    %1423 = vmatprep.subr.mxu0 0.0
    %1424 = vmatpush1.msra.mxu0 0.0
    %1425 = vmatprep.subr.mxu0 0.0
    %1426 = vmatpush1.msra.mxu0 0.0
    %1427 = vmatprep.subr.mxu0 0.0
    %1428 = vmatpush1.msra.mxu0 0.0
    %1429 = vmatprep.mubr.f32.mxu0 0.0
    %1430 = vmatmul.mubr.f32.gmra.mrb[0].mxu0 %v1363
    %v1431 = vpop.f32.mrb[0].mxu0
    %v1432 = vadd.f32 0.0, %v1431
    %v1433 = vpop.f32.mrb[0].mxu0
    %v1434 = vadd.f32 0.0, %v1433
    %1435 = vdwg.mxu0
    %v1436 = vadd.f32 %v1288, %v1432
    %v1437 = vadd.f32 %v1290, %v1434
    %v1438 = vtanh.pop %v1436
    %v1439 = vtanh.pop %v1437
    %v1440 = vmul.f32 %v1438, 0.5
    %v1441 = vadd.f32 %v1440, 0.5
    %v1442 = vmul.f32 %v1439, 0.5
    %v1443 = vadd.f32 %v1442, 0.5
    %v1444 = vmul.f32 %v1441, 0.0
    %v1445 = vmul.f32 %v1441, %v1439
    %1447 = vrot.lane.b32.xlu0 %v1445, 64
    %v1448 = vpop.permute.xlu0 %1447
    %v1450 = vadd.f32 %v1444, %v1448
    %v1451 = vtanh.pop %v1450
    %v1452 = vmul.f32 %v1443, %v1451
    %v1453 = vld [vmem:[%s12] sm:$0xff]
    %v1454 = vld [vmem:[%s12 + $0x8] sm:$0xff]
    %v1455 = vld [vmem:[%s12 + $0x10] sm:$0xff]
    %v1456 = vld [vmem:[%s12 + $0x18] sm:$0xff]
    %v1457 = vld [vmem:[%s12 + $0x20] sm:$0xff]
    %v1458 = vld [vmem:[%s12 + $0x28] sm:$0xff]
    %v1459 = vld [vmem:[%s12 + $0x30] sm:$0xff]
    %v1460 = vld [vmem:[%s12 + $0x38] sm:$0xff]
    %v1461 = vld [vmem:[%s12 + $0x40] sm:$0xff]
    %v1462 = vld [vmem:[%s12 + $0x48] sm:$0xff]
    %v1463 = vld [vmem:[%s12 + $0x50] sm:$0xff]
    %v1464 = vld [vmem:[%s12 + $0x58] sm:$0xff]
    %v1465 = vld [vmem:[%s12 + $0x60] sm:$0xff]
    %v1466 = vld [vmem:[%s12 + $0x68] sm:$0xff]
    %v1467 = vld [vmem:[%s12 + $0x70] sm:$0xff]
    %v1468 = vld [vmem:[%s12 + $0x78] sm:$0xff]
    %1470 = vrot.lane.b32.xlu0 %v1452, 64
    %v1471 = vpop.permute.xlu0 %1470
    %v1472 = vsel %vm936, %v1471, 0
    %1474 = vmatprep.subr.mxu0 %v1454
    %1475 = vmatpush1.msra.mxu0 %v1453
    %1476 = vmatprep.subr.mxu0 %v1456
    %1477 = vmatpush1.msra.mxu0 %v1455
    %1478 = vmatprep.subr.mxu0 %v1458
    %1479 = vmatpush1.msra.mxu0 %v1457
    %1480 = vmatprep.subr.mxu0 %v1460
    %1481 = vmatpush1.msra.mxu0 %v1459
    %1482 = vmatprep.subr.mxu0 %v1462
    %1483 = vmatpush1.msra.mxu0 %v1461
    %1484 = vmatprep.subr.mxu0 %v1464
    %1485 = vmatpush1.msra.mxu0 %v1463
    %1486 = vmatprep.subr.mxu0 %v1466
    %1487 = vmatpush1.msra.mxu0 %v1465
    %1488 = vmatprep.subr.mxu0 %v1468
    %1489 = vmatpush1.msra.mxu0 %v1467
    %1490 = vmatprep.subr.mxu0 0.0
    %1491 = vmatpush1.msra.mxu0 0.0
    %1492 = vmatprep.subr.mxu0 0.0
    %1493 = vmatpush1.msra.mxu0 0.0
    %1494 = vmatprep.subr.mxu0 0.0
    %1495 = vmatpush1.msra.mxu0 0.0
    %1496 = vmatprep.subr.mxu0 0.0
    %1497 = vmatpush1.msra.mxu0 0.0
    %1498 = vmatprep.subr.mxu0 0.0
    %1499 = vmatpush1.msra.mxu0 0.0
    %1500 = vmatprep.subr.mxu0 0.0
    %1501 = vmatpush1.msra.mxu0 0.0
    %1502 = vmatprep.subr.mxu0 0.0
    %1503 = vmatpush1.msra.mxu0 0.0
    %1504 = vmatprep.subr.mxu0 0.0
    %1505 = vmatpush1.msra.mxu0 0.0
    %1506 = vmatprep.subr.mxu0 0.0
    %1507 = vmatpush1.msra.mxu0 0.0
    %1508 = vmatprep.subr.mxu0 0.0
    %1509 = vmatpush1.msra.mxu0 0.0
    %1510 = vmatprep.subr.mxu0 0.0
    %1511 = vmatpush1.msra.mxu0 0.0
    %1512 = vmatprep.subr.mxu0 0.0
    %1513 = vmatpush1.msra.mxu0 0.0
    %1514 = vmatprep.subr.mxu0 0.0
    %1515 = vmatpush1.msra.mxu0 0.0
    %1516 = vmatprep.subr.mxu0 0.0
    %1517 = vmatpush1.msra.mxu0 0.0
    %1518 = vmatprep.subr.mxu0 0.0
    %1519 = vmatpush1.msra.mxu0 0.0
    %1520 = vmatprep.subr.mxu0 0.0
    %1521 = vmatpush1.msra.mxu0 0.0
    %1522 = vmatprep.subr.mxu0 0.0
    %1523 = vmatpush1.msra.mxu0 0.0
    %1524 = vmatprep.subr.mxu0 0.0
    %1525 = vmatpush1.msra.mxu0 0.0
    %1526 = vmatprep.subr.mxu0 0.0
    %1527 = vmatpush1.msra.mxu0 0.0
    %1528 = vmatprep.subr.mxu0 0.0
    %1529 = vmatpush1.msra.mxu0 0.0
    %1530 = vmatprep.subr.mxu0 0.0
    %1531 = vmatpush1.msra.mxu0 0.0
    %1532 = vmatprep.subr.mxu0 0.0
    %1533 = vmatpush1.msra.mxu0 0.0
    %1534 = vmatprep.subr.mxu0 0.0
    %1535 = vmatpush1.msra.mxu0 0.0
    %1536 = vmatprep.subr.mxu0 0.0
    %1537 = vmatpush1.msra.mxu0 0.0
    %1538 = vmatprep.mubr.f32.mxu0 0.0
    %1539 = vmatmul.mubr.f32.gmra.mrb[0].mxu0 %v1472
    %v1540 = vpop.f32.mrb[0].mxu0
    %v1541 = vadd.f32 %v1339, %v1540
    %v1542 = vpop.f32.mrb[0].mxu0
    %v1543 = vadd.f32 %v1343, %v1542
    %1544 = vdwg.mxu0
    %v1545 = vtanh.pop %v1541
    %v1546 = vtanh.pop %v1543
    %v1547 = vmul.f32 %v1545, 0.5
    %v1548 = vadd.f32 %v1547, 0.5
    %v1549 = vmul.f32 %v1546, 0.5
    %v1550 = vadd.f32 %v1549, 0.5
    %v1551 = vmul.f32 %v1548, 0.0
    %v1552 = vmul.f32 %v1548, %v1546
    %1554 = vrot.lane.b32.xlu0 %v1552, 64
    %v1555 = vpop.permute.xlu0 %1554
    %v1557 = vadd.f32 %v1551, %v1555
    %v1558 = vtanh.pop %v1557
    %v1559 = vmul.f32 %v1550, %v1558
    %v1560 = vld [vmem:[%s13] sm:$0xff]
    %v1561 = vld [vmem:[%s13 + $0x8] sm:$0xff]
    %v1562 = vld [vmem:[%s13 + $0x10] sm:$0xff]
    %v1563 = vld [vmem:[%s13 + $0x18] sm:$0xff]
    %v1564 = vld [vmem:[%s13 + $0x20] sm:$0xff]
    %v1565 = vld [vmem:[%s13 + $0x28] sm:$0xff]
    %v1566 = vld [vmem:[%s13 + $0x30] sm:$0xff]
    %v1567 = vld [vmem:[%s13 + $0x38] sm:$0xff]
    %v1568 = vld [vmem:[%s13 + $0x40] sm:$0xff]
    %v1569 = vld [vmem:[%s13 + $0x48] sm:$0xff]
    %v1570 = vld [vmem:[%s13 + $0x50] sm:$0xff]
    %v1571 = vld [vmem:[%s13 + $0x58] sm:$0xff]
    %v1572 = vld [vmem:[%s13 + $0x60] sm:$0xff]
    %v1573 = vld [vmem:[%s13 + $0x68] sm:$0xff]
    %v1574 = vld [vmem:[%s13 + $0x70] sm:$0xff]
    %v1575 = vld [vmem:[%s13 + $0x78] sm:$0xff]
    %1577 = vrot.lane.b32.xlu0 %v1559, 64
    %v1578 = vpop.permute.xlu0 %1577
    %v1579 = vsel %vm936, %v1578, 0
    %1581 = vmatprep.subr.mxu0 %v1561
    %1582 = vmatpush1.msra.mxu0 %v1560
    %1583 = vmatprep.subr.mxu0 %v1563
    %1584 = vmatpush1.msra.mxu0 %v1562
    %1585 = vmatprep.subr.mxu0 %v1565
    %1586 = vmatpush1.msra.mxu0 %v1564
    %1587 = vmatprep.subr.mxu0 %v1567
    %1588 = vmatpush1.msra.mxu0 %v1566
    %1589 = vmatprep.subr.mxu0 %v1569
    %1590 = vmatpush1.msra.mxu0 %v1568
    %1591 = vmatprep.subr.mxu0 %v1571
    %1592 = vmatpush1.msra.mxu0 %v1570
    %1593 = vmatprep.subr.mxu0 %v1573
    %1594 = vmatpush1.msra.mxu0 %v1572
    %1595 = vmatprep.subr.mxu0 %v1575
    %1596 = vmatpush1.msra.mxu0 %v1574
    %1597 = vmatprep.subr.mxu0 0.0
    %1598 = vmatpush1.msra.mxu0 0.0
    %1599 = vmatprep.subr.mxu0 0.0
    %1600 = vmatpush1.msra.mxu0 0.0
    %1601 = vmatprep.subr.mxu0 0.0
    %1602 = vmatpush1.msra.mxu0 0.0
    %1603 = vmatprep.subr.mxu0 0.0
    %1604 = vmatpush1.msra.mxu0 0.0
    %1605 = vmatprep.subr.mxu0 0.0
    %1606 = vmatpush1.msra.mxu0 0.0
    %1607 = vmatprep.subr.mxu0 0.0
    %1608 = vmatpush1.msra.mxu0 0.0
    %1609 = vmatprep.subr.mxu0 0.0
    %1610 = vmatpush1.msra.mxu0 0.0
    %1611 = vmatprep.subr.mxu0 0.0
    %1612 = vmatpush1.msra.mxu0 0.0
    %1613 = vmatprep.subr.mxu0 0.0
    %1614 = vmatpush1.msra.mxu0 0.0
    %1615 = vmatprep.subr.mxu0 0.0
    %1616 = vmatpush1.msra.mxu0 0.0
    %1617 = vmatprep.subr.mxu0 0.0
    %1618 = vmatpush1.msra.mxu0 0.0
    %1619 = vmatprep.subr.mxu0 0.0
    %1620 = vmatpush1.msra.mxu0 0.0
    %1621 = vmatprep.subr.mxu0 0.0
    %1622 = vmatpush1.msra.mxu0 0.0
    %1623 = vmatprep.subr.mxu0 0.0
    %1624 = vmatpush1.msra.mxu0 0.0
    %1625 = vmatprep.subr.mxu0 0.0
    %1626 = vmatpush1.msra.mxu0 0.0
    %1627 = vmatprep.subr.mxu0 0.0
    %1628 = vmatpush1.msra.mxu0 0.0
    %1629 = vmatprep.subr.mxu0 0.0
    %1630 = vmatpush1.msra.mxu0 0.0
    %1631 = vmatprep.subr.mxu0 0.0
    %1632 = vmatpush1.msra.mxu0 0.0
    %1633 = vmatprep.subr.mxu0 0.0
    %1634 = vmatpush1.msra.mxu0 0.0
    %1635 = vmatprep.subr.mxu0 0.0
    %1636 = vmatpush1.msra.mxu0 0.0
    %1637 = vmatprep.subr.mxu0 0.0
    %1638 = vmatpush1.msra.mxu0 0.0
    %1639 = vmatprep.subr.mxu0 0.0
    %1640 = vmatpush1.msra.mxu0 0.0
    %1641 = vmatprep.subr.mxu0 0.0
    %1642 = vmatpush1.msra.mxu0 0.0
    %1643 = vmatprep.subr.mxu0 0.0
    %1644 = vmatpush1.msra.mxu0 0.0
    %1645 = vmatprep.mubr.f32.mxu0 0.0
    %1646 = vmatmul.mubr.f32.gmra.mrb[0].mxu0 %v1579
    %v1647 = vpop.f32.mrb[0].mxu0
    %v1648 = vadd.f32 %v1339, %v1647
    %v1649 = vpop.f32.mrb[0].mxu0
    %v1650 = vadd.f32 %v1343, %v1649
    %1651 = vdwg.mxu0
    %1652 = vmatprep.subr.mxu0 %v1347
    %1653 = vmatpush1.msra.mxu0 %v1346
    %1654 = vmatprep.subr.mxu0 %v1349
    %1655 = vmatpush1.msra.mxu0 %v1348
    %1656 = vmatprep.subr.mxu0 %v1351
    %1657 = vmatpush1.msra.mxu0 %v1350
    %1658 = vmatprep.subr.mxu0 %v1353
    %1659 = vmatpush1.msra.mxu0 %v1352
    %1660 = vmatprep.subr.mxu0 %v1355
    %1661 = vmatpush1.msra.mxu0 %v1354
    %1662 = vmatprep.subr.mxu0 %v1357
    %1663 = vmatpush1.msra.mxu0 %v1356
    %1664 = vmatprep.subr.mxu0 %v1359
    %1665 = vmatpush1.msra.mxu0 %v1358
    %1666 = vmatprep.subr.mxu0 %v1361
    %1667 = vmatpush1.msra.mxu0 %v1360
    %1668 = vmatprep.subr.mxu0 0.0
    %1669 = vmatpush1.msra.mxu0 0.0
    %1670 = vmatprep.subr.mxu0 0.0
    %1671 = vmatpush1.msra.mxu0 0.0
    %1672 = vmatprep.subr.mxu0 0.0
    %1673 = vmatpush1.msra.mxu0 0.0
    %1674 = vmatprep.subr.mxu0 0.0
    %1675 = vmatpush1.msra.mxu0 0.0
    %1676 = vmatprep.subr.mxu0 0.0
    %1677 = vmatpush1.msra.mxu0 0.0
    %1678 = vmatprep.subr.mxu0 0.0
    %1679 = vmatpush1.msra.mxu0 0.0
    %1680 = vmatprep.subr.mxu0 0.0
    %1681 = vmatpush1.msra.mxu0 0.0
    %1682 = vmatprep.subr.mxu0 0.0
    %1683 = vmatpush1.msra.mxu0 0.0
    %1684 = vmatprep.subr.mxu0 0.0
    %1685 = vmatpush1.msra.mxu0 0.0
    %1686 = vmatprep.subr.mxu0 0.0
    %1687 = vmatpush1.msra.mxu0 0.0
    %1688 = vmatprep.subr.mxu0 0.0
    %1689 = vmatpush1.msra.mxu0 0.0
    %1690 = vmatprep.subr.mxu0 0.0
    %1691 = vmatpush1.msra.mxu0 0.0
    %1692 = vmatprep.subr.mxu0 0.0
    %1693 = vmatpush1.msra.mxu0 0.0
    %1694 = vmatprep.subr.mxu0 0.0
    %1695 = vmatpush1.msra.mxu0 0.0
    %1696 = vmatprep.subr.mxu0 0.0
    %1697 = vmatpush1.msra.mxu0 0.0
    %1698 = vmatprep.subr.mxu0 0.0
    %1699 = vmatpush1.msra.mxu0 0.0
    %1700 = vmatprep.subr.mxu0 0.0
    %1701 = vmatpush1.msra.mxu0 0.0
    %1702 = vmatprep.subr.mxu0 0.0
    %1703 = vmatpush1.msra.mxu0 0.0
    %1704 = vmatprep.subr.mxu0 0.0
    %1705 = vmatpush1.msra.mxu0 0.0
    %1706 = vmatprep.subr.mxu0 0.0
    %1707 = vmatpush1.msra.mxu0 0.0
    %1708 = vmatprep.subr.mxu0 0.0
    %1709 = vmatpush1.msra.mxu0 0.0
    %1710 = vmatprep.subr.mxu0 0.0
    %1711 = vmatpush1.msra.mxu0 0.0
    %1712 = vmatprep.subr.mxu0 0.0
    %1713 = vmatpush1.msra.mxu0 0.0
    %1714 = vmatprep.subr.mxu0 0.0
    %1715 = vmatpush1.msra.mxu0 0.0
    %1716 = vmatprep.mubr.f32.mxu0 0.0
    %1717 = vmatmul.mubr.f32.gmra.mrb[0].mxu0 %v1472
    %v1718 = vpop.f32.mrb[0].mxu0
    %v1719 = vadd.f32 0.0, %v1718
    %v1720 = vpop.f32.mrb[0].mxu0
    %v1721 = vadd.f32 0.0, %v1720
    %1722 = vdwg.mxu0
    %v1723 = vadd.f32 %v1294, %v1719
    %v1724 = vadd.f32 %v1296, %v1721
    %v1725 = vtanh.pop %v1723
    %v1726 = vtanh.pop %v1724
    %v1727 = vmul.f32 %v1725, 0.5
    %v1728 = vadd.f32 %v1727, 0.5
    %v1729 = vmul.f32 %v1726, 0.5
    %v1730 = vadd.f32 %v1729, 0.5
    %v1731 = vmul.f32 %v1728, %v1450
    %v1732 = vmul.f32 %v1728, %v1726
    %1734 = vrot.lane.b32.xlu0 %v1732, 64
    %v1735 = vpop.permute.xlu0 %1734
    %v1737 = vadd.f32 %v1731, %v1735
    %v1738 = vtanh.pop %v1737
    %v1739 = vmul.f32 %v1730, %v1738
    %1741 = vrot.lane.b32.xlu0 %v1739, 64
    %v1742 = vpop.permute.xlu0 %1741
    %v1743 = vsel %vm936, %v1742, 0
    %1745 = vmatprep.subr.mxu0 %v1454
    %1746 = vmatpush1.msra.mxu0 %v1453
    %1747 = vmatprep.subr.mxu0 %v1456
    %1748 = vmatpush1.msra.mxu0 %v1455
    %1749 = vmatprep.subr.mxu0 %v1458
    %1750 = vmatpush1.msra.mxu0 %v1457
    %1751 = vmatprep.subr.mxu0 %v1460
    %1752 = vmatpush1.msra.mxu0 %v1459
    %1753 = vmatprep.subr.mxu0 %v1462
    %1754 = vmatpush1.msra.mxu0 %v1461
    %1755 = vmatprep.subr.mxu0 %v1464
    %1756 = vmatpush1.msra.mxu0 %v1463
    %1757 = vmatprep.subr.mxu0 %v1466
    %1758 = vmatpush1.msra.mxu0 %v1465
    %1759 = vmatprep.subr.mxu0 %v1468
    %1760 = vmatpush1.msra.mxu0 %v1467
    %1761 = vmatprep.subr.mxu0 0.0
    %1762 = vmatpush1.msra.mxu0 0.0
    %1763 = vmatprep.subr.mxu0 0.0
    %1764 = vmatpush1.msra.mxu0 0.0
    %1765 = vmatprep.subr.mxu0 0.0
    %1766 = vmatpush1.msra.mxu0 0.0
    %1767 = vmatprep.subr.mxu0 0.0
    %1768 = vmatpush1.msra.mxu0 0.0
    %1769 = vmatprep.subr.mxu0 0.0
    %1770 = vmatpush1.msra.mxu0 0.0
    %1771 = vmatprep.subr.mxu0 0.0
    %1772 = vmatpush1.msra.mxu0 0.0
    %1773 = vmatprep.subr.mxu0 0.0
    %1774 = vmatpush1.msra.mxu0 0.0
    %1775 = vmatprep.subr.mxu0 0.0
    %1776 = vmatpush1.msra.mxu0 0.0
    %1777 = vmatprep.subr.mxu0 0.0
    %1778 = vmatpush1.msra.mxu0 0.0
    %1779 = vmatprep.subr.mxu0 0.0
    %1780 = vmatpush1.msra.mxu0 0.0
    %1781 = vmatprep.subr.mxu0 0.0
    %1782 = vmatpush1.msra.mxu0 0.0
    %1783 = vmatprep.subr.mxu0 0.0
    %1784 = vmatpush1.msra.mxu0 0.0
    %1785 = vmatprep.subr.mxu0 0.0
    %1786 = vmatpush1.msra.mxu0 0.0
    %1787 = vmatprep.subr.mxu0 0.0
    %1788 = vmatpush1.msra.mxu0 0.0
    %1789 = vmatprep.subr.mxu0 0.0
    %1790 = vmatpush1.msra.mxu0 0.0
    %1791 = vmatprep.subr.mxu0 0.0
    %1792 = vmatpush1.msra.mxu0 0.0
    %1793 = vmatprep.subr.mxu0 0.0
    %1794 = vmatpush1.msra.mxu0 0.0
    %1795 = vmatprep.subr.mxu0 0.0
    %1796 = vmatpush1.msra.mxu0 0.0
    %1797 = vmatprep.subr.mxu0 0.0
    %1798 = vmatpush1.msra.mxu0 0.0
    %1799 = vmatprep.subr.mxu0 0.0
    %1800 = vmatpush1.msra.mxu0 0.0
    %1801 = vmatprep.subr.mxu0 0.0
    %1802 = vmatpush1.msra.mxu0 0.0
    %1803 = vmatprep.subr.mxu0 0.0
    %1804 = vmatpush1.msra.mxu0 0.0
    %1805 = vmatprep.subr.mxu0 0.0
    %1806 = vmatpush1.msra.mxu0 0.0
    %1807 = vmatprep.subr.mxu0 0.0
    %1808 = vmatpush1.msra.mxu0 0.0
    %1809 = vmatprep.mubr.f32.mxu0 0.0
    %1810 = vmatmul.mubr.f32.gmra.mrb[0].mxu0 %v1743
    %v1811 = vpop.f32.mrb[0].mxu0
    %v1812 = vadd.f32 %v1648, %v1811
    %v1813 = vpop.f32.mrb[0].mxu0
    %v1814 = vadd.f32 %v1650, %v1813
    %1815 = vdwg.mxu0
    %v1816 = vtanh.pop %v1812
    %v1817 = vtanh.pop %v1814
    %v1818 = vmul.f32 %v1816, 0.5
    %v1819 = vadd.f32 %v1818, 0.5
    %v1820 = vmul.f32 %v1817, 0.5
    %v1821 = vadd.f32 %v1820, 0.5
    %v1822 = vmul.f32 %v1819, %v1557
    %v1823 = vmul.f32 %v1819, %v1817
    %1825 = vrot.lane.b32.xlu0 %v1823, 64
    %v1826 = vpop.permute.xlu0 %1825
    %v1828 = vadd.f32 %v1822, %v1826
    %v1829 = vtanh.pop %v1828
    %v1830 = vmul.f32 %v1821, %v1829
    %1832 = vrot.lane.b32.xlu0 %v1830, 64
    %v1833 = vpop.permute.xlu0 %1832
    %1835 = vst.msk [vmem:[#allocation2] sm:$0xff] %vm936, %v1833
    %v1836 = vld [vmem:[%s13] sm:$0xff]
    %v1837 = vld [vmem:[%s13 + $0x8] sm:$0xff]
    %v1838 = vld [vmem:[%s13 + $0x10] sm:$0xff]
    %v1839 = vld [vmem:[%s13 + $0x18] sm:$0xff]
    %v1840 = vld [vmem:[%s13 + $0x20] sm:$0xff]
    %v1841 = vld [vmem:[%s13 + $0x28] sm:$0xff]
    %v1842 = vld [vmem:[%s13 + $0x30] sm:$0xff]
    %v1843 = vld [vmem:[%s13 + $0x38] sm:$0xff]
    %v1844 = vld [vmem:[%s13 + $0x40] sm:$0xff]
    %v1845 = vld [vmem:[%s13 + $0x48] sm:$0xff]
    %v1846 = vld [vmem:[%s13 + $0x50] sm:$0xff]
    %v1847 = vld [vmem:[%s13 + $0x58] sm:$0xff]
    %v1848 = vld [vmem:[%s13 + $0x60] sm:$0xff]
    %v1849 = vld [vmem:[%s13 + $0x68] sm:$0xff]
    %v1850 = vld [vmem:[%s13 + $0x70] sm:$0xff]
    %v1851 = vld [vmem:[%s13 + $0x78] sm:$0xff]
    %v1852 = vsel %vm936, %v1833, 0
    %1854 = vmatprep.subr.mxu0 %v1837
    %1855 = vmatpush1.msra.mxu0 %v1836
    %1856 = vmatprep.subr.mxu0 %v1839
    %1857 = vmatpush1.msra.mxu0 %v1838
    %1858 = vmatprep.subr.mxu0 %v1841
    %1859 = vmatpush1.msra.mxu0 %v1840
    %1860 = vmatprep.subr.mxu0 %v1843
    %1861 = vmatpush1.msra.mxu0 %v1842
    %1862 = vmatprep.subr.mxu0 %v1845
    %1863 = vmatpush1.msra.mxu0 %v1844
    %1864 = vmatprep.subr.mxu0 %v1847
    %1865 = vmatpush1.msra.mxu0 %v1846
    %1866 = vmatprep.subr.mxu0 %v1849
    %1867 = vmatpush1.msra.mxu0 %v1848
    %1868 = vmatprep.subr.mxu0 %v1851
    %1869 = vmatpush1.msra.mxu0 %v1850
    %1870 = vmatprep.subr.mxu0 0.0
    %1871 = vmatpush1.msra.mxu0 0.0
    %1872 = vmatprep.subr.mxu0 0.0
    %1873 = vmatpush1.msra.mxu0 0.0
    %1874 = vmatprep.subr.mxu0 0.0
    %1875 = vmatpush1.msra.mxu0 0.0
    %1876 = vmatprep.subr.mxu0 0.0
    %1877 = vmatpush1.msra.mxu0 0.0
    %1878 = vmatprep.subr.mxu0 0.0
    %1879 = vmatpush1.msra.mxu0 0.0
    %1880 = vmatprep.subr.mxu0 0.0
    %1881 = vmatpush1.msra.mxu0 0.0
    %1882 = vmatprep.subr.mxu0 0.0
    %1883 = vmatpush1.msra.mxu0 0.0
    %1884 = vmatprep.subr.mxu0 0.0
    %1885 = vmatpush1.msra.mxu0 0.0
    %1886 = vmatprep.subr.mxu0 0.0
    %1887 = vmatpush1.msra.mxu0 0.0
    %1888 = vmatprep.subr.mxu0 0.0
    %1889 = vmatpush1.msra.mxu0 0.0
    %1890 = vmatprep.subr.mxu0 0.0
    %1891 = vmatpush1.msra.mxu0 0.0
    %1892 = vmatprep.subr.mxu0 0.0
    %1893 = vmatpush1.msra.mxu0 0.0
    %1894 = vmatprep.subr.mxu0 0.0
    %1895 = vmatpush1.msra.mxu0 0.0
    %1896 = vmatprep.subr.mxu0 0.0
    %1897 = vmatpush1.msra.mxu0 0.0
    %1898 = vmatprep.subr.mxu0 0.0
    %1899 = vmatpush1.msra.mxu0 0.0
    %1900 = vmatprep.subr.mxu0 0.0
    %1901 = vmatpush1.msra.mxu0 0.0
    %1902 = vmatprep.subr.mxu0 0.0
    %1903 = vmatpush1.msra.mxu0 0.0
    %1904 = vmatprep.subr.mxu0 0.0
    %1905 = vmatpush1.msra.mxu0 0.0
    %1906 = vmatprep.subr.mxu0 0.0
    %1907 = vmatpush1.msra.mxu0 0.0
    %1908 = vmatprep.subr.mxu0 0.0
    %1909 = vmatpush1.msra.mxu0 0.0
    %1910 = vmatprep.subr.mxu0 0.0
    %1911 = vmatpush1.msra.mxu0 0.0
    %1912 = vmatprep.subr.mxu0 0.0
    %1913 = vmatpush1.msra.mxu0 0.0
    %1914 = vmatprep.subr.mxu0 0.0
    %1915 = vmatpush1.msra.mxu0 0.0
    %1916 = vmatprep.subr.mxu0 0.0
    %1917 = vmatpush1.msra.mxu0 0.0
    %1918 = vmatprep.mubr.f32.mxu0 0.0
    %1919 = vmatmul.mubr.f32.gmra.mrb[0].mxu0 %v1852
    %v1920 = vpop.f32.mrb[0].mxu0
    %v1921 = vadd.f32 %v1339, %v1920
    %v1922 = vpop.f32.mrb[0].mxu0
    %v1923 = vadd.f32 %v1343, %v1922
    %1924 = vdwg.mxu0
    %v1925 = vld [vmem:[%s10] sm:$0xff]
    %v1926 = vld [vmem:[%s10 + $0x8] sm:$0xff]
    %v1927 = vld [vmem:[%s10 + $0x10] sm:$0xff]
    %v1928 = vld [vmem:[%s10 + $0x18] sm:$0xff]
    %v1929 = vld [vmem:[%s10 + $0x20] sm:$0xff]
    %v1930 = vld [vmem:[%s10 + $0x28] sm:$0xff]
    %v1931 = vld [vmem:[%s10 + $0x30] sm:$0xff]
    %v1932 = vld [vmem:[%s10 + $0x38] sm:$0xff]
    %v1933 = vld [vmem:[%s10 + $0x40] sm:$0xff]
    %v1934 = vld [vmem:[%s10 + $0x48] sm:$0xff]
    %v1935 = vld [vmem:[%s10 + $0x50] sm:$0xff]
    %v1936 = vld [vmem:[%s10 + $0x58] sm:$0xff]
    %v1937 = vld [vmem:[%s10 + $0x60] sm:$0xff]
    %v1938 = vld [vmem:[%s10 + $0x68] sm:$0xff]
    %v1939 = vld [vmem:[%s10 + $0x70] sm:$0xff]
    %v1940 = vld [vmem:[%s10 + $0x78] sm:$0xff]
    %1941 = vmatprep.subr.mxu0 %v1926
    %1942 = vmatpush1.msra.mxu0 %v1925
    %1943 = vmatprep.subr.mxu0 %v1928
    %1944 = vmatpush1.msra.mxu0 %v1927
    %1945 = vmatprep.subr.mxu0 %v1930
    %1946 = vmatpush1.msra.mxu0 %v1929
    %1947 = vmatprep.subr.mxu0 %v1932
    %1948 = vmatpush1.msra.mxu0 %v1931
    %1949 = vmatprep.subr.mxu0 %v1934
    %1950 = vmatpush1.msra.mxu0 %v1933
    %1951 = vmatprep.subr.mxu0 %v1936
    %1952 = vmatpush1.msra.mxu0 %v1935
    %1953 = vmatprep.subr.mxu0 %v1938
    %1954 = vmatpush1.msra.mxu0 %v1937
    %1955 = vmatprep.subr.mxu0 %v1940
    %1956 = vmatpush1.msra.mxu0 %v1939
    %1957 = vmatprep.subr.mxu0 0.0
    %1958 = vmatpush1.msra.mxu0 0.0
    %1959 = vmatprep.subr.mxu0 0.0
    %1960 = vmatpush1.msra.mxu0 0.0
    %1961 = vmatprep.subr.mxu0 0.0
    %1962 = vmatpush1.msra.mxu0 0.0
    %1963 = vmatprep.subr.mxu0 0.0
    %1964 = vmatpush1.msra.mxu0 0.0
    %1965 = vmatprep.subr.mxu0 0.0
    %1966 = vmatpush1.msra.mxu0 0.0
    %1967 = vmatprep.subr.mxu0 0.0
    %1968 = vmatpush1.msra.mxu0 0.0
    %1969 = vmatprep.subr.mxu0 0.0
    %1970 = vmatpush1.msra.mxu0 0.0
    %1971 = vmatprep.subr.mxu0 0.0
    %1972 = vmatpush1.msra.mxu0 0.0
    %1973 = vmatprep.subr.mxu0 0.0
    %1974 = vmatpush1.msra.mxu0 0.0
    %1975 = vmatprep.subr.mxu0 0.0
    %1976 = vmatpush1.msra.mxu0 0.0
    %1977 = vmatprep.subr.mxu0 0.0
    %1978 = vmatpush1.msra.mxu0 0.0
    %1979 = vmatprep.subr.mxu0 0.0
    %1980 = vmatpush1.msra.mxu0 0.0
    %1981 = vmatprep.subr.mxu0 0.0
    %1982 = vmatpush1.msra.mxu0 0.0
    %1983 = vmatprep.subr.mxu0 0.0
    %1984 = vmatpush1.msra.mxu0 0.0
    %1985 = vmatprep.subr.mxu0 0.0
    %1986 = vmatpush1.msra.mxu0 0.0
    %1987 = vmatprep.subr.mxu0 0.0
    %1988 = vmatpush1.msra.mxu0 0.0
    %1989 = vmatprep.subr.mxu0 0.0
    %1990 = vmatpush1.msra.mxu0 0.0
    %1991 = vmatprep.subr.mxu0 0.0
    %1992 = vmatpush1.msra.mxu0 0.0
    %1993 = vmatprep.subr.mxu0 0.0
    %1994 = vmatpush1.msra.mxu0 0.0
    %1995 = vmatprep.subr.mxu0 0.0
    %1996 = vmatpush1.msra.mxu0 0.0
    %1997 = vmatprep.subr.mxu0 0.0
    %1998 = vmatpush1.msra.mxu0 0.0
    %1999 = vmatprep.subr.mxu0 0.0
    %2000 = vmatpush1.msra.mxu0 0.0
    %2001 = vmatprep.subr.mxu0 0.0
    %2002 = vmatpush1.msra.mxu0 0.0
    %2003 = vmatprep.subr.mxu0 0.0
    %2004 = vmatpush1.msra.mxu0 0.0
    %2005 = vmatprep.mubr.f32.mxu0 0.0
    %2006 = vmatmul.mubr.f32.gmra.mrb[0].mxu0 %v1743
    %v2007 = vpop.f32.mrb[0].mxu0
    %v2008 = vadd.f32 0.0, %v2007
    %v2009 = vpop.f32.mrb[0].mxu0
    %v2010 = vadd.f32 0.0, %v2009
    %2011 = vdwg.mxu0
    %v2012 = vadd.f32 %v1300, %v2008
    %v2013 = vadd.f32 %v1302, %v2010
    %v2014 = vtanh.pop %v2012
    %v2015 = vtanh.pop %v2013
    %v2016 = vmul.f32 %v2014, 0.5
    %v2017 = vadd.f32 %v2016, 0.5
    %v2018 = vmul.f32 %v2015, 0.5
    %v2019 = vadd.f32 %v2018, 0.5
    %v2020 = vmul.f32 %v2017, %v1737
    %v2021 = vmul.f32 %v2017, %v2015
    %2023 = vrot.lane.b32.xlu0 %v2021, 64
    %v2024 = vpop.permute.xlu0 %2023
    %v2026 = vadd.f32 %v2020, %v2024
    %v2027 = vtanh.pop %v2026
    %v2028 = vmul.f32 %v2019, %v2027
    %v2029 = vld [vmem:[%s12] sm:$0xff]
    %v2030 = vld [vmem:[%s12 + $0x8] sm:$0xff]
    %v2031 = vld [vmem:[%s12 + $0x10] sm:$0xff]
    %v2032 = vld [vmem:[%s12 + $0x18] sm:$0xff]
    %v2033 = vld [vmem:[%s12 + $0x20] sm:$0xff]
    %v2034 = vld [vmem:[%s12 + $0x28] sm:$0xff]
    %v2035 = vld [vmem:[%s12 + $0x30] sm:$0xff]
    %v2036 = vld [vmem:[%s12 + $0x38] sm:$0xff]
    %v2037 = vld [vmem:[%s12 + $0x40] sm:$0xff]
    %v2038 = vld [vmem:[%s12 + $0x48] sm:$0xff]
    %v2039 = vld [vmem:[%s12 + $0x50] sm:$0xff]
    %v2040 = vld [vmem:[%s12 + $0x58] sm:$0xff]
    %v2041 = vld [vmem:[%s12 + $0x60] sm:$0xff]
    %v2042 = vld [vmem:[%s12 + $0x68] sm:$0xff]
    %v2043 = vld [vmem:[%s12 + $0x70] sm:$0xff]
    %v2044 = vld [vmem:[%s12 + $0x78] sm:$0xff]
    %2046 = vrot.lane.b32.xlu0 %v2028, 64
    %v2047 = vpop.permute.xlu0 %2046
    %v2048 = vsel %vm936, %v2047, 0
    %2050 = vmatprep.subr.mxu0 %v2030
    %2051 = vmatpush1.msra.mxu0 %v2029
    %2052 = vmatprep.subr.mxu0 %v2032
    %2053 = vmatpush1.msra.mxu0 %v2031
    %2054 = vmatprep.subr.mxu0 %v2034
    %2055 = vmatpush1.msra.mxu0 %v2033
    %2056 = vmatprep.subr.mxu0 %v2036
    %2057 = vmatpush1.msra.mxu0 %v2035
    %2058 = vmatprep.subr.mxu0 %v2038
    %2059 = vmatpush1.msra.mxu0 %v2037
    %2060 = vmatprep.subr.mxu0 %v2040
    %2061 = vmatpush1.msra.mxu0 %v2039
    %2062 = vmatprep.subr.mxu0 %v2042
    %2063 = vmatpush1.msra.mxu0 %v2041
    %2064 = vmatprep.subr.mxu0 %v2044
    %2065 = vmatpush1.msra.mxu0 %v2043
    %2066 = vmatprep.subr.mxu0 0.0
    %2067 = vmatpush1.msra.mxu0 0.0
    %2068 = vmatprep.subr.mxu0 0.0
    %2069 = vmatpush1.msra.mxu0 0.0
    %2070 = vmatprep.subr.mxu0 0.0
    %2071 = vmatpush1.msra.mxu0 0.0
    %2072 = vmatprep.subr.mxu0 0.0
    %2073 = vmatpush1.msra.mxu0 0.0
    %2074 = vmatprep.subr.mxu0 0.0
    %2075 = vmatpush1.msra.mxu0 0.0
    %2076 = vmatprep.subr.mxu0 0.0
    %2077 = vmatpush1.msra.mxu0 0.0
    %2078 = vmatprep.subr.mxu0 0.0
    %2079 = vmatpush1.msra.mxu0 0.0
    %2080 = vmatprep.subr.mxu0 0.0
    %2081 = vmatpush1.msra.mxu0 0.0
    %2082 = vmatprep.subr.mxu0 0.0
    %2083 = vmatpush1.msra.mxu0 0.0
    %2084 = vmatprep.subr.mxu0 0.0
    %2085 = vmatpush1.msra.mxu0 0.0
    %2086 = vmatprep.subr.mxu0 0.0
    %2087 = vmatpush1.msra.mxu0 0.0
    %2088 = vmatprep.subr.mxu0 0.0
    %2089 = vmatpush1.msra.mxu0 0.0
    %2090 = vmatprep.subr.mxu0 0.0
    %2091 = vmatpush1.msra.mxu0 0.0
    %2092 = vmatprep.subr.mxu0 0.0
    %2093 = vmatpush1.msra.mxu0 0.0
    %2094 = vmatprep.subr.mxu0 0.0
    %2095 = vmatpush1.msra.mxu0 0.0
    %2096 = vmatprep.subr.mxu0 0.0
    %2097 = vmatpush1.msra.mxu0 0.0
    %2098 = vmatprep.subr.mxu0 0.0
    %2099 = vmatpush1.msra.mxu0 0.0
    %2100 = vmatprep.subr.mxu0 0.0
    %2101 = vmatpush1.msra.mxu0 0.0
    %2102 = vmatprep.subr.mxu0 0.0
    %2103 = vmatpush1.msra.mxu0 0.0
    %2104 = vmatprep.subr.mxu0 0.0
    %2105 = vmatpush1.msra.mxu0 0.0
    %2106 = vmatprep.subr.mxu0 0.0
    %2107 = vmatpush1.msra.mxu0 0.0
    %2108 = vmatprep.subr.mxu0 0.0
    %2109 = vmatpush1.msra.mxu0 0.0
    %2110 = vmatprep.subr.mxu0 0.0
    %2111 = vmatpush1.msra.mxu0 0.0
    %2112 = vmatprep.subr.mxu0 0.0
    %2113 = vmatpush1.msra.mxu0 0.0
    %2114 = vmatprep.mubr.f32.mxu0 0.0
    %2115 = vmatmul.mubr.f32.gmra.mrb[0].mxu0 %v2048
    %v2116 = vpop.f32.mrb[0].mxu0
    %v2117 = vadd.f32 %v1921, %v2116
    %v2118 = vpop.f32.mrb[0].mxu0
    %v2119 = vadd.f32 %v1923, %v2118
    %2120 = vdwg.mxu0
    %v2121 = vtanh.pop %v2117
    %v2122 = vtanh.pop %v2119
    %v2123 = vmul.f32 %v2121, 0.5
    %v2124 = vadd.f32 %v2123, 0.5
    %v2125 = vmul.f32 %v2122, 0.5
    %v2126 = vadd.f32 %v2125, 0.5
    %v2127 = vmul.f32 %v2124, %v1828
    %v2128 = vmul.f32 %v2124, %v2122
    %2130 = vrot.lane.b32.xlu0 %v2128, 64
    %v2131 = vpop.permute.xlu0 %2130
    %v2133 = vadd.f32 %v2127, %v2131
    %v2134 = vtanh.pop %v2133
    %v2135 = vmul.f32 %v2126, %v2134
    %2137 = vrot.lane.b32.xlu0 %v2135, 64
    %v2138 = vpop.permute.xlu0 %2137
    %2140 = vst.msk [vmem:[#allocation2 + $0x8] sm:$0xff] %vm936, %v2138
    %v2141 = vld [vmem:[%s13] sm:$0xff]
    %v2142 = vld [vmem:[%s13 + $0x8] sm:$0xff]
    %v2143 = vld [vmem:[%s13 + $0x10] sm:$0xff]
    %v2144 = vld [vmem:[%s13 + $0x18] sm:$0xff]
    %v2145 = vld [vmem:[%s13 + $0x20] sm:$0xff]
    %v2146 = vld [vmem:[%s13 + $0x28] sm:$0xff]
    %v2147 = vld [vmem:[%s13 + $0x30] sm:$0xff]
    %v2148 = vld [vmem:[%s13 + $0x38] sm:$0xff]
    %v2149 = vld [vmem:[%s13 + $0x40] sm:$0xff]
    %v2150 = vld [vmem:[%s13 + $0x48] sm:$0xff]
    %v2151 = vld [vmem:[%s13 + $0x50] sm:$0xff]
    %v2152 = vld [vmem:[%s13 + $0x58] sm:$0xff]
    %v2153 = vld [vmem:[%s13 + $0x60] sm:$0xff]
    %v2154 = vld [vmem:[%s13 + $0x68] sm:$0xff]
    %v2155 = vld [vmem:[%s13 + $0x70] sm:$0xff]
    %v2156 = vld [vmem:[%s13 + $0x78] sm:$0xff]
    %v2157 = vsel %vm936, %v2138, 0
    %2159 = vmatprep.subr.mxu0 %v2142
    %2160 = vmatpush1.msra.mxu0 %v2141
    %2161 = vmatprep.subr.mxu0 %v2144
    %2162 = vmatpush1.msra.mxu0 %v2143
    %2163 = vmatprep.subr.mxu0 %v2146
    %2164 = vmatpush1.msra.mxu0 %v2145
    %2165 = vmatprep.subr.mxu0 %v2148
    %2166 = vmatpush1.msra.mxu0 %v2147
    %2167 = vmatprep.subr.mxu0 %v2150
    %2168 = vmatpush1.msra.mxu0 %v2149
    %2169 = vmatprep.subr.mxu0 %v2152
    %2170 = vmatpush1.msra.mxu0 %v2151
    %2171 = vmatprep.subr.mxu0 %v2154
    %2172 = vmatpush1.msra.mxu0 %v2153
    %2173 = vmatprep.subr.mxu0 %v2156
    %2174 = vmatpush1.msra.mxu0 %v2155
    %2175 = vmatprep.subr.mxu0 0.0
    %2176 = vmatpush1.msra.mxu0 0.0
    %2177 = vmatprep.subr.mxu0 0.0
    %2178 = vmatpush1.msra.mxu0 0.0
    %2179 = vmatprep.subr.mxu0 0.0
    %2180 = vmatpush1.msra.mxu0 0.0
    %2181 = vmatprep.subr.mxu0 0.0
    %2182 = vmatpush1.msra.mxu0 0.0
    %2183 = vmatprep.subr.mxu0 0.0
    %2184 = vmatpush1.msra.mxu0 0.0
    %2185 = vmatprep.subr.mxu0 0.0
    %2186 = vmatpush1.msra.mxu0 0.0
    %2187 = vmatprep.subr.mxu0 0.0
    %2188 = vmatpush1.msra.mxu0 0.0
    %2189 = vmatprep.subr.mxu0 0.0
    %2190 = vmatpush1.msra.mxu0 0.0
    %2191 = vmatprep.subr.mxu0 0.0
    %2192 = vmatpush1.msra.mxu0 0.0
    %2193 = vmatprep.subr.mxu0 0.0
    %2194 = vmatpush1.msra.mxu0 0.0
    %2195 = vmatprep.subr.mxu0 0.0
    %2196 = vmatpush1.msra.mxu0 0.0
    %2197 = vmatprep.subr.mxu0 0.0
    %2198 = vmatpush1.msra.mxu0 0.0
    %2199 = vmatprep.subr.mxu0 0.0
    %2200 = vmatpush1.msra.mxu0 0.0
    %2201 = vmatprep.subr.mxu0 0.0
    %2202 = vmatpush1.msra.mxu0 0.0
    %2203 = vmatprep.subr.mxu0 0.0
    %2204 = vmatpush1.msra.mxu0 0.0
    %2205 = vmatprep.subr.mxu0 0.0
    %2206 = vmatpush1.msra.mxu0 0.0
    %2207 = vmatprep.subr.mxu0 0.0
    %2208 = vmatpush1.msra.mxu0 0.0
    %2209 = vmatprep.subr.mxu0 0.0
    %2210 = vmatpush1.msra.mxu0 0.0
    %2211 = vmatprep.subr.mxu0 0.0
    %2212 = vmatpush1.msra.mxu0 0.0
    %2213 = vmatprep.subr.mxu0 0.0
    %2214 = vmatpush1.msra.mxu0 0.0
    %2215 = vmatprep.subr.mxu0 0.0
    %2216 = vmatpush1.msra.mxu0 0.0
    %2217 = vmatprep.subr.mxu0 0.0
    %2218 = vmatpush1.msra.mxu0 0.0
    %2219 = vmatprep.subr.mxu0 0.0
    %2220 = vmatpush1.msra.mxu0 0.0
    %2221 = vmatprep.subr.mxu0 0.0
    %2222 = vmatpush1.msra.mxu0 0.0
    %2223 = vmatprep.mubr.f32.mxu0 0.0
    %2224 = vmatmul.mubr.f32.gmra.mrb[0].mxu0 %v2157
    %v2225 = vpop.f32.mrb[0].mxu0
    %v2226 = vadd.f32 %v1339, %v2225
    %v2227 = vpop.f32.mrb[0].mxu0
    %v2228 = vadd.f32 %v1343, %v2227
    %2229 = vdwg.mxu0
    %v2230 = vld [vmem:[%s10] sm:$0xff]
    %v2231 = vld [vmem:[%s10 + $0x8] sm:$0xff]
    %v2232 = vld [vmem:[%s10 + $0x10] sm:$0xff]
    %v2233 = vld [vmem:[%s10 + $0x18] sm:$0xff]
    %v2234 = vld [vmem:[%s10 + $0x20] sm:$0xff]
    %v2235 = vld [vmem:[%s10 + $0x28] sm:$0xff]
    %v2236 = vld [vmem:[%s10 + $0x30] sm:$0xff]
    %v2237 = vld [vmem:[%s10 + $0x38] sm:$0xff]
    %v2238 = vld [vmem:[%s10 + $0x40] sm:$0xff]
    %v2239 = vld [vmem:[%s10 + $0x48] sm:$0xff]
    %v2240 = vld [vmem:[%s10 + $0x50] sm:$0xff]
    %v2241 = vld [vmem:[%s10 + $0x58] sm:$0xff]
    %v2242 = vld [vmem:[%s10 + $0x60] sm:$0xff]
    %v2243 = vld [vmem:[%s10 + $0x68] sm:$0xff]
    %v2244 = vld [vmem:[%s10 + $0x70] sm:$0xff]
    %v2245 = vld [vmem:[%s10 + $0x78] sm:$0xff]
    %2246 = vmatprep.subr.mxu0 %v2231
    %2247 = vmatpush1.msra.mxu0 %v2230
    %2248 = vmatprep.subr.mxu0 %v2233
    %2249 = vmatpush1.msra.mxu0 %v2232
    %2250 = vmatprep.subr.mxu0 %v2235
    %2251 = vmatpush1.msra.mxu0 %v2234
    %2252 = vmatprep.subr.mxu0 %v2237
    %2253 = vmatpush1.msra.mxu0 %v2236
    %2254 = vmatprep.subr.mxu0 %v2239
    %2255 = vmatpush1.msra.mxu0 %v2238
    %2256 = vmatprep.subr.mxu0 %v2241
    %2257 = vmatpush1.msra.mxu0 %v2240
    %2258 = vmatprep.subr.mxu0 %v2243
    %2259 = vmatpush1.msra.mxu0 %v2242
    %2260 = vmatprep.subr.mxu0 %v2245
    %2261 = vmatpush1.msra.mxu0 %v2244
    %2262 = vmatprep.subr.mxu0 0.0
    %2263 = vmatpush1.msra.mxu0 0.0
    %2264 = vmatprep.subr.mxu0 0.0
    %2265 = vmatpush1.msra.mxu0 0.0
    %2266 = vmatprep.subr.mxu0 0.0
    %2267 = vmatpush1.msra.mxu0 0.0
    %2268 = vmatprep.subr.mxu0 0.0
    %2269 = vmatpush1.msra.mxu0 0.0
    %2270 = vmatprep.subr.mxu0 0.0
    %2271 = vmatpush1.msra.mxu0 0.0
    %2272 = vmatprep.subr.mxu0 0.0
    %2273 = vmatpush1.msra.mxu0 0.0
    %2274 = vmatprep.subr.mxu0 0.0
    %2275 = vmatpush1.msra.mxu0 0.0
    %2276 = vmatprep.subr.mxu0 0.0
    %2277 = vmatpush1.msra.mxu0 0.0
    %2278 = vmatprep.subr.mxu0 0.0
    %2279 = vmatpush1.msra.mxu0 0.0
    %2280 = vmatprep.subr.mxu0 0.0
    %2281 = vmatpush1.msra.mxu0 0.0
    %2282 = vmatprep.subr.mxu0 0.0
    %2283 = vmatpush1.msra.mxu0 0.0
    %2284 = vmatprep.subr.mxu0 0.0
    %2285 = vmatpush1.msra.mxu0 0.0
    %2286 = vmatprep.subr.mxu0 0.0
    %2287 = vmatpush1.msra.mxu0 0.0
    %2288 = vmatprep.subr.mxu0 0.0
    %2289 = vmatpush1.msra.mxu0 0.0
    %2290 = vmatprep.subr.mxu0 0.0
    %2291 = vmatpush1.msra.mxu0 0.0
    %2292 = vmatprep.subr.mxu0 0.0
    %2293 = vmatpush1.msra.mxu0 0.0
    %2294 = vmatprep.subr.mxu0 0.0
    %2295 = vmatpush1.msra.mxu0 0.0
    %2296 = vmatprep.subr.mxu0 0.0
    %2297 = vmatpush1.msra.mxu0 0.0
    %2298 = vmatprep.subr.mxu0 0.0
    %2299 = vmatpush1.msra.mxu0 0.0
    %2300 = vmatprep.subr.mxu0 0.0
    %2301 = vmatpush1.msra.mxu0 0.0
    %2302 = vmatprep.subr.mxu0 0.0
    %2303 = vmatpush1.msra.mxu0 0.0
    %2304 = vmatprep.subr.mxu0 0.0
    %2305 = vmatpush1.msra.mxu0 0.0
    %2306 = vmatprep.subr.mxu0 0.0
    %2307 = vmatpush1.msra.mxu0 0.0
    %2308 = vmatprep.subr.mxu0 0.0
    %2309 = vmatpush1.msra.mxu0 0.0
    %2310 = vmatprep.mubr.f32.mxu0 0.0
    %2311 = vmatmul.mubr.f32.gmra.mrb[0].mxu0 %v2048
    %v2312 = vpop.f32.mrb[0].mxu0
    %v2313 = vadd.f32 0.0, %v2312
    %v2314 = vpop.f32.mrb[0].mxu0
    %v2315 = vadd.f32 0.0, %v2314
    %2316 = vdwg.mxu0
    %v2317 = vadd.f32 %v1306, %v2313
    %v2318 = vadd.f32 %v1308, %v2315
    %v2319 = vtanh.pop %v2317
    %v2320 = vtanh.pop %v2318
    %v2321 = vmul.f32 %v2319, 0.5
    %v2322 = vadd.f32 %v2321, 0.5
    %v2323 = vmul.f32 %v2320, 0.5
    %v2324 = vadd.f32 %v2323, 0.5
    %v2325 = vmul.f32 %v2322, %v2026
    %v2326 = vmul.f32 %v2322, %v2320
    %2328 = vrot.lane.b32.xlu0 %v2326, 64
    %v2329 = vpop.permute.xlu0 %2328
    %v2331 = vadd.f32 %v2325, %v2329
    %v2332 = vtanh.pop %v2331
    %v2333 = vmul.f32 %v2324, %v2332
    %v2334 = vld [vmem:[%s12] sm:$0xff]
    %v2335 = vld [vmem:[%s12 + $0x8] sm:$0xff]
    %v2336 = vld [vmem:[%s12 + $0x10] sm:$0xff]
    %v2337 = vld [vmem:[%s12 + $0x18] sm:$0xff]
    %v2338 = vld [vmem:[%s12 + $0x20] sm:$0xff]
    %v2339 = vld [vmem:[%s12 + $0x28] sm:$0xff]
    %v2340 = vld [vmem:[%s12 + $0x30] sm:$0xff]
    %v2341 = vld [vmem:[%s12 + $0x38] sm:$0xff]
    %v2342 = vld [vmem:[%s12 + $0x40] sm:$0xff]
    %v2343 = vld [vmem:[%s12 + $0x48] sm:$0xff]
    %v2344 = vld [vmem:[%s12 + $0x50] sm:$0xff]
    %v2345 = vld [vmem:[%s12 + $0x58] sm:$0xff]
    %v2346 = vld [vmem:[%s12 + $0x60] sm:$0xff]
    %v2347 = vld [vmem:[%s12 + $0x68] sm:$0xff]
    %v2348 = vld [vmem:[%s12 + $0x70] sm:$0xff]
    %v2349 = vld [vmem:[%s12 + $0x78] sm:$0xff]
    %2351 = vrot.lane.b32.xlu0 %v2333, 64
    %v2352 = vpop.permute.xlu0 %2351
    %v2353 = vsel %vm936, %v2352, 0
    %2355 = vmatprep.subr.mxu0 %v2335
    %2356 = vmatpush1.msra.mxu0 %v2334
    %2357 = vmatprep.subr.mxu0 %v2337
    %2358 = vmatpush1.msra.mxu0 %v2336
    %2359 = vmatprep.subr.mxu0 %v2339
    %2360 = vmatpush1.msra.mxu0 %v2338
    %2361 = vmatprep.subr.mxu0 %v2341
    %2362 = vmatpush1.msra.mxu0 %v2340
    %2363 = vmatprep.subr.mxu0 %v2343
    %2364 = vmatpush1.msra.mxu0 %v2342
    %2365 = vmatprep.subr.mxu0 %v2345
    %2366 = vmatpush1.msra.mxu0 %v2344
    %2367 = vmatprep.subr.mxu0 %v2347
    %2368 = vmatpush1.msra.mxu0 %v2346
    %2369 = vmatprep.subr.mxu0 %v2349
    %2370 = vmatpush1.msra.mxu0 %v2348
    %2371 = vmatprep.subr.mxu0 0.0
    %2372 = vmatpush1.msra.mxu0 0.0
    %2373 = vmatprep.subr.mxu0 0.0
    %2374 = vmatpush1.msra.mxu0 0.0
    %2375 = vmatprep.subr.mxu0 0.0
    %2376 = vmatpush1.msra.mxu0 0.0
    %2377 = vmatprep.subr.mxu0 0.0
    %2378 = vmatpush1.msra.mxu0 0.0
    %2379 = vmatprep.subr.mxu0 0.0
    %2380 = vmatpush1.msra.mxu0 0.0
    %2381 = vmatprep.subr.mxu0 0.0
    %2382 = vmatpush1.msra.mxu0 0.0
    %2383 = vmatprep.subr.mxu0 0.0
    %2384 = vmatpush1.msra.mxu0 0.0
    %2385 = vmatprep.subr.mxu0 0.0
    %2386 = vmatpush1.msra.mxu0 0.0
    %2387 = vmatprep.subr.mxu0 0.0
    %2388 = vmatpush1.msra.mxu0 0.0
    %2389 = vmatprep.subr.mxu0 0.0
    %2390 = vmatpush1.msra.mxu0 0.0
    %2391 = vmatprep.subr.mxu0 0.0
    %2392 = vmatpush1.msra.mxu0 0.0
    %2393 = vmatprep.subr.mxu0 0.0
    %2394 = vmatpush1.msra.mxu0 0.0
    %2395 = vmatprep.subr.mxu0 0.0
    %2396 = vmatpush1.msra.mxu0 0.0
    %2397 = vmatprep.subr.mxu0 0.0
    %2398 = vmatpush1.msra.mxu0 0.0
    %2399 = vmatprep.subr.mxu0 0.0
    %2400 = vmatpush1.msra.mxu0 0.0
    %2401 = vmatprep.subr.mxu0 0.0
    %2402 = vmatpush1.msra.mxu0 0.0
    %2403 = vmatprep.subr.mxu0 0.0
    %2404 = vmatpush1.msra.mxu0 0.0
    %2405 = vmatprep.subr.mxu0 0.0
    %2406 = vmatpush1.msra.mxu0 0.0
    %2407 = vmatprep.subr.mxu0 0.0
    %2408 = vmatpush1.msra.mxu0 0.0
    %2409 = vmatprep.subr.mxu0 0.0
    %2410 = vmatpush1.msra.mxu0 0.0
    %2411 = vmatprep.subr.mxu0 0.0
    %2412 = vmatpush1.msra.mxu0 0.0
    %2413 = vmatprep.subr.mxu0 0.0
    %2414 = vmatpush1.msra.mxu0 0.0
    %2415 = vmatprep.subr.mxu0 0.0
    %2416 = vmatpush1.msra.mxu0 0.0
    %2417 = vmatprep.subr.mxu0 0.0
    %2418 = vmatpush1.msra.mxu0 0.0
    %2419 = vmatprep.mubr.f32.mxu0 0.0
    %2420 = vmatmul.mubr.f32.gmra.mrb[0].mxu0 %v2353
    %v2421 = vpop.f32.mrb[0].mxu0
    %v2422 = vadd.f32 %v2226, %v2421
    %v2423 = vpop.f32.mrb[0].mxu0
    %v2424 = vadd.f32 %v2228, %v2423
    %2425 = vdwg.mxu0
    %v2426 = vtanh.pop %v2422
    %v2427 = vtanh.pop %v2424
    %v2428 = vmul.f32 %v2426, 0.5
    %v2429 = vadd.f32 %v2428, 0.5
    %v2430 = vmul.f32 %v2427, 0.5
    %v2431 = vadd.f32 %v2430, 0.5
    %v2432 = vmul.f32 %v2429, %v2133
    %v2433 = vmul.f32 %v2429, %v2427
    %2435 = vrot.lane.b32.xlu0 %v2433, 64
    %v2436 = vpop.permute.xlu0 %2435
    %v2438 = vadd.f32 %v2432, %v2436
    %v2439 = vtanh.pop %v2438
    %v2440 = vmul.f32 %v2431, %v2439
    %2442 = vrot.lane.b32.xlu0 %v2440, 64
    %v2443 = vpop.permute.xlu0 %2442
    %2445 = vst.msk [vmem:[#allocation2 + $0x10] sm:$0xff] %vm936, %v2443
    %v2446 = vld [vmem:[%s13] sm:$0xff]
    %v2447 = vld [vmem:[%s13 + $0x8] sm:$0xff]
    %v2448 = vld [vmem:[%s13 + $0x10] sm:$0xff]
    %v2449 = vld [vmem:[%s13 + $0x18] sm:$0xff]
    %v2450 = vld [vmem:[%s13 + $0x20] sm:$0xff]
    %v2451 = vld [vmem:[%s13 + $0x28] sm:$0xff]
    %v2452 = vld [vmem:[%s13 + $0x30] sm:$0xff]
    %v2453 = vld [vmem:[%s13 + $0x38] sm:$0xff]
    %v2454 = vld [vmem:[%s13 + $0x40] sm:$0xff]
    %v2455 = vld [vmem:[%s13 + $0x48] sm:$0xff]
    %v2456 = vld [vmem:[%s13 + $0x50] sm:$0xff]
    %v2457 = vld [vmem:[%s13 + $0x58] sm:$0xff]
    %v2458 = vld [vmem:[%s13 + $0x60] sm:$0xff]
    %v2459 = vld [vmem:[%s13 + $0x68] sm:$0xff]
    %v2460 = vld [vmem:[%s13 + $0x70] sm:$0xff]
    %v2461 = vld [vmem:[%s13 + $0x78] sm:$0xff]
    %v2462 = vsel %vm936, %v2443, 0
    %2464 = vmatprep.subr.mxu0 %v2447
    %2465 = vmatpush1.msra.mxu0 %v2446
    %2466 = vmatprep.subr.mxu0 %v2449
    %2467 = vmatpush1.msra.mxu0 %v2448
    %2468 = vmatprep.subr.mxu0 %v2451
    %2469 = vmatpush1.msra.mxu0 %v2450
    %2470 = vmatprep.subr.mxu0 %v2453
    %2471 = vmatpush1.msra.mxu0 %v2452
    %2472 = vmatprep.subr.mxu0 %v2455
    %2473 = vmatpush1.msra.mxu0 %v2454
    %2474 = vmatprep.subr.mxu0 %v2457
    %2475 = vmatpush1.msra.mxu0 %v2456
    %2476 = vmatprep.subr.mxu0 %v2459
    %2477 = vmatpush1.msra.mxu0 %v2458
    %2478 = vmatprep.subr.mxu0 %v2461
    %2479 = vmatpush1.msra.mxu0 %v2460
    %2480 = vmatprep.subr.mxu0 0.0
    %2481 = vmatpush1.msra.mxu0 0.0
    %2482 = vmatprep.subr.mxu0 0.0
    %2483 = vmatpush1.msra.mxu0 0.0
    %2484 = vmatprep.subr.mxu0 0.0
    %2485 = vmatpush1.msra.mxu0 0.0
    %2486 = vmatprep.subr.mxu0 0.0
    %2487 = vmatpush1.msra.mxu0 0.0
    %2488 = vmatprep.subr.mxu0 0.0
    %2489 = vmatpush1.msra.mxu0 0.0
    %2490 = vmatprep.subr.mxu0 0.0
    %2491 = vmatpush1.msra.mxu0 0.0
    %2492 = vmatprep.subr.mxu0 0.0
    %2493 = vmatpush1.msra.mxu0 0.0
    %2494 = vmatprep.subr.mxu0 0.0
    %2495 = vmatpush1.msra.mxu0 0.0
    %2496 = vmatprep.subr.mxu0 0.0
    %2497 = vmatpush1.msra.mxu0 0.0
    %2498 = vmatprep.subr.mxu0 0.0
    %2499 = vmatpush1.msra.mxu0 0.0
    %2500 = vmatprep.subr.mxu0 0.0
    %2501 = vmatpush1.msra.mxu0 0.0
    %2502 = vmatprep.subr.mxu0 0.0
    %2503 = vmatpush1.msra.mxu0 0.0
    %2504 = vmatprep.subr.mxu0 0.0
    %2505 = vmatpush1.msra.mxu0 0.0
    %2506 = vmatprep.subr.mxu0 0.0
    %2507 = vmatpush1.msra.mxu0 0.0
    %2508 = vmatprep.subr.mxu0 0.0
    %2509 = vmatpush1.msra.mxu0 0.0
    %2510 = vmatprep.subr.mxu0 0.0
    %2511 = vmatpush1.msra.mxu0 0.0
    %2512 = vmatprep.subr.mxu0 0.0
    %2513 = vmatpush1.msra.mxu0 0.0
    %2514 = vmatprep.subr.mxu0 0.0
    %2515 = vmatpush1.msra.mxu0 0.0
    %2516 = vmatprep.subr.mxu0 0.0
    %2517 = vmatpush1.msra.mxu0 0.0
    %2518 = vmatprep.subr.mxu0 0.0
    %2519 = vmatpush1.msra.mxu0 0.0
    %2520 = vmatprep.subr.mxu0 0.0
    %2521 = vmatpush1.msra.mxu0 0.0
    %2522 = vmatprep.subr.mxu0 0.0
    %2523 = vmatpush1.msra.mxu0 0.0
    %2524 = vmatprep.subr.mxu0 0.0
    %2525 = vmatpush1.msra.mxu0 0.0
    %2526 = vmatprep.subr.mxu0 0.0
    %2527 = vmatpush1.msra.mxu0 0.0
    %2528 = vmatprep.mubr.f32.mxu0 0.0
    %2529 = vmatmul.mubr.f32.gmra.mrb[0].mxu0 %v2462
    %v2530 = vpop.f32.mrb[0].mxu0
    %v2531 = vadd.f32 %v1339, %v2530
    %v2532 = vpop.f32.mrb[0].mxu0
    %v2533 = vadd.f32 %v1343, %v2532
    %2534 = vdwg.mxu0
    %v2535 = vld [vmem:[%s10] sm:$0xff]
    %v2536 = vld [vmem:[%s10 + $0x8] sm:$0xff]
    %v2537 = vld [vmem:[%s10 + $0x10] sm:$0xff]
    %v2538 = vld [vmem:[%s10 + $0x18] sm:$0xff]
    %v2539 = vld [vmem:[%s10 + $0x20] sm:$0xff]
    %v2540 = vld [vmem:[%s10 + $0x28] sm:$0xff]
    %v2541 = vld [vmem:[%s10 + $0x30] sm:$0xff]
    %v2542 = vld [vmem:[%s10 + $0x38] sm:$0xff]
    %v2543 = vld [vmem:[%s10 + $0x40] sm:$0xff]
    %v2544 = vld [vmem:[%s10 + $0x48] sm:$0xff]
    %v2545 = vld [vmem:[%s10 + $0x50] sm:$0xff]
    %v2546 = vld [vmem:[%s10 + $0x58] sm:$0xff]
    %v2547 = vld [vmem:[%s10 + $0x60] sm:$0xff]
    %v2548 = vld [vmem:[%s10 + $0x68] sm:$0xff]
    %v2549 = vld [vmem:[%s10 + $0x70] sm:$0xff]
    %v2550 = vld [vmem:[%s10 + $0x78] sm:$0xff]
    %2551 = vmatprep.subr.mxu0 %v2536
    %2552 = vmatpush1.msra.mxu0 %v2535
    %2553 = vmatprep.subr.mxu0 %v2538
    %2554 = vmatpush1.msra.mxu0 %v2537
    %2555 = vmatprep.subr.mxu0 %v2540
    %2556 = vmatpush1.msra.mxu0 %v2539
    %2557 = vmatprep.subr.mxu0 %v2542
    %2558 = vmatpush1.msra.mxu0 %v2541
    %2559 = vmatprep.subr.mxu0 %v2544
    %2560 = vmatpush1.msra.mxu0 %v2543
    %2561 = vmatprep.subr.mxu0 %v2546
    %2562 = vmatpush1.msra.mxu0 %v2545
    %2563 = vmatprep.subr.mxu0 %v2548
    %2564 = vmatpush1.msra.mxu0 %v2547
    %2565 = vmatprep.subr.mxu0 %v2550
    %2566 = vmatpush1.msra.mxu0 %v2549
    %2567 = vmatprep.subr.mxu0 0.0
    %2568 = vmatpush1.msra.mxu0 0.0
    %2569 = vmatprep.subr.mxu0 0.0
    %2570 = vmatpush1.msra.mxu0 0.0
    %2571 = vmatprep.subr.mxu0 0.0
    %2572 = vmatpush1.msra.mxu0 0.0
    %2573 = vmatprep.subr.mxu0 0.0
    %2574 = vmatpush1.msra.mxu0 0.0
    %2575 = vmatprep.subr.mxu0 0.0
    %2576 = vmatpush1.msra.mxu0 0.0
    %2577 = vmatprep.subr.mxu0 0.0
    %2578 = vmatpush1.msra.mxu0 0.0
    %2579 = vmatprep.subr.mxu0 0.0
    %2580 = vmatpush1.msra.mxu0 0.0
    %2581 = vmatprep.subr.mxu0 0.0
    %2582 = vmatpush1.msra.mxu0 0.0
    %2583 = vmatprep.subr.mxu0 0.0
    %2584 = vmatpush1.msra.mxu0 0.0
    %2585 = vmatprep.subr.mxu0 0.0
    %2586 = vmatpush1.msra.mxu0 0.0
    %2587 = vmatprep.subr.mxu0 0.0
    %2588 = vmatpush1.msra.mxu0 0.0
    %2589 = vmatprep.subr.mxu0 0.0
    %2590 = vmatpush1.msra.mxu0 0.0
    %2591 = vmatprep.subr.mxu0 0.0
    %2592 = vmatpush1.msra.mxu0 0.0
    %2593 = vmatprep.subr.mxu0 0.0
    %2594 = vmatpush1.msra.mxu0 0.0
    %2595 = vmatprep.subr.mxu0 0.0
    %2596 = vmatpush1.msra.mxu0 0.0
    %2597 = vmatprep.subr.mxu0 0.0
    %2598 = vmatpush1.msra.mxu0 0.0
    %2599 = vmatprep.subr.mxu0 0.0
    %2600 = vmatpush1.msra.mxu0 0.0
    %2601 = vmatprep.subr.mxu0 0.0
    %2602 = vmatpush1.msra.mxu0 0.0
    %2603 = vmatprep.subr.mxu0 0.0
    %2604 = vmatpush1.msra.mxu0 0.0
    %2605 = vmatprep.subr.mxu0 0.0
    %2606 = vmatpush1.msra.mxu0 0.0
    %2607 = vmatprep.subr.mxu0 0.0
    %2608 = vmatpush1.msra.mxu0 0.0
    %2609 = vmatprep.subr.mxu0 0.0
    %2610 = vmatpush1.msra.mxu0 0.0
    %2611 = vmatprep.subr.mxu0 0.0
    %2612 = vmatpush1.msra.mxu0 0.0
    %2613 = vmatprep.subr.mxu0 0.0
    %2614 = vmatpush1.msra.mxu0 0.0
    %2615 = vmatprep.mubr.f32.mxu0 0.0
    %2616 = vmatmul.mubr.f32.gmra.mrb[0].mxu0 %v2353
    %v2617 = vpop.f32.mrb[0].mxu0
    %v2618 = vadd.f32 0.0, %v2617
    %v2619 = vpop.f32.mrb[0].mxu0
    %v2620 = vadd.f32 0.0, %v2619
    %2621 = vdwg.mxu0
    %v2622 = vadd.f32 %v1312, %v2618
    %v2623 = vadd.f32 %v1314, %v2620
    %v2624 = vtanh.pop %v2622
    %v2625 = vtanh.pop %v2623
    %v2626 = vmul.f32 %v2624, 0.5
    %v2627 = vadd.f32 %v2626, 0.5
    %v2628 = vmul.f32 %v2625, 0.5
    %v2629 = vadd.f32 %v2628, 0.5
    %v2630 = vmul.f32 %v2627, %v2331
    %v2631 = vmul.f32 %v2627, %v2625
    %2633 = vrot.lane.b32.xlu0 %v2631, 64
    %v2634 = vpop.permute.xlu0 %2633
    %v2636 = vadd.f32 %v2630, %v2634
    %v2637 = vtanh.pop %v2636
    %v2638 = vmul.f32 %v2629, %v2637
    %v2639 = vld [vmem:[%s12] sm:$0xff]
    %v2640 = vld [vmem:[%s12 + $0x8] sm:$0xff]
    %v2641 = vld [vmem:[%s12 + $0x10] sm:$0xff]
    %v2642 = vld [vmem:[%s12 + $0x18] sm:$0xff]
    %v2643 = vld [vmem:[%s12 + $0x20] sm:$0xff]
    %v2644 = vld [vmem:[%s12 + $0x28] sm:$0xff]
    %v2645 = vld [vmem:[%s12 + $0x30] sm:$0xff]
    %v2646 = vld [vmem:[%s12 + $0x38] sm:$0xff]
    %v2647 = vld [vmem:[%s12 + $0x40] sm:$0xff]
    %v2648 = vld [vmem:[%s12 + $0x48] sm:$0xff]
    %v2649 = vld [vmem:[%s12 + $0x50] sm:$0xff]
    %v2650 = vld [vmem:[%s12 + $0x58] sm:$0xff]
    %v2651 = vld [vmem:[%s12 + $0x60] sm:$0xff]
    %v2652 = vld [vmem:[%s12 + $0x68] sm:$0xff]
    %v2653 = vld [vmem:[%s12 + $0x70] sm:$0xff]
    %v2654 = vld [vmem:[%s12 + $0x78] sm:$0xff]
    %2656 = vrot.lane.b32.xlu0 %v2638, 64
    %v2657 = vpop.permute.xlu0 %2656
    %v2658 = vsel %vm936, %v2657, 0
    %2660 = vmatprep.subr.mxu0 %v2640
    %2661 = vmatpush1.msra.mxu0 %v2639
    %2662 = vmatprep.subr.mxu0 %v2642
    %2663 = vmatpush1.msra.mxu0 %v2641
    %2664 = vmatprep.subr.mxu0 %v2644
    %2665 = vmatpush1.msra.mxu0 %v2643
    %2666 = vmatprep.subr.mxu0 %v2646
    %2667 = vmatpush1.msra.mxu0 %v2645
    %2668 = vmatprep.subr.mxu0 %v2648
    %2669 = vmatpush1.msra.mxu0 %v2647
    %2670 = vmatprep.subr.mxu0 %v2650
    %2671 = vmatpush1.msra.mxu0 %v2649
    %2672 = vmatprep.subr.mxu0 %v2652
    %2673 = vmatpush1.msra.mxu0 %v2651
    %2674 = vmatprep.subr.mxu0 %v2654
    %2675 = vmatpush1.msra.mxu0 %v2653
    %2676 = vmatprep.subr.mxu0 0.0
    %2677 = vmatpush1.msra.mxu0 0.0
    %2678 = vmatprep.subr.mxu0 0.0
    %2679 = vmatpush1.msra.mxu0 0.0
    %2680 = vmatprep.subr.mxu0 0.0
    %2681 = vmatpush1.msra.mxu0 0.0
    %2682 = vmatprep.subr.mxu0 0.0
    %2683 = vmatpush1.msra.mxu0 0.0
    %2684 = vmatprep.subr.mxu0 0.0
    %2685 = vmatpush1.msra.mxu0 0.0
    %2686 = vmatprep.subr.mxu0 0.0
    %2687 = vmatpush1.msra.mxu0 0.0
    %2688 = vmatprep.subr.mxu0 0.0
    %2689 = vmatpush1.msra.mxu0 0.0
    %2690 = vmatprep.subr.mxu0 0.0
    %2691 = vmatpush1.msra.mxu0 0.0
    %2692 = vmatprep.subr.mxu0 0.0
    %2693 = vmatpush1.msra.mxu0 0.0
    %2694 = vmatprep.subr.mxu0 0.0
    %2695 = vmatpush1.msra.mxu0 0.0
    %2696 = vmatprep.subr.mxu0 0.0
    %2697 = vmatpush1.msra.mxu0 0.0
    %2698 = vmatprep.subr.mxu0 0.0
    %2699 = vmatpush1.msra.mxu0 0.0
    %2700 = vmatprep.subr.mxu0 0.0
    %2701 = vmatpush1.msra.mxu0 0.0
    %2702 = vmatprep.subr.mxu0 0.0
    %2703 = vmatpush1.msra.mxu0 0.0
    %2704 = vmatprep.subr.mxu0 0.0
    %2705 = vmatpush1.msra.mxu0 0.0
    %2706 = vmatprep.subr.mxu0 0.0
    %2707 = vmatpush1.msra.mxu0 0.0
    %2708 = vmatprep.subr.mxu0 0.0
    %2709 = vmatpush1.msra.mxu0 0.0
    %2710 = vmatprep.subr.mxu0 0.0
    %2711 = vmatpush1.msra.mxu0 0.0
    %2712 = vmatprep.subr.mxu0 0.0
    %2713 = vmatpush1.msra.mxu0 0.0
    %2714 = vmatprep.subr.mxu0 0.0
    %2715 = vmatpush1.msra.mxu0 0.0
    %2716 = vmatprep.subr.mxu0 0.0
    %2717 = vmatpush1.msra.mxu0 0.0
    %2718 = vmatprep.subr.mxu0 0.0
    %2719 = vmatpush1.msra.mxu0 0.0
    %2720 = vmatprep.subr.mxu0 0.0
    %2721 = vmatpush1.msra.mxu0 0.0
    %2722 = vmatprep.subr.mxu0 0.0
    %2723 = vmatpush1.msra.mxu0 0.0
    %2724 = vmatprep.mubr.f32.mxu0 0.0
    %2725 = vmatmul.mubr.f32.gmra.mrb[0].mxu0 %v2658
    %v2726 = vpop.f32.mrb[0].mxu0
    %v2727 = vadd.f32 %v2531, %v2726
    %v2728 = vpop.f32.mrb[0].mxu0
    %v2729 = vadd.f32 %v2533, %v2728
    %2730 = vdwg.mxu0
    %v2731 = vtanh.pop %v2727
    %v2732 = vtanh.pop %v2729
    %v2733 = vmul.f32 %v2731, 0.5
    %v2734 = vadd.f32 %v2733, 0.5
    %v2735 = vmul.f32 %v2732, 0.5
    %v2736 = vadd.f32 %v2735, 0.5
    %v2737 = vmul.f32 %v2734, %v2438
    %v2738 = vmul.f32 %v2734, %v2732
    %2740 = vrot.lane.b32.xlu0 %v2738, 64
    %v2741 = vpop.permute.xlu0 %2740
    %v2743 = vadd.f32 %v2737, %v2741
    %v2744 = vtanh.pop %v2743
    %v2745 = vmul.f32 %v2736, %v2744
    %2747 = vrot.lane.b32.xlu0 %v2745, 64
    %v2748 = vpop.permute.xlu0 %2747
    %2750 = vst.msk [vmem:[#allocation2 + $0x18] sm:$0xff] %vm936, %v2748
    %v2751 = vld [vmem:[%s13] sm:$0xff]
    %v2752 = vld [vmem:[%s13 + $0x8] sm:$0xff]
    %v2753 = vld [vmem:[%s13 + $0x10] sm:$0xff]
    %v2754 = vld [vmem:[%s13 + $0x18] sm:$0xff]
    %v2755 = vld [vmem:[%s13 + $0x20] sm:$0xff]
    %v2756 = vld [vmem:[%s13 + $0x28] sm:$0xff]
    %v2757 = vld [vmem:[%s13 + $0x30] sm:$0xff]
    %v2758 = vld [vmem:[%s13 + $0x38] sm:$0xff]
    %v2759 = vld [vmem:[%s13 + $0x40] sm:$0xff]
    %v2760 = vld [vmem:[%s13 + $0x48] sm:$0xff]
    %v2761 = vld [vmem:[%s13 + $0x50] sm:$0xff]
    %v2762 = vld [vmem:[%s13 + $0x58] sm:$0xff]
    %v2763 = vld [vmem:[%s13 + $0x60] sm:$0xff]
    %v2764 = vld [vmem:[%s13 + $0x68] sm:$0xff]
    %v2765 = vld [vmem:[%s13 + $0x70] sm:$0xff]
    %v2766 = vld [vmem:[%s13 + $0x78] sm:$0xff]
    %v2767 = vsel %vm936, %v2748, 0
    %2769 = vmatprep.subr.mxu0 %v2752
    %2770 = vmatpush1.msra.mxu0 %v2751
    %2771 = vmatprep.subr.mxu0 %v2754
    %2772 = vmatpush1.msra.mxu0 %v2753
    %2773 = vmatprep.subr.mxu0 %v2756
    %2774 = vmatpush1.msra.mxu0 %v2755
    %2775 = vmatprep.subr.mxu0 %v2758
    %2776 = vmatpush1.msra.mxu0 %v2757
    %2777 = vmatprep.subr.mxu0 %v2760
    %2778 = vmatpush1.msra.mxu0 %v2759
    %2779 = vmatprep.subr.mxu0 %v2762
    %2780 = vmatpush1.msra.mxu0 %v2761
    %2781 = vmatprep.subr.mxu0 %v2764
    %2782 = vmatpush1.msra.mxu0 %v2763
    %2783 = vmatprep.subr.mxu0 %v2766
    %2784 = vmatpush1.msra.mxu0 %v2765
    %2785 = vmatprep.subr.mxu0 0.0
    %2786 = vmatpush1.msra.mxu0 0.0
    %2787 = vmatprep.subr.mxu0 0.0
    %2788 = vmatpush1.msra.mxu0 0.0
    %2789 = vmatprep.subr.mxu0 0.0
    %2790 = vmatpush1.msra.mxu0 0.0
    %2791 = vmatprep.subr.mxu0 0.0
    %2792 = vmatpush1.msra.mxu0 0.0
    %2793 = vmatprep.subr.mxu0 0.0
    %2794 = vmatpush1.msra.mxu0 0.0
    %2795 = vmatprep.subr.mxu0 0.0
    %2796 = vmatpush1.msra.mxu0 0.0
    %2797 = vmatprep.subr.mxu0 0.0
    %2798 = vmatpush1.msra.mxu0 0.0
    %2799 = vmatprep.subr.mxu0 0.0
    %2800 = vmatpush1.msra.mxu0 0.0
    %2801 = vmatprep.subr.mxu0 0.0
    %2802 = vmatpush1.msra.mxu0 0.0
    %2803 = vmatprep.subr.mxu0 0.0
    %2804 = vmatpush1.msra.mxu0 0.0
    %2805 = vmatprep.subr.mxu0 0.0
    %2806 = vmatpush1.msra.mxu0 0.0
    %2807 = vmatprep.subr.mxu0 0.0
    %2808 = vmatpush1.msra.mxu0 0.0
    %2809 = vmatprep.subr.mxu0 0.0
    %2810 = vmatpush1.msra.mxu0 0.0
    %2811 = vmatprep.subr.mxu0 0.0
    %2812 = vmatpush1.msra.mxu0 0.0
    %2813 = vmatprep.subr.mxu0 0.0
    %2814 = vmatpush1.msra.mxu0 0.0
    %2815 = vmatprep.subr.mxu0 0.0
    %2816 = vmatpush1.msra.mxu0 0.0
    %2817 = vmatprep.subr.mxu0 0.0
    %2818 = vmatpush1.msra.mxu0 0.0
    %2819 = vmatprep.subr.mxu0 0.0
    %2820 = vmatpush1.msra.mxu0 0.0
    %2821 = vmatprep.subr.mxu0 0.0
    %2822 = vmatpush1.msra.mxu0 0.0
    %2823 = vmatprep.subr.mxu0 0.0
    %2824 = vmatpush1.msra.mxu0 0.0
    %2825 = vmatprep.subr.mxu0 0.0
    %2826 = vmatpush1.msra.mxu0 0.0
    %2827 = vmatprep.subr.mxu0 0.0
    %2828 = vmatpush1.msra.mxu0 0.0
    %2829 = vmatprep.subr.mxu0 0.0
    %2830 = vmatpush1.msra.mxu0 0.0
    %2831 = vmatprep.subr.mxu0 0.0
    %2832 = vmatpush1.msra.mxu0 0.0
    %2833 = vmatprep.mubr.f32.mxu0 0.0
    %2834 = vmatmul.mubr.f32.gmra.mrb[0].mxu0 %v2767
    %v2835 = vpop.f32.mrb[0].mxu0
    %v2836 = vadd.f32 %v1339, %v2835
    %v2837 = vpop.f32.mrb[0].mxu0
    %v2838 = vadd.f32 %v1343, %v2837
    %2839 = vdwg.mxu0
    %v2840 = vld [vmem:[%s10] sm:$0xff]
    %v2841 = vld [vmem:[%s10 + $0x8] sm:$0xff]
    %v2842 = vld [vmem:[%s10 + $0x10] sm:$0xff]
    %v2843 = vld [vmem:[%s10 + $0x18] sm:$0xff]
    %v2844 = vld [vmem:[%s10 + $0x20] sm:$0xff]
    %v2845 = vld [vmem:[%s10 + $0x28] sm:$0xff]
    %v2846 = vld [vmem:[%s10 + $0x30] sm:$0xff]
    %v2847 = vld [vmem:[%s10 + $0x38] sm:$0xff]
    %v2848 = vld [vmem:[%s10 + $0x40] sm:$0xff]
    %v2849 = vld [vmem:[%s10 + $0x48] sm:$0xff]
    %v2850 = vld [vmem:[%s10 + $0x50] sm:$0xff]
    %v2851 = vld [vmem:[%s10 + $0x58] sm:$0xff]
    %v2852 = vld [vmem:[%s10 + $0x60] sm:$0xff]
    %v2853 = vld [vmem:[%s10 + $0x68] sm:$0xff]
    %v2854 = vld [vmem:[%s10 + $0x70] sm:$0xff]
    %v2855 = vld [vmem:[%s10 + $0x78] sm:$0xff]
    %2856 = vmatprep.subr.mxu0 %v2841
    %2857 = vmatpush1.msra.mxu0 %v2840
    %2858 = vmatprep.subr.mxu0 %v2843
    %2859 = vmatpush1.msra.mxu0 %v2842
    %2860 = vmatprep.subr.mxu0 %v2845
    %2861 = vmatpush1.msra.mxu0 %v2844
    %2862 = vmatprep.subr.mxu0 %v2847
    %2863 = vmatpush1.msra.mxu0 %v2846
    %2864 = vmatprep.subr.mxu0 %v2849
    %2865 = vmatpush1.msra.mxu0 %v2848
    %2866 = vmatprep.subr.mxu0 %v2851
    %2867 = vmatpush1.msra.mxu0 %v2850
    %2868 = vmatprep.subr.mxu0 %v2853
    %2869 = vmatpush1.msra.mxu0 %v2852
    %2870 = vmatprep.subr.mxu0 %v2855
    %2871 = vmatpush1.msra.mxu0 %v2854
    %2872 = vmatprep.subr.mxu0 0.0
    %2873 = vmatpush1.msra.mxu0 0.0
    %2874 = vmatprep.subr.mxu0 0.0
    %2875 = vmatpush1.msra.mxu0 0.0
    %2876 = vmatprep.subr.mxu0 0.0
    %2877 = vmatpush1.msra.mxu0 0.0
    %2878 = vmatprep.subr.mxu0 0.0
    %2879 = vmatpush1.msra.mxu0 0.0
    %2880 = vmatprep.subr.mxu0 0.0
    %2881 = vmatpush1.msra.mxu0 0.0
    %2882 = vmatprep.subr.mxu0 0.0
    %2883 = vmatpush1.msra.mxu0 0.0
    %2884 = vmatprep.subr.mxu0 0.0
    %2885 = vmatpush1.msra.mxu0 0.0
    %2886 = vmatprep.subr.mxu0 0.0
    %2887 = vmatpush1.msra.mxu0 0.0
    %2888 = vmatprep.subr.mxu0 0.0
    %2889 = vmatpush1.msra.mxu0 0.0
    %2890 = vmatprep.subr.mxu0 0.0
    %2891 = vmatpush1.msra.mxu0 0.0
    %2892 = vmatprep.subr.mxu0 0.0
    %2893 = vmatpush1.msra.mxu0 0.0
    %2894 = vmatprep.subr.mxu0 0.0
    %2895 = vmatpush1.msra.mxu0 0.0
    %2896 = vmatprep.subr.mxu0 0.0
    %2897 = vmatpush1.msra.mxu0 0.0
    %2898 = vmatprep.subr.mxu0 0.0
    %2899 = vmatpush1.msra.mxu0 0.0
    %2900 = vmatprep.subr.mxu0 0.0
    %2901 = vmatpush1.msra.mxu0 0.0
    %2902 = vmatprep.subr.mxu0 0.0
    %2903 = vmatpush1.msra.mxu0 0.0
    %2904 = vmatprep.subr.mxu0 0.0
    %2905 = vmatpush1.msra.mxu0 0.0
    %2906 = vmatprep.subr.mxu0 0.0
    %2907 = vmatpush1.msra.mxu0 0.0
    %2908 = vmatprep.subr.mxu0 0.0
    %2909 = vmatpush1.msra.mxu0 0.0
    %2910 = vmatprep.subr.mxu0 0.0
    %2911 = vmatpush1.msra.mxu0 0.0
    %2912 = vmatprep.subr.mxu0 0.0
    %2913 = vmatpush1.msra.mxu0 0.0
    %2914 = vmatprep.subr.mxu0 0.0
    %2915 = vmatpush1.msra.mxu0 0.0
    %2916 = vmatprep.subr.mxu0 0.0
    %2917 = vmatpush1.msra.mxu0 0.0
    %2918 = vmatprep.subr.mxu0 0.0
    %2919 = vmatpush1.msra.mxu0 0.0
    %2920 = vmatprep.mubr.f32.mxu0 0.0
    %2921 = vmatmul.mubr.f32.gmra.mrb[0].mxu0 %v2658
    %v2922 = vpop.f32.mrb[0].mxu0
    %v2923 = vadd.f32 0.0, %v2922
    %v2924 = vpop.f32.mrb[0].mxu0
    %v2925 = vadd.f32 0.0, %v2924
    %2926 = vdwg.mxu0
    %v2927 = vadd.f32 %v1318, %v2923
    %v2928 = vadd.f32 %v1320, %v2925
    %v2929 = vtanh.pop %v2927
    %v2930 = vtanh.pop %v2928
    %v2931 = vmul.f32 %v2929, 0.5
    %v2932 = vadd.f32 %v2931, 0.5
    %v2933 = vmul.f32 %v2930, 0.5
    %v2934 = vadd.f32 %v2933, 0.5
    %v2935 = vmul.f32 %v2932, %v2636
    %v2936 = vmul.f32 %v2932, %v2930
    %2938 = vrot.lane.b32.xlu0 %v2936, 64
    %v2939 = vpop.permute.xlu0 %2938
    %v2941 = vadd.f32 %v2935, %v2939
    %v2942 = vtanh.pop %v2941
    %v2943 = vmul.f32 %v2934, %v2942
    %v2944 = vld [vmem:[%s12] sm:$0xff]
    %v2945 = vld [vmem:[%s12 + $0x8] sm:$0xff]
    %v2946 = vld [vmem:[%s12 + $0x10] sm:$0xff]
    %v2947 = vld [vmem:[%s12 + $0x18] sm:$0xff]
    %v2948 = vld [vmem:[%s12 + $0x20] sm:$0xff]
    %v2949 = vld [vmem:[%s12 + $0x28] sm:$0xff]
    %v2950 = vld [vmem:[%s12 + $0x30] sm:$0xff]
    %v2951 = vld [vmem:[%s12 + $0x38] sm:$0xff]
    %v2952 = vld [vmem:[%s12 + $0x40] sm:$0xff]
    %v2953 = vld [vmem:[%s12 + $0x48] sm:$0xff]
    %v2954 = vld [vmem:[%s12 + $0x50] sm:$0xff]
    %v2955 = vld [vmem:[%s12 + $0x58] sm:$0xff]
    %v2956 = vld [vmem:[%s12 + $0x60] sm:$0xff]
    %v2957 = vld [vmem:[%s12 + $0x68] sm:$0xff]
    %v2958 = vld [vmem:[%s12 + $0x70] sm:$0xff]
    %v2959 = vld [vmem:[%s12 + $0x78] sm:$0xff]
    %2961 = vrot.lane.b32.xlu0 %v2943, 64
    %v2962 = vpop.permute.xlu0 %2961
    %v2963 = vsel %vm936, %v2962, 0
    %2965 = vmatprep.subr.mxu0 %v2945
    %2966 = vmatpush1.msra.mxu0 %v2944
    %2967 = vmatprep.subr.mxu0 %v2947
    %2968 = vmatpush1.msra.mxu0 %v2946
    %2969 = vmatprep.subr.mxu0 %v2949
    %2970 = vmatpush1.msra.mxu0 %v2948
    %2971 = vmatprep.subr.mxu0 %v2951
    %2972 = vmatpush1.msra.mxu0 %v2950
    %2973 = vmatprep.subr.mxu0 %v2953
    %2974 = vmatpush1.msra.mxu0 %v2952
    %2975 = vmatprep.subr.mxu0 %v2955
    %2976 = vmatpush1.msra.mxu0 %v2954
    %2977 = vmatprep.subr.mxu0 %v2957
    %2978 = vmatpush1.msra.mxu0 %v2956
    %2979 = vmatprep.subr.mxu0 %v2959
    %2980 = vmatpush1.msra.mxu0 %v2958
    %2981 = vmatprep.subr.mxu0 0.0
    %2982 = vmatpush1.msra.mxu0 0.0
    %2983 = vmatprep.subr.mxu0 0.0
    %2984 = vmatpush1.msra.mxu0 0.0
    %2985 = vmatprep.subr.mxu0 0.0
    %2986 = vmatpush1.msra.mxu0 0.0
    %2987 = vmatprep.subr.mxu0 0.0
    %2988 = vmatpush1.msra.mxu0 0.0
    %2989 = vmatprep.subr.mxu0 0.0
    %2990 = vmatpush1.msra.mxu0 0.0
    %2991 = vmatprep.subr.mxu0 0.0
    %2992 = vmatpush1.msra.mxu0 0.0
    %2993 = vmatprep.subr.mxu0 0.0
    %2994 = vmatpush1.msra.mxu0 0.0
    %2995 = vmatprep.subr.mxu0 0.0
    %2996 = vmatpush1.msra.mxu0 0.0
    %2997 = vmatprep.subr.mxu0 0.0
    %2998 = vmatpush1.msra.mxu0 0.0
    %2999 = vmatprep.subr.mxu0 0.0
    %3000 = vmatpush1.msra.mxu0 0.0
    %3001 = vmatprep.subr.mxu0 0.0
    %3002 = vmatpush1.msra.mxu0 0.0
    %3003 = vmatprep.subr.mxu0 0.0
    %3004 = vmatpush1.msra.mxu0 0.0
    %3005 = vmatprep.subr.mxu0 0.0
    %3006 = vmatpush1.msra.mxu0 0.0
    %3007 = vmatprep.subr.mxu0 0.0
    %3008 = vmatpush1.msra.mxu0 0.0
    %3009 = vmatprep.subr.mxu0 0.0
    %3010 = vmatpush1.msra.mxu0 0.0
    %3011 = vmatprep.subr.mxu0 0.0
    %3012 = vmatpush1.msra.mxu0 0.0
    %3013 = vmatprep.subr.mxu0 0.0
    %3014 = vmatpush1.msra.mxu0 0.0
    %3015 = vmatprep.subr.mxu0 0.0
    %3016 = vmatpush1.msra.mxu0 0.0
    %3017 = vmatprep.subr.mxu0 0.0
    %3018 = vmatpush1.msra.mxu0 0.0
    %3019 = vmatprep.subr.mxu0 0.0
    %3020 = vmatpush1.msra.mxu0 0.0
    %3021 = vmatprep.subr.mxu0 0.0
    %3022 = vmatpush1.msra.mxu0 0.0
    %3023 = vmatprep.subr.mxu0 0.0
    %3024 = vmatpush1.msra.mxu0 0.0
    %3025 = vmatprep.subr.mxu0 0.0
    %3026 = vmatpush1.msra.mxu0 0.0
    %3027 = vmatprep.subr.mxu0 0.0
    %3028 = vmatpush1.msra.mxu0 0.0
    %3029 = vmatprep.mubr.f32.mxu0 0.0
    %3030 = vmatmul.mubr.f32.gmra.mrb[0].mxu0 %v2963
    %v3031 = vpop.f32.mrb[0].mxu0
    %v3032 = vadd.f32 %v2836, %v3031
    %v3033 = vpop.f32.mrb[0].mxu0
    %v3034 = vadd.f32 %v2838, %v3033
    %3035 = vdwg.mxu0
    %v3036 = vtanh.pop %v3032
    %v3037 = vtanh.pop %v3034
    %v3038 = vmul.f32 %v3036, 0.5
    %v3039 = vadd.f32 %v3038, 0.5
    %v3040 = vmul.f32 %v3037, 0.5
    %v3041 = vadd.f32 %v3040, 0.5
    %v3042 = vmul.f32 %v3039, %v2743
    %v3043 = vmul.f32 %v3039, %v3037
    %3045 = vrot.lane.b32.xlu0 %v3043, 64
    %v3046 = vpop.permute.xlu0 %3045
    %v3048 = vadd.f32 %v3042, %v3046
    %v3049 = vtanh.pop %v3048
    %v3050 = vmul.f32 %v3041, %v3049
    %3052 = vrot.lane.b32.xlu0 %v3050, 64
    %v3053 = vpop.permute.xlu0 %3052
    %3055 = vst.msk [vmem:[#allocation2 + $0x20] sm:$0xff] %vm936, %v3053
    %v3056 = vld [vmem:[%s13] sm:$0xff]
    %v3057 = vld [vmem:[%s13 + $0x8] sm:$0xff]
    %v3058 = vld [vmem:[%s13 + $0x10] sm:$0xff]
    %v3059 = vld [vmem:[%s13 + $0x18] sm:$0xff]
    %v3060 = vld [vmem:[%s13 + $0x20] sm:$0xff]
    %v3061 = vld [vmem:[%s13 + $0x28] sm:$0xff]
    %v3062 = vld [vmem:[%s13 + $0x30] sm:$0xff]
    %v3063 = vld [vmem:[%s13 + $0x38] sm:$0xff]
    %v3064 = vld [vmem:[%s13 + $0x40] sm:$0xff]
    %v3065 = vld [vmem:[%s13 + $0x48] sm:$0xff]
    %v3066 = vld [vmem:[%s13 + $0x50] sm:$0xff]
    %v3067 = vld [vmem:[%s13 + $0x58] sm:$0xff]
    %v3068 = vld [vmem:[%s13 + $0x60] sm:$0xff]
    %v3069 = vld [vmem:[%s13 + $0x68] sm:$0xff]
    %v3070 = vld [vmem:[%s13 + $0x70] sm:$0xff]
    %v3071 = vld [vmem:[%s13 + $0x78] sm:$0xff]
    %v3072 = vsel %vm936, %v3053, 0
    %3074 = vmatprep.subr.mxu0 %v3057
    %3075 = vmatpush1.msra.mxu0 %v3056
    %3076 = vmatprep.subr.mxu0 %v3059
    %3077 = vmatpush1.msra.mxu0 %v3058
    %3078 = vmatprep.subr.mxu0 %v3061
    %3079 = vmatpush1.msra.mxu0 %v3060
    %3080 = vmatprep.subr.mxu0 %v3063
    %3081 = vmatpush1.msra.mxu0 %v3062
    %3082 = vmatprep.subr.mxu0 %v3065
    %3083 = vmatpush1.msra.mxu0 %v3064
    %3084 = vmatprep.subr.mxu0 %v3067
    %3085 = vmatpush1.msra.mxu0 %v3066
    %3086 = vmatprep.subr.mxu0 %v3069
    %3087 = vmatpush1.msra.mxu0 %v3068
    %3088 = vmatprep.subr.mxu0 %v3071
    %3089 = vmatpush1.msra.mxu0 %v3070
    %3090 = vmatprep.subr.mxu0 0.0
    %3091 = vmatpush1.msra.mxu0 0.0
    %3092 = vmatprep.subr.mxu0 0.0
    %3093 = vmatpush1.msra.mxu0 0.0
    %3094 = vmatprep.subr.mxu0 0.0
    %3095 = vmatpush1.msra.mxu0 0.0
    %3096 = vmatprep.subr.mxu0 0.0
    %3097 = vmatpush1.msra.mxu0 0.0
    %3098 = vmatprep.subr.mxu0 0.0
    %3099 = vmatpush1.msra.mxu0 0.0
    %3100 = vmatprep.subr.mxu0 0.0
    %3101 = vmatpush1.msra.mxu0 0.0
    %3102 = vmatprep.subr.mxu0 0.0
    %3103 = vmatpush1.msra.mxu0 0.0
    %3104 = vmatprep.subr.mxu0 0.0
    %3105 = vmatpush1.msra.mxu0 0.0
    %3106 = vmatprep.subr.mxu0 0.0
    %3107 = vmatpush1.msra.mxu0 0.0
    %3108 = vmatprep.subr.mxu0 0.0
    %3109 = vmatpush1.msra.mxu0 0.0
    %3110 = vmatprep.subr.mxu0 0.0
    %3111 = vmatpush1.msra.mxu0 0.0
    %3112 = vmatprep.subr.mxu0 0.0
    %3113 = vmatpush1.msra.mxu0 0.0
    %3114 = vmatprep.subr.mxu0 0.0
    %3115 = vmatpush1.msra.mxu0 0.0
    %3116 = vmatprep.subr.mxu0 0.0
    %3117 = vmatpush1.msra.mxu0 0.0
    %3118 = vmatprep.subr.mxu0 0.0
    %3119 = vmatpush1.msra.mxu0 0.0
    %3120 = vmatprep.subr.mxu0 0.0
    %3121 = vmatpush1.msra.mxu0 0.0
    %3122 = vmatprep.subr.mxu0 0.0
    %3123 = vmatpush1.msra.mxu0 0.0
    %3124 = vmatprep.subr.mxu0 0.0
    %3125 = vmatpush1.msra.mxu0 0.0
    %3126 = vmatprep.subr.mxu0 0.0
    %3127 = vmatpush1.msra.mxu0 0.0
    %3128 = vmatprep.subr.mxu0 0.0
    %3129 = vmatpush1.msra.mxu0 0.0
    %3130 = vmatprep.subr.mxu0 0.0
    %3131 = vmatpush1.msra.mxu0 0.0
    %3132 = vmatprep.subr.mxu0 0.0
    %3133 = vmatpush1.msra.mxu0 0.0
    %3134 = vmatprep.subr.mxu0 0.0
    %3135 = vmatpush1.msra.mxu0 0.0
    %3136 = vmatprep.subr.mxu0 0.0
    %3137 = vmatpush1.msra.mxu0 0.0
    %3138 = vmatprep.mubr.f32.mxu0 0.0
    %3139 = vmatmul.mubr.f32.gmra.mrb[0].mxu0 %v3072
    %v3140 = vpop.f32.mrb[0].mxu0
    %v3141 = vadd.f32 %v1339, %v3140
    %v3142 = vpop.f32.mrb[0].mxu0
    %v3143 = vadd.f32 %v1343, %v3142
    %3144 = vdwg.mxu0
    %v3145 = vld [vmem:[%s10] sm:$0xff]
    %v3146 = vld [vmem:[%s10 + $0x8] sm:$0xff]
    %v3147 = vld [vmem:[%s10 + $0x10] sm:$0xff]
    %v3148 = vld [vmem:[%s10 + $0x18] sm:$0xff]
    %v3149 = vld [vmem:[%s10 + $0x20] sm:$0xff]
    %v3150 = vld [vmem:[%s10 + $0x28] sm:$0xff]
    %v3151 = vld [vmem:[%s10 + $0x30] sm:$0xff]
    %v3152 = vld [vmem:[%s10 + $0x38] sm:$0xff]
    %v3153 = vld [vmem:[%s10 + $0x40] sm:$0xff]
    %v3154 = vld [vmem:[%s10 + $0x48] sm:$0xff]
    %v3155 = vld [vmem:[%s10 + $0x50] sm:$0xff]
    %v3156 = vld [vmem:[%s10 + $0x58] sm:$0xff]
    %v3157 = vld [vmem:[%s10 + $0x60] sm:$0xff]
    %v3158 = vld [vmem:[%s10 + $0x68] sm:$0xff]
    %v3159 = vld [vmem:[%s10 + $0x70] sm:$0xff]
    %v3160 = vld [vmem:[%s10 + $0x78] sm:$0xff]
    %3161 = vmatprep.subr.mxu0 %v3146
    %3162 = vmatpush1.msra.mxu0 %v3145
    %3163 = vmatprep.subr.mxu0 %v3148
    %3164 = vmatpush1.msra.mxu0 %v3147
    %3165 = vmatprep.subr.mxu0 %v3150
    %3166 = vmatpush1.msra.mxu0 %v3149
    %3167 = vmatprep.subr.mxu0 %v3152
    %3168 = vmatpush1.msra.mxu0 %v3151
    %3169 = vmatprep.subr.mxu0 %v3154
    %3170 = vmatpush1.msra.mxu0 %v3153
    %3171 = vmatprep.subr.mxu0 %v3156
    %3172 = vmatpush1.msra.mxu0 %v3155
    %3173 = vmatprep.subr.mxu0 %v3158
    %3174 = vmatpush1.msra.mxu0 %v3157
    %3175 = vmatprep.subr.mxu0 %v3160
    %3176 = vmatpush1.msra.mxu0 %v3159
    %3177 = vmatprep.subr.mxu0 0.0
    %3178 = vmatpush1.msra.mxu0 0.0
    %3179 = vmatprep.subr.mxu0 0.0
    %3180 = vmatpush1.msra.mxu0 0.0
    %3181 = vmatprep.subr.mxu0 0.0
    %3182 = vmatpush1.msra.mxu0 0.0
    %3183 = vmatprep.subr.mxu0 0.0
    %3184 = vmatpush1.msra.mxu0 0.0
    %3185 = vmatprep.subr.mxu0 0.0
    %3186 = vmatpush1.msra.mxu0 0.0
    %3187 = vmatprep.subr.mxu0 0.0
    %3188 = vmatpush1.msra.mxu0 0.0
    %3189 = vmatprep.subr.mxu0 0.0
    %3190 = vmatpush1.msra.mxu0 0.0
    %3191 = vmatprep.subr.mxu0 0.0
    %3192 = vmatpush1.msra.mxu0 0.0
    %3193 = vmatprep.subr.mxu0 0.0
    %3194 = vmatpush1.msra.mxu0 0.0
    %3195 = vmatprep.subr.mxu0 0.0
    %3196 = vmatpush1.msra.mxu0 0.0
    %3197 = vmatprep.subr.mxu0 0.0
    %3198 = vmatpush1.msra.mxu0 0.0
    %3199 = vmatprep.subr.mxu0 0.0
    %3200 = vmatpush1.msra.mxu0 0.0
    %3201 = vmatprep.subr.mxu0 0.0
    %3202 = vmatpush1.msra.mxu0 0.0
    %3203 = vmatprep.subr.mxu0 0.0
    %3204 = vmatpush1.msra.mxu0 0.0
    %3205 = vmatprep.subr.mxu0 0.0
    %3206 = vmatpush1.msra.mxu0 0.0
    %3207 = vmatprep.subr.mxu0 0.0
    %3208 = vmatpush1.msra.mxu0 0.0
    %3209 = vmatprep.subr.mxu0 0.0
    %3210 = vmatpush1.msra.mxu0 0.0
    %3211 = vmatprep.subr.mxu0 0.0
    %3212 = vmatpush1.msra.mxu0 0.0
    %3213 = vmatprep.subr.mxu0 0.0
    %3214 = vmatpush1.msra.mxu0 0.0
    %3215 = vmatprep.subr.mxu0 0.0
    %3216 = vmatpush1.msra.mxu0 0.0
    %3217 = vmatprep.subr.mxu0 0.0
    %3218 = vmatpush1.msra.mxu0 0.0
    %3219 = vmatprep.subr.mxu0 0.0
    %3220 = vmatpush1.msra.mxu0 0.0
    %3221 = vmatprep.subr.mxu0 0.0
    %3222 = vmatpush1.msra.mxu0 0.0
    %3223 = vmatprep.subr.mxu0 0.0
    %3224 = vmatpush1.msra.mxu0 0.0
    %3225 = vmatprep.mubr.f32.mxu0 0.0
    %3226 = vmatmul.mubr.f32.gmra.mrb[0].mxu0 %v2963
    %v3227 = vpop.f32.mrb[0].mxu0
    %v3228 = vadd.f32 0.0, %v3227
    %v3229 = vpop.f32.mrb[0].mxu0
    %v3230 = vadd.f32 0.0, %v3229
    %3231 = vdwg.mxu0
    %v3232 = vadd.f32 %v1324, %v3228
    %v3233 = vadd.f32 %v1326, %v3230
    %v3234 = vtanh.pop %v3232
    %v3235 = vtanh.pop %v3233
    %v3236 = vmul.f32 %v3234, 0.5
    %v3237 = vadd.f32 %v3236, 0.5
    %v3238 = vmul.f32 %v3235, 0.5
    %v3239 = vadd.f32 %v3238, 0.5
    %v3240 = vmul.f32 %v3237, %v2941
    %v3241 = vmul.f32 %v3237, %v3235
    %3243 = vrot.lane.b32.xlu0 %v3241, 64
    %v3244 = vpop.permute.xlu0 %3243
    %v3246 = vadd.f32 %v3240, %v3244
    %v3247 = vtanh.pop %v3246
    %v3248 = vmul.f32 %v3239, %v3247
    %v3249 = vld [vmem:[%s12] sm:$0xff]
    %v3250 = vld [vmem:[%s12 + $0x8] sm:$0xff]
    %v3251 = vld [vmem:[%s12 + $0x10] sm:$0xff]
    %v3252 = vld [vmem:[%s12 + $0x18] sm:$0xff]
    %v3253 = vld [vmem:[%s12 + $0x20] sm:$0xff]
    %v3254 = vld [vmem:[%s12 + $0x28] sm:$0xff]
    %v3255 = vld [vmem:[%s12 + $0x30] sm:$0xff]
    %v3256 = vld [vmem:[%s12 + $0x38] sm:$0xff]
    %v3257 = vld [vmem:[%s12 + $0x40] sm:$0xff]
    %v3258 = vld [vmem:[%s12 + $0x48] sm:$0xff]
    %v3259 = vld [vmem:[%s12 + $0x50] sm:$0xff]
    %v3260 = vld [vmem:[%s12 + $0x58] sm:$0xff]
    %v3261 = vld [vmem:[%s12 + $0x60] sm:$0xff]
    %v3262 = vld [vmem:[%s12 + $0x68] sm:$0xff]
    %v3263 = vld [vmem:[%s12 + $0x70] sm:$0xff]
    %v3264 = vld [vmem:[%s12 + $0x78] sm:$0xff]
    %3266 = vrot.lane.b32.xlu0 %v3248, 64
    %v3267 = vpop.permute.xlu0 %3266
    %v3268 = vsel %vm936, %v3267, 0
    %3270 = vmatprep.subr.mxu0 %v3250
    %3271 = vmatpush1.msra.mxu0 %v3249
    %3272 = vmatprep.subr.mxu0 %v3252
    %3273 = vmatpush1.msra.mxu0 %v3251
    %3274 = vmatprep.subr.mxu0 %v3254
    %3275 = vmatpush1.msra.mxu0 %v3253
    %3276 = vmatprep.subr.mxu0 %v3256
    %3277 = vmatpush1.msra.mxu0 %v3255
    %3278 = vmatprep.subr.mxu0 %v3258
    %3279 = vmatpush1.msra.mxu0 %v3257
    %3280 = vmatprep.subr.mxu0 %v3260
    %3281 = vmatpush1.msra.mxu0 %v3259
    %3282 = vmatprep.subr.mxu0 %v3262
    %3283 = vmatpush1.msra.mxu0 %v3261
    %3284 = vmatprep.subr.mxu0 %v3264
    %3285 = vmatpush1.msra.mxu0 %v3263
    %3286 = vmatprep.subr.mxu0 0.0
    %3287 = vmatpush1.msra.mxu0 0.0
    %3288 = vmatprep.subr.mxu0 0.0
    %3289 = vmatpush1.msra.mxu0 0.0
    %3290 = vmatprep.subr.mxu0 0.0
    %3291 = vmatpush1.msra.mxu0 0.0
    %3292 = vmatprep.subr.mxu0 0.0
    %3293 = vmatpush1.msra.mxu0 0.0
    %3294 = vmatprep.subr.mxu0 0.0
    %3295 = vmatpush1.msra.mxu0 0.0
    %3296 = vmatprep.subr.mxu0 0.0
    %3297 = vmatpush1.msra.mxu0 0.0
    %3298 = vmatprep.subr.mxu0 0.0
    %3299 = vmatpush1.msra.mxu0 0.0
    %3300 = vmatprep.subr.mxu0 0.0
    %3301 = vmatpush1.msra.mxu0 0.0
    %3302 = vmatprep.subr.mxu0 0.0
    %3303 = vmatpush1.msra.mxu0 0.0
    %3304 = vmatprep.subr.mxu0 0.0
    %3305 = vmatpush1.msra.mxu0 0.0
    %3306 = vmatprep.subr.mxu0 0.0
    %3307 = vmatpush1.msra.mxu0 0.0
    %3308 = vmatprep.subr.mxu0 0.0
    %3309 = vmatpush1.msra.mxu0 0.0
    %3310 = vmatprep.subr.mxu0 0.0
    %3311 = vmatpush1.msra.mxu0 0.0
    %3312 = vmatprep.subr.mxu0 0.0
    %3313 = vmatpush1.msra.mxu0 0.0
    %3314 = vmatprep.subr.mxu0 0.0
    %3315 = vmatpush1.msra.mxu0 0.0
    %3316 = vmatprep.subr.mxu0 0.0
    %3317 = vmatpush1.msra.mxu0 0.0
    %3318 = vmatprep.subr.mxu0 0.0
    %3319 = vmatpush1.msra.mxu0 0.0
    %3320 = vmatprep.subr.mxu0 0.0
    %3321 = vmatpush1.msra.mxu0 0.0
    %3322 = vmatprep.subr.mxu0 0.0
    %3323 = vmatpush1.msra.mxu0 0.0
    %3324 = vmatprep.subr.mxu0 0.0
    %3325 = vmatpush1.msra.mxu0 0.0
    %3326 = vmatprep.subr.mxu0 0.0
    %3327 = vmatpush1.msra.mxu0 0.0
    %3328 = vmatprep.subr.mxu0 0.0
    %3329 = vmatpush1.msra.mxu0 0.0
    %3330 = vmatprep.subr.mxu0 0.0
    %3331 = vmatpush1.msra.mxu0 0.0
    %3332 = vmatprep.subr.mxu0 0.0
    %3333 = vmatpush1.msra.mxu0 0.0
    %3334 = vmatprep.mubr.f32.mxu0 0.0
    %3335 = vmatmul.mubr.f32.gmra.mrb[0].mxu0 %v3268
    %v3336 = vpop.f32.mrb[0].mxu0
    %v3337 = vadd.f32 %v3141, %v3336
    %v3338 = vpop.f32.mrb[0].mxu0
    %v3339 = vadd.f32 %v3143, %v3338
    %3340 = vdwg.mxu0
    %v3341 = vtanh.pop %v3337
    %v3342 = vtanh.pop %v3339
    %v3343 = vmul.f32 %v3341, 0.5
    %v3344 = vadd.f32 %v3343, 0.5
    %v3345 = vmul.f32 %v3342, 0.5
    %v3346 = vadd.f32 %v3345, 0.5
    %v3347 = vmul.f32 %v3344, %v3048
    %v3348 = vmul.f32 %v3344, %v3342
    %3350 = vrot.lane.b32.xlu0 %v3348, 64
    %v3351 = vpop.permute.xlu0 %3350
    %v3353 = vadd.f32 %v3347, %v3351
    %v3354 = vtanh.pop %v3353
    %v3355 = vmul.f32 %v3346, %v3354
    %3357 = vrot.lane.b32.xlu0 %v3355, 64
    %v3358 = vpop.permute.xlu0 %3357
    %3360 = vst.msk [vmem:[#allocation2 + $0x28] sm:$0xff] %vm936, %v3358
    %v3361 = vld [vmem:[%s13] sm:$0xff]
    %v3362 = vld [vmem:[%s13 + $0x8] sm:$0xff]
    %v3363 = vld [vmem:[%s13 + $0x10] sm:$0xff]
    %v3364 = vld [vmem:[%s13 + $0x18] sm:$0xff]
    %v3365 = vld [vmem:[%s13 + $0x20] sm:$0xff]
    %v3366 = vld [vmem:[%s13 + $0x28] sm:$0xff]
    %v3367 = vld [vmem:[%s13 + $0x30] sm:$0xff]
    %v3368 = vld [vmem:[%s13 + $0x38] sm:$0xff]
    %v3369 = vld [vmem:[%s13 + $0x40] sm:$0xff]
    %v3370 = vld [vmem:[%s13 + $0x48] sm:$0xff]
    %v3371 = vld [vmem:[%s13 + $0x50] sm:$0xff]
    %v3372 = vld [vmem:[%s13 + $0x58] sm:$0xff]
    %v3373 = vld [vmem:[%s13 + $0x60] sm:$0xff]
    %v3374 = vld [vmem:[%s13 + $0x68] sm:$0xff]
    %v3375 = vld [vmem:[%s13 + $0x70] sm:$0xff]
    %v3376 = vld [vmem:[%s13 + $0x78] sm:$0xff]
    %v3377 = vsel %vm936, %v3358, 0
    %3379 = vmatprep.subr.mxu0 %v3362
    %3380 = vmatpush1.msra.mxu0 %v3361
    %3381 = vmatprep.subr.mxu0 %v3364
    %3382 = vmatpush1.msra.mxu0 %v3363
    %3383 = vmatprep.subr.mxu0 %v3366
    %3384 = vmatpush1.msra.mxu0 %v3365
    %3385 = vmatprep.subr.mxu0 %v3368
    %3386 = vmatpush1.msra.mxu0 %v3367
    %3387 = vmatprep.subr.mxu0 %v3370
    %3388 = vmatpush1.msra.mxu0 %v3369
    %3389 = vmatprep.subr.mxu0 %v3372
    %3390 = vmatpush1.msra.mxu0 %v3371
    %3391 = vmatprep.subr.mxu0 %v3374
    %3392 = vmatpush1.msra.mxu0 %v3373
    %3393 = vmatprep.subr.mxu0 %v3376
    %3394 = vmatpush1.msra.mxu0 %v3375
    %3395 = vmatprep.subr.mxu0 0.0
    %3396 = vmatpush1.msra.mxu0 0.0
    %3397 = vmatprep.subr.mxu0 0.0
    %3398 = vmatpush1.msra.mxu0 0.0
    %3399 = vmatprep.subr.mxu0 0.0
    %3400 = vmatpush1.msra.mxu0 0.0
    %3401 = vmatprep.subr.mxu0 0.0
    %3402 = vmatpush1.msra.mxu0 0.0
    %3403 = vmatprep.subr.mxu0 0.0
    %3404 = vmatpush1.msra.mxu0 0.0
    %3405 = vmatprep.subr.mxu0 0.0
    %3406 = vmatpush1.msra.mxu0 0.0
    %3407 = vmatprep.subr.mxu0 0.0
    %3408 = vmatpush1.msra.mxu0 0.0
    %3409 = vmatprep.subr.mxu0 0.0
    %3410 = vmatpush1.msra.mxu0 0.0
    %3411 = vmatprep.subr.mxu0 0.0
    %3412 = vmatpush1.msra.mxu0 0.0
    %3413 = vmatprep.subr.mxu0 0.0
    %3414 = vmatpush1.msra.mxu0 0.0
    %3415 = vmatprep.subr.mxu0 0.0
    %3416 = vmatpush1.msra.mxu0 0.0
    %3417 = vmatprep.subr.mxu0 0.0
    %3418 = vmatpush1.msra.mxu0 0.0
    %3419 = vmatprep.subr.mxu0 0.0
    %3420 = vmatpush1.msra.mxu0 0.0
    %3421 = vmatprep.subr.mxu0 0.0
    %3422 = vmatpush1.msra.mxu0 0.0
    %3423 = vmatprep.subr.mxu0 0.0
    %3424 = vmatpush1.msra.mxu0 0.0
    %3425 = vmatprep.subr.mxu0 0.0
    %3426 = vmatpush1.msra.mxu0 0.0
    %3427 = vmatprep.subr.mxu0 0.0
    %3428 = vmatpush1.msra.mxu0 0.0
    %3429 = vmatprep.subr.mxu0 0.0
    %3430 = vmatpush1.msra.mxu0 0.0
    %3431 = vmatprep.subr.mxu0 0.0
    %3432 = vmatpush1.msra.mxu0 0.0
    %3433 = vmatprep.subr.mxu0 0.0
    %3434 = vmatpush1.msra.mxu0 0.0
    %3435 = vmatprep.subr.mxu0 0.0
    %3436 = vmatpush1.msra.mxu0 0.0
    %3437 = vmatprep.subr.mxu0 0.0
    %3438 = vmatpush1.msra.mxu0 0.0
    %3439 = vmatprep.subr.mxu0 0.0
    %3440 = vmatpush1.msra.mxu0 0.0
    %3441 = vmatprep.subr.mxu0 0.0
    %3442 = vmatpush1.msra.mxu0 0.0
    %3443 = vmatprep.mubr.f32.mxu0 0.0
    %3444 = vmatmul.mubr.f32.gmra.mrb[0].mxu0 %v3377
    %v3445 = vpop.f32.mrb[0].mxu0
    %v3446 = vadd.f32 %v1339, %v3445
    %v3447 = vpop.f32.mrb[0].mxu0
    %v3448 = vadd.f32 %v1343, %v3447
    %3449 = vdwg.mxu0
    %v3450 = vld [vmem:[%s10] sm:$0xff]
    %v3451 = vld [vmem:[%s10 + $0x8] sm:$0xff]
    %v3452 = vld [vmem:[%s10 + $0x10] sm:$0xff]
    %v3453 = vld [vmem:[%s10 + $0x18] sm:$0xff]
    %v3454 = vld [vmem:[%s10 + $0x20] sm:$0xff]
    %v3455 = vld [vmem:[%s10 + $0x28] sm:$0xff]
    %v3456 = vld [vmem:[%s10 + $0x30] sm:$0xff]
    %v3457 = vld [vmem:[%s10 + $0x38] sm:$0xff]
    %v3458 = vld [vmem:[%s10 + $0x40] sm:$0xff]
    %v3459 = vld [vmem:[%s10 + $0x48] sm:$0xff]
    %v3460 = vld [vmem:[%s10 + $0x50] sm:$0xff]
    %v3461 = vld [vmem:[%s10 + $0x58] sm:$0xff]
    %v3462 = vld [vmem:[%s10 + $0x60] sm:$0xff]
    %v3463 = vld [vmem:[%s10 + $0x68] sm:$0xff]
    %v3464 = vld [vmem:[%s10 + $0x70] sm:$0xff]
    %v3465 = vld [vmem:[%s10 + $0x78] sm:$0xff]
    %3466 = vmatprep.subr.mxu0 %v3451
    %3467 = vmatpush1.msra.mxu0 %v3450
    %3468 = vmatprep.subr.mxu0 %v3453
    %3469 = vmatpush1.msra.mxu0 %v3452
    %3470 = vmatprep.subr.mxu0 %v3455
    %3471 = vmatpush1.msra.mxu0 %v3454
    %3472 = vmatprep.subr.mxu0 %v3457
    %3473 = vmatpush1.msra.mxu0 %v3456
    %3474 = vmatprep.subr.mxu0 %v3459
    %3475 = vmatpush1.msra.mxu0 %v3458
    %3476 = vmatprep.subr.mxu0 %v3461
    %3477 = vmatpush1.msra.mxu0 %v3460
    %3478 = vmatprep.subr.mxu0 %v3463
    %3479 = vmatpush1.msra.mxu0 %v3462
    %3480 = vmatprep.subr.mxu0 %v3465
    %3481 = vmatpush1.msra.mxu0 %v3464
    %3482 = vmatprep.subr.mxu0 0.0
    %3483 = vmatpush1.msra.mxu0 0.0
    %3484 = vmatprep.subr.mxu0 0.0
    %3485 = vmatpush1.msra.mxu0 0.0
    %3486 = vmatprep.subr.mxu0 0.0
    %3487 = vmatpush1.msra.mxu0 0.0
    %3488 = vmatprep.subr.mxu0 0.0
    %3489 = vmatpush1.msra.mxu0 0.0
    %3490 = vmatprep.subr.mxu0 0.0
    %3491 = vmatpush1.msra.mxu0 0.0
    %3492 = vmatprep.subr.mxu0 0.0
    %3493 = vmatpush1.msra.mxu0 0.0
    %3494 = vmatprep.subr.mxu0 0.0
    %3495 = vmatpush1.msra.mxu0 0.0
    %3496 = vmatprep.subr.mxu0 0.0
    %3497 = vmatpush1.msra.mxu0 0.0
    %3498 = vmatprep.subr.mxu0 0.0
    %3499 = vmatpush1.msra.mxu0 0.0
    %3500 = vmatprep.subr.mxu0 0.0
    %3501 = vmatpush1.msra.mxu0 0.0
    %3502 = vmatprep.subr.mxu0 0.0
    %3503 = vmatpush1.msra.mxu0 0.0
    %3504 = vmatprep.subr.mxu0 0.0
    %3505 = vmatpush1.msra.mxu0 0.0
    %3506 = vmatprep.subr.mxu0 0.0
    %3507 = vmatpush1.msra.mxu0 0.0
    %3508 = vmatprep.subr.mxu0 0.0
    %3509 = vmatpush1.msra.mxu0 0.0
    %3510 = vmatprep.subr.mxu0 0.0
    %3511 = vmatpush1.msra.mxu0 0.0
    %3512 = vmatprep.subr.mxu0 0.0
    %3513 = vmatpush1.msra.mxu0 0.0
    %3514 = vmatprep.subr.mxu0 0.0
    %3515 = vmatpush1.msra.mxu0 0.0
    %3516 = vmatprep.subr.mxu0 0.0
    %3517 = vmatpush1.msra.mxu0 0.0
    %3518 = vmatprep.subr.mxu0 0.0
    %3519 = vmatpush1.msra.mxu0 0.0
    %3520 = vmatprep.subr.mxu0 0.0
    %3521 = vmatpush1.msra.mxu0 0.0
    %3522 = vmatprep.subr.mxu0 0.0
    %3523 = vmatpush1.msra.mxu0 0.0
    %3524 = vmatprep.subr.mxu0 0.0
    %3525 = vmatpush1.msra.mxu0 0.0
    %3526 = vmatprep.subr.mxu0 0.0
    %3527 = vmatpush1.msra.mxu0 0.0
    %3528 = vmatprep.subr.mxu0 0.0
    %3529 = vmatpush1.msra.mxu0 0.0
    %3530 = vmatprep.mubr.f32.mxu0 0.0
    %3531 = vmatmul.mubr.f32.gmra.mrb[0].mxu0 %v3268
    %v3532 = vpop.f32.mrb[0].mxu0
    %v3533 = vadd.f32 0.0, %v3532
    %v3534 = vpop.f32.mrb[0].mxu0
    %v3535 = vadd.f32 0.0, %v3534
    %3536 = vdwg.mxu0
    %v3537 = vadd.f32 %v1330, %v3533
    %v3538 = vadd.f32 %v1332, %v3535
    %v3539 = vtanh.pop %v3537
    %v3540 = vtanh.pop %v3538
    %v3541 = vmul.f32 %v3539, 0.5
    %v3542 = vadd.f32 %v3541, 0.5
    %v3543 = vmul.f32 %v3540, 0.5
    %v3544 = vadd.f32 %v3543, 0.5
    %v3545 = vmul.f32 %v3542, %v3246
    %v3546 = vmul.f32 %v3542, %v3540
    %3548 = vrot.lane.b32.xlu0 %v3546, 64
    %v3549 = vpop.permute.xlu0 %3548
    %v3551 = vadd.f32 %v3545, %v3549
    %v3552 = vtanh.pop %v3551
    %v3553 = vmul.f32 %v3544, %v3552
    %v3554 = vld [vmem:[%s12] sm:$0xff]
    %v3555 = vld [vmem:[%s12 + $0x8] sm:$0xff]
    %v3556 = vld [vmem:[%s12 + $0x10] sm:$0xff]
    %v3557 = vld [vmem:[%s12 + $0x18] sm:$0xff]
    %v3558 = vld [vmem:[%s12 + $0x20] sm:$0xff]
    %v3559 = vld [vmem:[%s12 + $0x28] sm:$0xff]
    %v3560 = vld [vmem:[%s12 + $0x30] sm:$0xff]
    %v3561 = vld [vmem:[%s12 + $0x38] sm:$0xff]
    %v3562 = vld [vmem:[%s12 + $0x40] sm:$0xff]
    %v3563 = vld [vmem:[%s12 + $0x48] sm:$0xff]
    %v3564 = vld [vmem:[%s12 + $0x50] sm:$0xff]
    %v3565 = vld [vmem:[%s12 + $0x58] sm:$0xff]
    %v3566 = vld [vmem:[%s12 + $0x60] sm:$0xff]
    %v3567 = vld [vmem:[%s12 + $0x68] sm:$0xff]
    %v3568 = vld [vmem:[%s12 + $0x70] sm:$0xff]
    %v3569 = vld [vmem:[%s12 + $0x78] sm:$0xff]
    %3571 = vrot.lane.b32.xlu0 %v3553, 64
    %v3572 = vpop.permute.xlu0 %3571
    %v3573 = vsel %vm936, %v3572, 0
    %3575 = vmatprep.subr.mxu0 %v3555
    %3576 = vmatpush1.msra.mxu0 %v3554
    %3577 = vmatprep.subr.mxu0 %v3557
    %3578 = vmatpush1.msra.mxu0 %v3556
    %3579 = vmatprep.subr.mxu0 %v3559
    %3580 = vmatpush1.msra.mxu0 %v3558
    %3581 = vmatprep.subr.mxu0 %v3561
    %3582 = vmatpush1.msra.mxu0 %v3560
    %3583 = vmatprep.subr.mxu0 %v3563
    %3584 = vmatpush1.msra.mxu0 %v3562
    %3585 = vmatprep.subr.mxu0 %v3565
    %3586 = vmatpush1.msra.mxu0 %v3564
    %3587 = vmatprep.subr.mxu0 %v3567
    %3588 = vmatpush1.msra.mxu0 %v3566
    %3589 = vmatprep.subr.mxu0 %v3569
    %3590 = vmatpush1.msra.mxu0 %v3568
    %3591 = vmatprep.subr.mxu0 0.0
    %3592 = vmatpush1.msra.mxu0 0.0
    %3593 = vmatprep.subr.mxu0 0.0
    %3594 = vmatpush1.msra.mxu0 0.0
    %3595 = vmatprep.subr.mxu0 0.0
    %3596 = vmatpush1.msra.mxu0 0.0
    %3597 = vmatprep.subr.mxu0 0.0
    %3598 = vmatpush1.msra.mxu0 0.0
    %3599 = vmatprep.subr.mxu0 0.0
    %3600 = vmatpush1.msra.mxu0 0.0
    %3601 = vmatprep.subr.mxu0 0.0
    %3602 = vmatpush1.msra.mxu0 0.0
    %3603 = vmatprep.subr.mxu0 0.0
    %3604 = vmatpush1.msra.mxu0 0.0
    %3605 = vmatprep.subr.mxu0 0.0
    %3606 = vmatpush1.msra.mxu0 0.0
    %3607 = vmatprep.subr.mxu0 0.0
    %3608 = vmatpush1.msra.mxu0 0.0
    %3609 = vmatprep.subr.mxu0 0.0
    %3610 = vmatpush1.msra.mxu0 0.0
    %3611 = vmatprep.subr.mxu0 0.0
    %3612 = vmatpush1.msra.mxu0 0.0
    %3613 = vmatprep.subr.mxu0 0.0
    %3614 = vmatpush1.msra.mxu0 0.0
    %3615 = vmatprep.subr.mxu0 0.0
    %3616 = vmatpush1.msra.mxu0 0.0
    %3617 = vmatprep.subr.mxu0 0.0
    %3618 = vmatpush1.msra.mxu0 0.0
    %3619 = vmatprep.subr.mxu0 0.0
    %3620 = vmatpush1.msra.mxu0 0.0
    %3621 = vmatprep.subr.mxu0 0.0
    %3622 = vmatpush1.msra.mxu0 0.0
    %3623 = vmatprep.subr.mxu0 0.0
    %3624 = vmatpush1.msra.mxu0 0.0
    %3625 = vmatprep.subr.mxu0 0.0
    %3626 = vmatpush1.msra.mxu0 0.0
    %3627 = vmatprep.subr.mxu0 0.0
    %3628 = vmatpush1.msra.mxu0 0.0
    %3629 = vmatprep.subr.mxu0 0.0
    %3630 = vmatpush1.msra.mxu0 0.0
    %3631 = vmatprep.subr.mxu0 0.0
    %3632 = vmatpush1.msra.mxu0 0.0
    %3633 = vmatprep.subr.mxu0 0.0
    %3634 = vmatpush1.msra.mxu0 0.0
    %3635 = vmatprep.subr.mxu0 0.0
    %3636 = vmatpush1.msra.mxu0 0.0
    %3637 = vmatprep.subr.mxu0 0.0
    %3638 = vmatpush1.msra.mxu0 0.0
    %3639 = vmatprep.mubr.f32.mxu0 0.0
    %3640 = vmatmul.mubr.f32.gmra.mrb[0].mxu0 %v3573
    %v3641 = vpop.f32.mrb[0].mxu0
    %v3642 = vadd.f32 %v3446, %v3641
    %v3643 = vpop.f32.mrb[0].mxu0
    %v3644 = vadd.f32 %v3448, %v3643
    %3645 = vdwg.mxu0
    %v3646 = vtanh.pop %v3642
    %v3647 = vtanh.pop %v3644
    %v3648 = vmul.f32 %v3646, 0.5
    %v3649 = vadd.f32 %v3648, 0.5
    %v3650 = vmul.f32 %v3647, 0.5
    %v3651 = vadd.f32 %v3650, 0.5
    %v3652 = vmul.f32 %v3649, %v3353
    %v3653 = vmul.f32 %v3649, %v3647
    %3655 = vrot.lane.b32.xlu0 %v3653, 64
    %v3656 = vpop.permute.xlu0 %3655
    %v3658 = vadd.f32 %v3652, %v3656
    %v3659 = vtanh.pop %v3658
    %v3660 = vmul.f32 %v3651, %v3659
    %3662 = vrot.lane.b32.xlu0 %v3660, 64
    %v3663 = vpop.permute.xlu0 %3662
    %3665 = vst.msk [vmem:[#allocation2 + $0x30] sm:$0xff] %vm936, %v3663
    %v3666 = vld [vmem:[#allocation2] sm:$0xff]
    %v3667 = vld [vmem:[#allocation2 + $0x8] sm:$0xff]
    %v3668 = vld [vmem:[#allocation2 + $0x10] sm:$0xff]
    %v3669 = vld [vmem:[#allocation2 + $0x18] sm:$0xff]
    %v3670 = vld [vmem:[#allocation2 + $0x20] sm:$0xff]
    %v3671 = vld [vmem:[#allocation2 + $0x28] sm:$0xff]
    %v3672 = vld [vmem:[#allocation2 + $0x30] sm:$0xff]
    %v3673 = vld [vmem:[%s15] sm:$0xff]
    %v3674 = vld [vmem:[%s15 + $0x8] sm:$0xff]
    %v3675 = vld [vmem:[%s15 + $0x10] sm:$0xff]
    %v3676 = vld [vmem:[%s15 + $0x18] sm:$0xff]
    %v3677 = vld [vmem:[%s15 + $0x20] sm:$0xff]
    %v3678 = vld [vmem:[%s15 + $0x28] sm:$0xff]
    %v3679 = vld [vmem:[%s15 + $0x30] sm:$0xff]
    %v3680 = vld [vmem:[%s15 + $0x38] sm:$0xff]
    %v3681 = vld [vmem:[%s16] sm:$0x1]
    %v3683 = vlaneseq
    %v3684 = vshrl.u32 %v3683, 7
    %v3685 = vsub.s32 0, %v3684
    %v3686 = vrot.slane %v3681, %v3685
    %v3689 = vsel %vm936, %v3666, 0
    %v3692 = vsel %vm936, %v3667, 0
    %v3695 = vsel %vm936, %v3668, 0
    %v3698 = vsel %vm936, %v3669, 0
    %v3701 = vsel %vm936, %v3670, 0
    %v3704 = vsel %vm936, %v3671, 0
    %v3707 = vsel %vm936, %v3672, 0
    %3709 = vmatprep.subr.mxu0 0.0
    %3710 = vmatpush1.msra.mxu0 %v3673
    %3711 = vmatprep.subr.mxu0 0.0
    %3712 = vmatpush1.msra.mxu0 %v3674
    %3713 = vmatprep.subr.mxu0 0.0
    %3714 = vmatpush1.msra.mxu0 %v3675
    %3715 = vmatprep.subr.mxu0 0.0
    %3716 = vmatpush1.msra.mxu0 %v3676
    %3717 = vmatprep.subr.mxu0 0.0
    %3718 = vmatpush1.msra.mxu0 %v3677
    %3719 = vmatprep.subr.mxu0 0.0
    %3720 = vmatpush1.msra.mxu0 %v3678
    %3721 = vmatprep.subr.mxu0 0.0
    %3722 = vmatpush1.msra.mxu0 %v3679
    %3723 = vmatprep.subr.mxu0 0.0
    %3724 = vmatpush1.msra.mxu0 %v3680
    %3725 = vmatprep.subr.mxu0 0.0
    %3726 = vmatpush1.msra.mxu0 0.0
    %3727 = vmatprep.subr.mxu0 0.0
    %3728 = vmatpush1.msra.mxu0 0.0
    %3729 = vmatprep.subr.mxu0 0.0
    %3730 = vmatpush1.msra.mxu0 0.0
    %3731 = vmatprep.subr.mxu0 0.0
    %3732 = vmatpush1.msra.mxu0 0.0
    %3733 = vmatprep.subr.mxu0 0.0
    %3734 = vmatpush1.msra.mxu0 0.0
    %3735 = vmatprep.subr.mxu0 0.0
    %3736 = vmatpush1.msra.mxu0 0.0
    %3737 = vmatprep.subr.mxu0 0.0
    %3738 = vmatpush1.msra.mxu0 0.0
    %3739 = vmatprep.subr.mxu0 0.0
    %3740 = vmatpush1.msra.mxu0 0.0
    %3741 = vmatprep.subr.mxu0 0.0
    %3742 = vmatpush1.msra.mxu0 0.0
    %3743 = vmatprep.subr.mxu0 0.0
    %3744 = vmatpush1.msra.mxu0 0.0
    %3745 = vmatprep.subr.mxu0 0.0
    %3746 = vmatpush1.msra.mxu0 0.0
    %3747 = vmatprep.subr.mxu0 0.0
    %3748 = vmatpush1.msra.mxu0 0.0
    %3749 = vmatprep.subr.mxu0 0.0
    %3750 = vmatpush1.msra.mxu0 0.0
    %3751 = vmatprep.subr.mxu0 0.0
    %3752 = vmatpush1.msra.mxu0 0.0
    %3753 = vmatprep.subr.mxu0 0.0
    %3754 = vmatpush1.msra.mxu0 0.0
    %3755 = vmatprep.subr.mxu0 0.0
    %3756 = vmatpush1.msra.mxu0 0.0
    %3757 = vmatprep.subr.mxu0 0.0
    %3758 = vmatpush1.msra.mxu0 0.0
    %3759 = vmatprep.subr.mxu0 0.0
    %3760 = vmatpush1.msra.mxu0 0.0
    %3761 = vmatprep.subr.mxu0 0.0
    %3762 = vmatpush1.msra.mxu0 0.0
    %3763 = vmatprep.subr.mxu0 0.0
    %3764 = vmatpush1.msra.mxu0 0.0
    %3765 = vmatprep.subr.mxu0 0.0
    %3766 = vmatpush1.msra.mxu0 0.0
    %3767 = vmatprep.subr.mxu0 0.0
    %3768 = vmatpush1.msra.mxu0 0.0
    %3769 = vmatprep.subr.mxu0 0.0
    %3770 = vmatpush1.msra.mxu0 0.0
    %3771 = vmatprep.subr.mxu0 0.0
    %3772 = vmatpush1.msra.mxu0 0.0
    %3773 = vmatprep.mubr.f32.mxu0 0.0
    %3774 = vmatmul.mubr.f32.gmra.mrb[0].mxu0 %v3689
    %v3775 = vpop.f32.mrb[0].mxu0
    %v3776 = vadd.f32 %v3686, %v3775
    %v3777 = vpop.f32.mrb[0].mxu0
    %3778 = vmatprep.mubr.f32.mxu0 0.0
    %3779 = vmatmul.mubr.f32.gmra.mrb[0].mxu0 %v3692
    %v3780 = vpop.f32.mrb[0].mxu0
    %v3781 = vadd.f32 %v3686, %v3780
    %v3782 = vpop.f32.mrb[0].mxu0
    %3783 = vmatprep.mubr.f32.mxu0 0.0
    %3784 = vmatmul.mubr.f32.gmra.mrb[0].mxu0 %v3695
    %v3785 = vpop.f32.mrb[0].mxu0
    %v3786 = vadd.f32 %v3686, %v3785
    %v3787 = vpop.f32.mrb[0].mxu0
    %3788 = vmatprep.mubr.f32.mxu0 0.0
    %3789 = vmatmul.mubr.f32.gmra.mrb[0].mxu0 %v3698
    %v3790 = vpop.f32.mrb[0].mxu0
    %v3791 = vadd.f32 %v3686, %v3790
    %v3792 = vpop.f32.mrb[0].mxu0
    %3793 = vmatprep.mubr.f32.mxu0 0.0
    %3794 = vmatmul.mubr.f32.gmra.mrb[0].mxu0 %v3701
    %v3795 = vpop.f32.mrb[0].mxu0
    %v3796 = vadd.f32 %v3686, %v3795
    %v3797 = vpop.f32.mrb[0].mxu0
    %3798 = vmatprep.mubr.f32.mxu0 0.0
    %3799 = vmatmul.mubr.f32.gmra.mrb[0].mxu0 %v3704
    %v3800 = vpop.f32.mrb[0].mxu0
    %v3801 = vadd.f32 %v3686, %v3800
    %v3802 = vpop.f32.mrb[0].mxu0
    %3803 = vmatprep.mubr.f32.mxu0 0.0
    %3804 = vmatmul.mubr.f32.gmra.mrb[0].mxu0 %v3707
    %v3805 = vpop.f32.mrb[0].mxu0
    %v3806 = vadd.f32 %v3686, %v3805
    %v3807 = vpop.f32.mrb[0].mxu0
    %3808 = vdwg.mxu0
    %3809 = vst [vmem:[#allocation3] sm:$0xff] %v3776
    %3810 = vst [vmem:[#allocation3 + $0x8] sm:$0xff] %v3781
    %3811 = vst [vmem:[#allocation3 + $0x10] sm:$0xff] %v3786
    %3812 = vst [vmem:[#allocation3 + $0x18] sm:$0xff] %v3791
    %3813 = vst [vmem:[#allocation3 + $0x20] sm:$0xff] %v3796
    %3814 = vst [vmem:[#allocation3 + $0x28] sm:$0xff] %v3801
    %3815 = vst [vmem:[#allocation3 + $0x30] sm:$0xff] %v3806
    %3816 = vmax.xlane.f32.xlu0 %v3776
    %v3817 = vpop.xlane.xlu0 %3816
    %3818 = vmax.xlane.f32.xlu0 %v3781
    %v3819 = vpop.xlane.xlu0 %3818
    %3820 = vmax.xlane.f32.xlu0 %v3786
    %v3821 = vpop.xlane.xlu0 %3820
    %3822 = vmax.xlane.f32.xlu0 %v3791
    %v3823 = vpop.xlane.xlu0 %3822
    %3824 = vmax.xlane.f32.xlu0 %v3796
    %v3825 = vpop.xlane.xlu0 %3824
    %3826 = vmax.xlane.f32.xlu0 %v3801
    %v3827 = vpop.xlane.xlu0 %3826
    %3828 = vmax.xlane.f32.xlu0 %v3806
    %v3829 = vpop.xlane.xlu0 %3828
    %v3830 = vsub.f32 %v3776, %v3817
    %v3831 = vsub.f32 %v3781, %v3819
    %v3832 = vsub.f32 %v3786, %v3821
    %v3833 = vsub.f32 %v3791, %v3823
    %v3834 = vsub.f32 %v3796, %v3825
    %v3835 = vsub.f32 %v3801, %v3827
    %v3836 = vsub.f32 %v3806, %v3829
    %v3837 = vmul.f32 %v3830, 1.442695
    %v3838 = vpow.pop %v3837
    %v3839 = vmul.f32 %v3831, 1.442695
    %v3840 = vpow.pop %v3839
    %v3841 = vmul.f32 %v3832, 1.442695
    %v3842 = vpow.pop %v3841
    %v3843 = vmul.f32 %v3833, 1.442695
    %v3844 = vpow.pop %v3843
    %v3845 = vmul.f32 %v3834, 1.442695
    %v3846 = vpow.pop %v3845
    %v3847 = vmul.f32 %v3835, 1.442695
    %v3848 = vpow.pop %v3847
    %v3849 = vmul.f32 %v3836, 1.442695
    %v3850 = vpow.pop %v3849
    %3851 = vadd.xlane.f32.xlu0 %v3838
    %v3852 = vpop.xlane.xlu0 %3851
    %3853 = vadd.xlane.f32.xlu0 %v3840
    %v3854 = vpop.xlane.xlu0 %3853
    %3855 = vadd.xlane.f32.xlu0 %v3842
    %v3856 = vpop.xlane.xlu0 %3855
    %3857 = vadd.xlane.f32.xlu0 %v3844
    %v3858 = vpop.xlane.xlu0 %3857
    %3859 = vadd.xlane.f32.xlu0 %v3846
    %v3860 = vpop.xlane.xlu0 %3859
    %3861 = vadd.xlane.f32.xlu0 %v3848
    %v3862 = vpop.xlane.xlu0 %3861
    %3863 = vadd.xlane.f32.xlu0 %v3850
    %v3864 = vpop.xlane.xlu0 %3863
    %v3865 = vlog2.pop %v3852
    %v3866 = vmul.f32 %v3865, 0.6931472
    %v3867 = vlog2.pop %v3854
    %v3868 = vmul.f32 %v3867, 0.6931472
    %v3869 = vlog2.pop %v3856
    %v3870 = vmul.f32 %v3869, 0.6931472
    %v3871 = vlog2.pop %v3858
    %v3872 = vmul.f32 %v3871, 0.6931472
    %v3873 = vlog2.pop %v3860
    %v3874 = vmul.f32 %v3873, 0.6931472
    %v3875 = vlog2.pop %v3862
    %v3876 = vmul.f32 %v3875, 0.6931472
    %v3877 = vlog2.pop %v3864
    %v3878 = vmul.f32 %v3877, 0.6931472
    %v3879 = vadd.f32 %v3817, %v3866
    %v3880 = vadd.f32 %v3819, %v3868
    %v3881 = vadd.f32 %v3821, %v3870
    %v3882 = vadd.f32 %v3823, %v3872
    %v3883 = vadd.f32 %v3825, %v3874
    %v3884 = vadd.f32 %v3827, %v3876
    %v3885 = vadd.f32 %v3829, %v3878
    %v3886 = vsub.f32 %v3776, %v3879
    %v3887 = vsub.f32 %v3781, %v3880
    %v3888 = vsub.f32 %v3786, %v3881
    %v3889 = vsub.f32 %v3791, %v3882
    %v3890 = vsub.f32 %v3796, %v3883
    %v3891 = vsub.f32 %v3801, %v3884
    %v3892 = vsub.f32 %v3806, %v3885
    %v3893 = vld [vmem:[%s8] sm:$0xff]
    %v3894 = vld [vmem:[%s8 + $0x8] sm:$0xff]
    %v3895 = vld [vmem:[%s8 + $0x10] sm:$0xff]
    %v3896 = vld [vmem:[%s8 + $0x18] sm:$0xff]
    %v3897 = vld [vmem:[%s8 + $0x20] sm:$0xff]
    %v3898 = vld [vmem:[%s8 + $0x28] sm:$0xff]
    %v3899 = vld [vmem:[%s8 + $0x30] sm:$0xff]
    %3900 = vset.pattern.permute.xlu0 0
    %3901 = vperm.xlu0 %3900, %v3893
    %v3902 = vpop.permute.xlu0 %3901
    %3903 = vset.pattern.permute.xlu0 0
    %3904 = vperm.xlu0 %3903, %v3894
    %v3905 = vpop.permute.xlu0 %3904
    %3906 = vset.pattern.permute.xlu0 0
    %3907 = vperm.xlu0 %3906, %v3895
    %v3908 = vpop.permute.xlu0 %3907
    %3909 = vset.pattern.permute.xlu0 0
    %3910 = vperm.xlu0 %3909, %v3896
    %v3911 = vpop.permute.xlu0 %3910
    %3912 = vset.pattern.permute.xlu0 0
    %3913 = vperm.xlu0 %3912, %v3897
    %v3914 = vpop.permute.xlu0 %3913
    %3915 = vset.pattern.permute.xlu0 0
    %3916 = vperm.xlu0 %3915, %v3898
    %v3917 = vpop.permute.xlu0 %3916
    %3918 = vset.pattern.permute.xlu0 0
    %3919 = vperm.xlu0 %3918, %v3899
    %v3920 = vpop.permute.xlu0 %3919
    %vm3921 = vcmp.eq.s32.totalorder %v1018, %v3902
    %vm3922 = vcmp.eq.s32.totalorder %v1018, %v3905
    %vm3923 = vcmp.eq.s32.totalorder %v1018, %v3908
    %vm3924 = vcmp.eq.s32.totalorder %v1018, %v3911
    %vm3925 = vcmp.eq.s32.totalorder %v1018, %v3914
    %vm3926 = vcmp.eq.s32.totalorder %v1018, %v3917
    %vm3927 = vcmp.eq.s32.totalorder %v1018, %v3920
    %v3928 = vsel %vm3921, %v3886, 0.0
    %v3929 = vsel %vm3922, %v3887, 0.0
    %v3930 = vsel %vm3923, %v3888, 0.0
    %v3931 = vsel %vm3924, %v3889, 0.0
    %v3932 = vsel %vm3925, %v3890, 0.0
    %v3933 = vsel %vm3926, %v3891, 0.0
    %v3934 = vsel %vm3927, %v3892, 0.0
    %3935 = vadd.xlane.f32.xlu0 %v3928
    %v3936 = vpop.xlane.xlu0 %3935
    %3937 = vadd.xlane.f32.xlu0 %v3929
    %v3938 = vpop.xlane.xlu0 %3937
    %3939 = vadd.xlane.f32.xlu0 %v3930
    %v3940 = vpop.xlane.xlu0 %3939
    %3941 = vadd.xlane.f32.xlu0 %v3931
    %v3942 = vpop.xlane.xlu0 %3941
    %3943 = vadd.xlane.f32.xlu0 %v3932
    %v3944 = vpop.xlane.xlu0 %3943
    %3945 = vadd.xlane.f32.xlu0 %v3933
    %v3946 = vpop.xlane.xlu0 %3945
    %3947 = vadd.xlane.f32.xlu0 %v3934
    %v3948 = vpop.xlane.xlu0 %3947
    %v3949 = vsub.f32 0.0, %v3936
    %v3950 = vsub.f32 0.0, %v3938
    %v3951 = vsub.f32 0.0, %v3940
    %v3952 = vsub.f32 0.0, %v3942
    %v3953 = vsub.f32 0.0, %v3944
    %v3954 = vsub.f32 0.0, %v3946
    %v3955 = vsub.f32 0.0, %v3948
    %3956 = vadd.xlane.f32.xlu0 %v3886
    %v3957 = vpop.xlane.xlu0 %3956
    %3958 = vadd.xlane.f32.xlu0 %v3887
    %v3959 = vpop.xlane.xlu0 %3958
    %3960 = vadd.xlane.f32.xlu0 %v3888
    %v3961 = vpop.xlane.xlu0 %3960
    %3962 = vadd.xlane.f32.xlu0 %v3889
    %v3963 = vpop.xlane.xlu0 %3962
    %3964 = vadd.xlane.f32.xlu0 %v3890
    %v3965 = vpop.xlane.xlu0 %3964
    %3966 = vadd.xlane.f32.xlu0 %v3891
    %v3967 = vpop.xlane.xlu0 %3966
    %3968 = vadd.xlane.f32.xlu0 %v3892
    %v3969 = vpop.xlane.xlu0 %3968
    %v3970 = vrcp.pop 128.0
    %v3971 = vmul.f32 %v3957, %v3970
    %v3972 = vmul.f32 %v3959, %v3970
    %v3973 = vmul.f32 %v3961, %v3970
    %v3974 = vmul.f32 %v3963, %v3970
    %v3975 = vmul.f32 %v3965, %v3970
    %v3976 = vmul.f32 %v3967, %v3970
    %v3977 = vmul.f32 %v3969, %v3970
    %v3978 = vsub.f32 0.0, %v3971
    %v3979 = vsub.f32 0.0, %v3972
    %v3980 = vsub.f32 0.0, %v3973
    %v3981 = vsub.f32 0.0, %v3974
    %v3982 = vsub.f32 0.0, %v3975
    %v3983 = vsub.f32 0.0, %v3976
    %v3984 = vsub.f32 0.0, %v3977
    %v3985 = vmul.f32 %v3949, 0.9
    %v3986 = vmul.f32 %v3950, 0.9
    %v3987 = vmul.f32 %v3951, 0.9
    %v3988 = vmul.f32 %v3952, 0.9
    %v3989 = vmul.f32 %v3953, 0.9
    %v3990 = vmul.f32 %v3954, 0.9
    %v3991 = vmul.f32 %v3955, 0.9
    %v3992 = vmul.f32 %v3978, 0.1
    %v3993 = vmul.f32 %v3979, 0.1
    %v3994 = vmul.f32 %v3980, 0.1
    %v3995 = vmul.f32 %v3981, 0.1
    %v3996 = vmul.f32 %v3982, 0.1
    %v3997 = vmul.f32 %v3983, 0.1
    %v3998 = vmul.f32 %v3984, 0.1
    %v3999 = vadd.f32 %v3985, %v3992
    %v4000 = vadd.f32 %v3986, %v3993
    %v4001 = vadd.f32 %v3987, %v3994
    %v4002 = vadd.f32 %v3988, %v3995
    %v4003 = vadd.f32 %v3989, %v3996
    %v4004 = vadd.f32 %v3990, %v3997
    %v4005 = vadd.f32 %v3991, %v3998
    %vm4006 = vcmp.ne.s32.totalorder %v3893, 0
    %vm4007 = vcmp.ne.s32.totalorder %v3894, 0
    %vm4008 = vcmp.ne.s32.totalorder %v3895, 0
    %vm4009 = vcmp.ne.s32.totalorder %v3896, 0
    %vm4010 = vcmp.ne.s32.totalorder %v3897, 0
    %vm4011 = vcmp.ne.s32.totalorder %v3898, 0
    %vm4012 = vcmp.ne.s32.totalorder %v3899, 0
    %v4013 = vsel %vm4006, 1, 0
    %v4014 = vsel %vm4007, 1, 0
    %v4015 = vsel %vm4008, 1, 0
    %v4016 = vsel %vm4009, 1, 0
    %v4017 = vsel %vm4010, 1, 0
    %v4018 = vsel %vm4011, 1, 0
    %v4019 = vsel %vm4012, 1, 0
    %v4020 = vcvt.s32.f32 %v4013
    %v4021 = vcvt.s32.f32 %v4014
    %v4022 = vcvt.s32.f32 %v4015
    %v4023 = vcvt.s32.f32 %v4016
    %v4024 = vcvt.s32.f32 %v4017
    %v4025 = vcvt.s32.f32 %v4018
    %v4026 = vcvt.s32.f32 %v4019
    %v4027 = vmul.f32 %v3999, %v4020
    %v4028 = vmul.f32 %v4000, %v4021
    %v4029 = vmul.f32 %v4001, %v4022
    %v4030 = vmul.f32 %v4002, %v4023
    %v4031 = vmul.f32 %v4003, %v4024
    %v4032 = vmul.f32 %v4004, %v4025
    %v4033 = vmul.f32 %v4005, %v4026
    %vm4034 = vcmask 7168
    %v4035 = vsel %vm4034, %v4027, 0.0
    %v4036 = vsel %vm4034, %v4028, 0.0
    %v4037 = vadd.f32 %v4035, %v4036
    %v4038 = vsel %vm4034, %v4029, 0.0
    %v4039 = vadd.f32 %v4037, %v4038
    %v4040 = vsel %vm4034, %v4030, 0.0
    %v4041 = vadd.f32 %v4039, %v4040
    %v4042 = vsel %vm4034, %v4031, 0.0
    %v4043 = vadd.f32 %v4041, %v4042
    %v4044 = vsel %vm4034, %v4032, 0.0
    %v4045 = vadd.f32 %v4043, %v4044
    %v4046 = vsel %vm4034, %v4033, 0.0
    %v4047 = vadd.f32 %v4045, %v4046
    %4048 = vadd.xlane.f32.xlu0 %v4047
    %v4049 = vpop.xlane.xlu0 %4048
    %v4050 = vrot.slane %v4049, 4
    %v4051 = vadd.f32 %v4049, %v4050
    %v4052 = vrot.slane %v4051, 2
    %v4053 = vadd.f32 %v4051, %v4052
    %v4054 = vrot.slane %v4053, 1
    %v4055 = vadd.f32 %v4053, %v4054
    %s4056 = vtos %v4055
    %v4057 = vsel %vm4034, %v4020, 0.0
    %v4058 = vsel %vm4034, %v4021, 0.0
    %v4059 = vadd.f32 %v4057, %v4058
    %v4060 = vsel %vm4034, %v4022, 0.0
    %v4061 = vadd.f32 %v4059, %v4060
    %v4062 = vsel %vm4034, %v4023, 0.0
    %v4063 = vadd.f32 %v4061, %v4062
    %v4064 = vsel %vm4034, %v4024, 0.0
    %v4065 = vadd.f32 %v4063, %v4064
    %v4066 = vsel %vm4034, %v4025, 0.0
    %v4067 = vadd.f32 %v4065, %v4066
    %v4068 = vsel %vm4034, %v4026, 0.0
    %v4069 = vadd.f32 %v4067, %v4068
    %4070 = vadd.xlane.f32.xlu0 %v4069
    %v4071 = vpop.xlane.xlu0 %4070
    %v4072 = vrot.slane %v4071, 4
    %v4073 = vadd.f32 %v4071, %v4072
    %v4074 = vrot.slane %v4073, 2
    %v4075 = vadd.f32 %v4073, %v4074
    %v4076 = vrot.slane %v4075, 1
    %v4077 = vadd.f32 %v4075, %v4076
    %s4078 = vtos %v4077
    %v4079 = vstv %s4078
    %v4080 = vrcp.pop %v4079
    %s4081 = vtos %v4080
    %s4082 = smul.f32 %s4056, %s4081
    %s4083 = scalar_lea.smem [#allocation6], 0
    %4084 = sst [smem:[%s4083]] %s4082
    // Predicated region
    $region70: #{tpu_custom_call.1} parent=1 // pred_check
      _
    $region71: #{tpu_custom_call.1} parent=1 // pred_check_branch
      %4086 = sbr.rel (0) target = $region73
    $region72: #{tpu_custom_call.1} parent=1 // pred_region
      %s4088 = ssub.s32 896, 896
      %4089 = vsyncadd [#allocation4], %s4088
      %s4090 = sshll.u32 [#allocation3], 4
      %s4091 = int_to_ptr.vmem [resolvable:$true] %s4090
      %4096 = dma.vmem_to_hbm [thread:$0]  %s4091, 896, %s17, [#allocation4], 128, 128, 8
    $region73: #{tpu_custom_call.1} parent=1 // pred_fallthru
      _
    // Predicated region
    $region74: #{tpu_custom_call.1} parent=1 // pred_check
      _
    $region75: #{tpu_custom_call.1} parent=1 // pred_check_branch
      %4098 = sbr.rel (0) target = $region77
    $region76: #{tpu_custom_call.1} parent=1 // pred_region
      %s4100 = ssub.s32 16, 16
      %4101 = vsyncadd [#allocation5], %s4100
      %4104 = dma.smem_to_hbm [#allocation6], 16, %s18, [#allocation5]
    $region77: #{tpu_custom_call.1} parent=1 // pred_fallthru
      _
    // Predicated region
    $region78: #{tpu_custom_call.1} parent=1 // pred_check
      _
    $region79: #{tpu_custom_call.1} parent=1 // pred_check_branch
      %4106 = sbr.rel (0) target = $region81
    $region80: #{tpu_custom_call.1} parent=1 // pred_region
      %4107 = dma.done [#allocation4], 896
    $region81: #{tpu_custom_call.1} parent=1 // pred_fallthru
      _
    // Predicated region
    $region82: #{tpu_custom_call.1} parent=1 // pred_check
      _
    $region83: #{tpu_custom_call.1} parent=1 // pred_check_branch
      %4109 = sbr.rel (0) target = $region85
    $region84: #{tpu_custom_call.1} parent=1 // pred_region
      %4110 = dma.done [#allocation5], 16
    $region85: #{tpu_custom_call.1} parent=1 // pred_fallthru
      _
    %4111 = sfence
    %4112 = vsyncpa [#allocation4], 1
    %4113 = vsyncpa [#allocation5], 1

</llo_original>
